<compile_context>
chip_gen: v6e
topology: v6e:2x2x1
jax: 0.10.0
libtpu: 0.0.40
codegen_flags: <defaults>
</compile_context>

<pallas_src>
import functools
import math

import jax
import jax.numpy as jnp
from jax.experimental import pallas as pl
from jax.experimental.pallas import tpu as pltpu


def attention_kernel(x_ref, wq_ref, bq_ref, wk_ref, bk_ref,
                     wv_ref, bv_ref, wo_ref, bo_ref, o_ref,
                     qh_s, kh_s, vh_s, ctx_s,
                     *, num_heads, head_dim, tq):
    """One grid step == (batch element b, query tile qi).

    qi is the inner sequential axis; the per-batch K/V cache (kh_s/vh_s) is
    built only at qi == 0 and reused by every other query tile of the batch.
    """
    f32 = jnp.float32
    cdt = jnp.bfloat16                       # MXU operand dtype
    qi = pl.program_id(1)

    # ------- per-batch K/V cache build (first query tile only) -------------
    @pl.when(qi == 0)
    def _build_kv_cache():
        xkv = x_ref[0]                                               # [S, H] bf16
        k = jnp.dot(xkv, wk_ref[...], preferred_element_type=f32) + bk_ref[...]
        v = jnp.dot(xkv, wv_ref[...], preferred_element_type=f32) + bv_ref[...]
        for h in range(num_heads):
            sl = slice(h * head_dim, (h + 1) * head_dim)
            # K stored transposed [d, S]: lane-dense along S and already in
            # the layout the scores contraction wants (no per-tile transpose).
            kh_s[h] = k[:, sl].T.astype(cdt)
            vh_s[h] = v[:, sl].astype(cdt)

    # ------- per-query-tile work --------------------------------------------
    q_start = pl.multiple_of(qi * tq, tq)
    xq = x_ref[0, pl.ds(q_start, tq), :]                             # [TQ, H] bf16

    q = jnp.dot(xq, wq_ref[...], preferred_element_type=f32) + bq_ref[...]
    # Fold the 1/sqrt(d) scale into q (TQ*H work instead of TQ*S).
    q = q * (1.0 / math.sqrt(head_dim))
    for h in range(num_heads):
        sl = slice(h * head_dim, (h + 1) * head_dim)
        qh_s[h] = q[:, sl].astype(cdt)

    qh = qh_s[...]                           # [nh, TQ, d] bf16
    kh = kh_s[...]                           # [nh, d,  S] bf16 (pre-transposed)
    vh = vh_s[...]                           # [nh, S,  d] bf16

    # Batched-over-heads score matmul; K already in [K, N] layout.
    scores = jnp.einsum('hqd,hdk->hqk', qh, kh,
                        preferred_element_type=f32)                  # [nh, TQ, S]

    # Softmax in f32 (max-subtracted); reciprocal goes to the EUP slot.
    scores = scores - jnp.max(scores, axis=-1, keepdims=True)
    probs = jnp.exp(scores)
    denom = jnp.sum(probs, axis=-1, keepdims=True)
    probs = probs * pl.reciprocal(denom, approx=True)
    # attn_dropout: identity (eval mode)

    ctx = jnp.einsum('hqk,hkd->hqd', probs.astype(cdt), vh,
                     preferred_element_type=f32)                     # [nh, TQ, d]

    # Merge heads back to [TQ, H] via bf16 scratch (lane-dense reverse relayout).
    for h in range(num_heads):
        ctx_s[:, h * head_dim:(h + 1) * head_dim] = ctx[h].astype(cdt)

    out = jnp.dot(ctx_s[...], wo_ref[...],
                  preferred_element_type=f32) + bo_ref[...]          # [TQ, H]
    # proj_dropout: identity (eval mode)
    o_ref[0] = out.astype(o_ref.dtype)


def _tpu_vmem_capacity():
    try:
        return int(pltpu.get_tpu_info().vmem_capacity_bytes)
    except Exception:
        return 128 * 1024 * 1024


def _pick_q_tile(S, vmem_cap):
    # 64 MiB parts (v7x) prefer TQ=128: halves the dominant [nh,TQ,S] f32
    # softmax temporaries.  128 MiB parts (v5e/v6e) can afford TQ=256.
    prefs = (128, 256) if vmem_cap < (96 << 20) else (256, 128)
    for t in prefs:
        if S % t == 0:
            return t
    return S        # small / ragged sequences: single full-length tile


def _build_attention_call(B, S, H, out_dtype, num_heads, head_dim, tq,
                          vmem_cap, single_buffer_weights):
    cdt = jnp.bfloat16
    n_q = S // tq
    kernel = functools.partial(attention_kernel, num_heads=num_heads,
                               head_dim=head_dim, tq=tq)

    # Constant-index weight/bias blocks: nothing to double-buffer.
    w_pm = pl.Buffered(1) if single_buffer_weights else None

    def wspec():
        return pl.BlockSpec((H, H), lambda b, qi: (0, 0), pipeline_mode=w_pm)

    def bspec():
        return pl.BlockSpec((1, H), lambda b, qi: (0, 0), pipeline_mode=w_pm)

    return pl.pallas_call(
        kernel,
        out_shape=jax.ShapeDtypeStruct((B, S, H), out_dtype),
        grid=(B, n_q),
        in_specs=[
            # x: full sequence, resident across query tiles (q rows are sliced
            # out of this same block in-kernel -> x is read from HBM once).
            pl.BlockSpec((1, S, H), lambda b, qi: (b, 0, 0)),
            wspec(), bspec(),                                    # query  W, b
            wspec(), bspec(),                                    # key    W, b
            wspec(), bspec(),                                    # value  W, b
            wspec(), bspec(),                                    # out    W, b
        ],
        out_specs=pl.BlockSpec((1, tq, H), lambda b, qi: (b, qi, 0)),
        scratch_shapes=[
            pltpu.VMEM((num_heads, tq, head_dim), cdt),          # q heads
            pltpu.VMEM((num_heads, head_dim, S), cdt),           # K^T per-batch cache
            pltpu.VMEM((num_heads, S, head_dim), cdt),           # V   per-batch cache
            pltpu.VMEM((tq, H), cdt),                            # merged context
        ],
        compiler_params=pltpu.CompilerParams(
            # qi MUST be sequential ("arbitrary"): the K/V cache is built at
            # qi == 0 and reused by the remaining tiles of the same batch.
            dimension_semantics=("parallel", "arbitrary"),
            vmem_limit_bytes=min(int(vmem_cap * 3 // 4), 96 * 1024 * 1024),
        ),
    )


def pallas_attention(x, wq, bq, wk, bk, wv, bv, wo, bo, *, num_heads):
    """x: [B, S, H]; weights pre-transposed [in, out]; biases [1, H]."""
    B, S, H = x.shape
    assert H % num_heads == 0
    head_dim = H // num_heads

    vmem_cap = _tpu_vmem_capacity()
    tq = _pick_q_tile(S, vmem_cap)

    cdt = jnp.bfloat16
    x_c = x.astype(cdt)                      # halve HBM->VMEM DMA + VMEM footprint
    wq_c, wk_c, wv_c, wo_c = (w.astype(cdt) for w in (wq, wk, wv, wo))
    args = (x_c, wq_c, bq, wk_c, bk, wv_c, bv, wo_c, bo)

    try:
        call = _build_attention_call(B, S, H, x.dtype, num_heads, head_dim, tq,
                                     vmem_cap, single_buffer_weights=True)
        return call(*args)
    except Exception:
        # TODO(synk): drop this fallback once pl.Buffered(1) single-buffering of
        # constant-index blocks is available on all deployed jax versions.
        call = _build_attention_call(B, S, H, x.dtype, num_heads, head_dim, tq,
                                     vmem_cap, single_buffer_weights=False)
        return call(*args)


def reference_attention(x, wq, bq, wk, bk, wv, bv, wo, bo, *, num_heads):
    """Pure-JAX f32 reference mirroring the PyTorch forward (eval mode)."""
    B, S, H = x.shape
    d = H // num_heads

    def heads(t):  # [B,S,H] -> [B,nh,S,d]
        return t.reshape(B, S, num_heads, d).transpose(0, 2, 1, 3)

    q = heads(x @ wq + bq)
    k = heads(x @ wk + bk)
    v = heads(x @ wv + bv)
    scores = jnp.einsum("bhqd,bhkd->bhqk", q, k) / math.sqrt(d)
    probs = jax.nn.softmax(scores, axis=-1)
    ctx = jnp.einsum("bhqk,bhkd->bhqd", probs, v)
    ctx = ctx.transpose(0, 2, 1, 3).reshape(B, S, H)
    return ctx @ wo + bo


if __name__ == "__main__":
    B, S, H = 2, 8, 32
    num_heads = 4

    key = jax.random.PRNGKey(0)
    ks = jax.random.split(key, 9)
    x = jax.random.normal(ks[0], (B, S, H), dtype=jnp.float32)

    def init_linear(kw, kb):
        w = 0.02 * jax.random.normal(kw, (H, H), dtype=jnp.float32)
        b = 0.02 * jax.random.normal(kb, (1, H), dtype=jnp.float32)
        return w, b

    wq, bq = init_linear(ks[1], ks[2])
    wk, bk = init_linear(ks[3], ks[4])
    wv, bv = init_linear(ks[5], ks[6])
    wo, bo = init_linear(ks[7], ks[8])

    out = pallas_attention(x, wq, bq, wk, bk, wv, bv, wo, bo, num_heads=num_heads)
    out = jax.block_until_ready(out)

    ref = reference_attention(x, wq, bq[0], wk, bk[0], wv, bv[0], wo, bo[0],
                              num_heads=num_heads)
    assert out.shape == (B, S, H)
    # Kernel uses bf16 inputs/operands + approx reciprocal; compare vs f32 ref
    # with a correspondingly loose tolerance.
    assert jnp.allclose(out, ref, atol=2e-2, rtol=2e-2), "mismatch vs reference"

    print("KERNEL_OK")
</pallas_src>

<mosaic_0001>
module attributes {stable_mosaic.version = 11 : i64} {
  func.func @attention_kernel(%arg0: i32, %arg1: i32, %arg2: memref<1x8x32xbf16, #tpu.memory_space<vmem>>, %arg3: memref<32x32xbf16, #tpu.memory_space<vmem>>, %arg4: memref<1x32xf32, #tpu.memory_space<vmem>>, %arg5: memref<32x32xbf16, #tpu.memory_space<vmem>>, %arg6: memref<1x32xf32, #tpu.memory_space<vmem>>, %arg7: memref<32x32xbf16, #tpu.memory_space<vmem>>, %arg8: memref<1x32xf32, #tpu.memory_space<vmem>>, %arg9: memref<32x32xbf16, #tpu.memory_space<vmem>>, %arg10: memref<1x32xf32, #tpu.memory_space<vmem>>, %arg11: memref<1x8x32xf32, #tpu.memory_space<vmem>>, %arg12: memref<4x8x8xbf16, #tpu.memory_space<vmem>>, %arg13: memref<4x8x8xbf16, #tpu.memory_space<vmem>>, %arg14: memref<4x8x8xbf16, #tpu.memory_space<vmem>>, %arg15: memref<8x32xbf16, #tpu.memory_space<vmem>>) attributes {dimension_semantics = [#tpu.dimension_semantics<parallel>, #tpu.dimension_semantics<arbitrary>], iteration_bounds = array<i64: 2, 1>, scalar_prefetch = 0 : i64, scratch_operands = 4 : i64, tpu.core_type = #tpu.core_type<tc>, window_params = [{transform_indices = @transform_0, window_bounds = array<i64: 1, 8, 32>}, {pipeline_mode = #tpu.pipeline_mode<synchronous>, transform_indices = @transform_1, window_bounds = array<i64: 32, 32>}, {pipeline_mode = #tpu.pipeline_mode<synchronous>, transform_indices = @transform_2, window_bounds = array<i64: 1, 32>}, {pipeline_mode = #tpu.pipeline_mode<synchronous>, transform_indices = @transform_3, window_bounds = array<i64: 32, 32>}, {pipeline_mode = #tpu.pipeline_mode<synchronous>, transform_indices = @transform_4, window_bounds = array<i64: 1, 32>}, {pipeline_mode = #tpu.pipeline_mode<synchronous>, transform_indices = @transform_5, window_bounds = array<i64: 32, 32>}, {pipeline_mode = #tpu.pipeline_mode<synchronous>, transform_indices = @transform_6, window_bounds = array<i64: 1, 32>}, {pipeline_mode = #tpu.pipeline_mode<synchronous>, transform_indices = @transform_7, window_bounds = array<i64: 32, 32>}, {pipeline_mode = #tpu.pipeline_mode<synchronous>, transform_indices = @transform_8, window_bounds = array<i64: 1, 32>}, {transform_indices = @transform_9, window_bounds = array<i64: 1, 8, 32>}]} {
    %c0_i32 = arith.constant 0 : i32
    %0 = arith.cmpi eq, %arg1, %c0_i32 : i32
    %1 = arith.extui %0 : i1 to i32
    %c0_i32_0 = arith.constant 0 : i32
    %2 = arith.cmpi ne, %1, %c0_i32_0 : i32
    scf.if %2 {
      %c0_44 = arith.constant 0 : index
      %c0_45 = arith.constant 0 : index
      %c0_46 = arith.constant 0 : index
      %76 = vector.load %arg2[%c0_44, %c0_45, %c0_46] : memref<1x8x32xbf16, #tpu.memory_space<vmem>>, vector<1x8x32xbf16>
      %77 = vector.shape_cast %76 : vector<1x8x32xbf16> to vector<8x32xbf16>
      %c0_47 = arith.constant 0 : index
      %c0_48 = arith.constant 0 : index
      %78 = vector.load %arg5[%c0_47, %c0_48] : memref<32x32xbf16, #tpu.memory_space<vmem>>, vector<32x32xbf16>
      %cst_49 = arith.constant dense<0.000000e+00> : vector<8x32xf32>
      %79 = tpu.matmul %77, %78, %cst_49 {dimension_numbers = #tpu.dot_dimension_numbers<[1], [0], [0], [1], [0, 0, 1, 1], [], []>} : vector<8x32xbf16>, vector<32x32xbf16>, vector<8x32xf32> -> vector<8x32xf32>
      %c0_50 = arith.constant 0 : index
      %c0_51 = arith.constant 0 : index
      %80 = vector.load %arg6[%c0_50, %c0_51] : memref<1x32xf32, #tpu.memory_space<vmem>>, vector<1x32xf32>
      %81 = vector.broadcast %80 : vector<1x32xf32> to vector<8x32xf32>
      %82 = arith.addf %79, %81 : vector<8x32xf32>
      %c0_52 = arith.constant 0 : index
      %c0_53 = arith.constant 0 : index
      %83 = vector.load %arg7[%c0_52, %c0_53] : memref<32x32xbf16, #tpu.memory_space<vmem>>, vector<32x32xbf16>
      %cst_54 = arith.constant dense<0.000000e+00> : vector<8x32xf32>
      %84 = tpu.matmul %77, %83, %cst_54 {dimension_numbers = #tpu.dot_dimension_numbers<[1], [0], [0], [1], [0, 0, 1, 1], [], []>} : vector<8x32xbf16>, vector<32x32xbf16>, vector<8x32xf32> -> vector<8x32xf32>
      %c0_55 = arith.constant 0 : index
      %c0_56 = arith.constant 0 : index
      %85 = vector.load %arg8[%c0_55, %c0_56] : memref<1x32xf32, #tpu.memory_space<vmem>>, vector<1x32xf32>
      %86 = vector.broadcast %85 : vector<1x32xf32> to vector<8x32xf32>
      %87 = arith.addf %84, %86 : vector<8x32xf32>
      %88 = vector.extract_strided_slice %82 {offsets = [0, 0], sizes = [8, 8], strides = [1, 1]} : vector<8x32xf32> to vector<8x8xf32>
      %89 = tpu.transpose %88, [1, 0] : vector<8x8xf32> -> vector<8x8xf32>
      %90 = arith.truncf %89 : vector<8x8xf32> to vector<8x8xbf16>
      %c0_57 = arith.constant 0 : index
      %c0_58 = arith.constant 0 : index
      %c0_59 = arith.constant 0 : index
      %91 = vector.load %arg13[%c0_57, %c0_58, %c0_59] : memref<4x8x8xbf16, #tpu.memory_space<vmem>>, vector<1x8x8xbf16>
      %92 = vector.shape_cast %91 : vector<1x8x8xbf16> to vector<8x8xbf16>
      %93 = vector.shape_cast %90 : vector<8x8xbf16> to vector<1x8x8xbf16>
      tpu.vector_store %arg13[%c0_57, %c0_58, %c0_59], %93 {strides = array<i32>} : memref<4x8x8xbf16, #tpu.memory_space<vmem>>, vector<1x8x8xbf16>,
      %94 = vector.extract_strided_slice %87 {offsets = [0, 0], sizes = [8, 8], strides = [1, 1]} : vector<8x32xf32> to vector<8x8xf32>
      %95 = arith.truncf %94 : vector<8x8xf32> to vector<8x8xbf16>
      %c0_60 = arith.constant 0 : index
      %c0_61 = arith.constant 0 : index
      %c0_62 = arith.constant 0 : index
      %96 = vector.load %arg14[%c0_60, %c0_61, %c0_62] : memref<4x8x8xbf16, #tpu.memory_space<vmem>>, vector<1x8x8xbf16>
      %97 = vector.shape_cast %96 : vector<1x8x8xbf16> to vector<8x8xbf16>
      %98 = vector.shape_cast %95 : vector<8x8xbf16> to vector<1x8x8xbf16>
      tpu.vector_store %arg14[%c0_60, %c0_61, %c0_62], %98 {strides = array<i32>} : memref<4x8x8xbf16, #tpu.memory_space<vmem>>, vector<1x8x8xbf16>,
      %99 = vector.extract_strided_slice %82 {offsets = [0, 8], sizes = [8, 8], strides = [1, 1]} : vector<8x32xf32> to vector<8x8xf32>
      %100 = tpu.transpose %99, [1, 0] : vector<8x8xf32> -> vector<8x8xf32>
      %101 = arith.truncf %100 : vector<8x8xf32> to vector<8x8xbf16>
      %c1_63 = arith.constant 1 : index
      %c0_64 = arith.constant 0 : index
      %c0_65 = arith.constant 0 : index
      %102 = vector.load %arg13[%c1_63, %c0_64, %c0_65] : memref<4x8x8xbf16, #tpu.memory_space<vmem>>, vector<1x8x8xbf16>
      %103 = vector.shape_cast %102 : vector<1x8x8xbf16> to vector<8x8xbf16>
      %104 = vector.shape_cast %101 : vector<8x8xbf16> to vector<1x8x8xbf16>
      tpu.vector_store %arg13[%c1_63, %c0_64, %c0_65], %104 {strides = array<i32>} : memref<4x8x8xbf16, #tpu.memory_space<vmem>>, vector<1x8x8xbf16>,
      %105 = vector.extract_strided_slice %87 {offsets = [0, 8], sizes = [8, 8], strides = [1, 1]} : vector<8x32xf32> to vector<8x8xf32>
      %106 = arith.truncf %105 : vector<8x8xf32> to vector<8x8xbf16>
      %c1_66 = arith.constant 1 : index
      %c0_67 = arith.constant 0 : index
      %c0_68 = arith.constant 0 : index
      %107 = vector.load %arg14[%c1_66, %c0_67, %c0_68] : memref<4x8x8xbf16, #tpu.memory_space<vmem>>, vector<1x8x8xbf16>
      %108 = vector.shape_cast %107 : vector<1x8x8xbf16> to vector<8x8xbf16>
      %109 = vector.shape_cast %106 : vector<8x8xbf16> to vector<1x8x8xbf16>
      tpu.vector_store %arg14[%c1_66, %c0_67, %c0_68], %109 {strides = array<i32>} : memref<4x8x8xbf16, #tpu.memory_space<vmem>>, vector<1x8x8xbf16>,
      %110 = vector.extract_strided_slice %82 {offsets = [0, 16], sizes = [8, 8], strides = [1, 1]} : vector<8x32xf32> to vector<8x8xf32>
      %111 = tpu.transpose %110, [1, 0] : vector<8x8xf32> -> vector<8x8xf32>
      %112 = arith.truncf %111 : vector<8x8xf32> to vector<8x8xbf16>
      %c2_69 = arith.constant 2 : index
      %c0_70 = arith.constant 0 : index
      %c0_71 = arith.constant 0 : index
      %113 = vector.load %arg13[%c2_69, %c0_70, %c0_71] : memref<4x8x8xbf16, #tpu.memory_space<vmem>>, vector<1x8x8xbf16>
      %114 = vector.shape_cast %113 : vector<1x8x8xbf16> to vector<8x8xbf16>
      %115 = vector.shape_cast %112 : vector<8x8xbf16> to vector<1x8x8xbf16>
      tpu.vector_store %arg13[%c2_69, %c0_70, %c0_71], %115 {strides = array<i32>} : memref<4x8x8xbf16, #tpu.memory_space<vmem>>, vector<1x8x8xbf16>,
      %116 = vector.extract_strided_slice %87 {offsets = [0, 16], sizes = [8, 8], strides = [1, 1]} : vector<8x32xf32> to vector<8x8xf32>
      %117 = arith.truncf %116 : vector<8x8xf32> to vector<8x8xbf16>
      %c2_72 = arith.constant 2 : index
      %c0_73 = arith.constant 0 : index
      %c0_74 = arith.constant 0 : index
      %118 = vector.load %arg14[%c2_72, %c0_73, %c0_74] : memref<4x8x8xbf16, #tpu.memory_space<vmem>>, vector<1x8x8xbf16>
      %119 = vector.shape_cast %118 : vector<1x8x8xbf16> to vector<8x8xbf16>
      %120 = vector.shape_cast %117 : vector<8x8xbf16> to vector<1x8x8xbf16>
      tpu.vector_store %arg14[%c2_72, %c0_73, %c0_74], %120 {strides = array<i32>} : memref<4x8x8xbf16, #tpu.memory_space<vmem>>, vector<1x8x8xbf16>,
      %121 = vector.extract_strided_slice %82 {offsets = [0, 24], sizes = [8, 8], strides = [1, 1]} : vector<8x32xf32> to vector<8x8xf32>
      %122 = tpu.transpose %121, [1, 0] : vector<8x8xf32> -> vector<8x8xf32>
      %123 = arith.truncf %122 : vector<8x8xf32> to vector<8x8xbf16>
      %c3_75 = arith.constant 3 : index
      %c0_76 = arith.constant 0 : index
      %c0_77 = arith.constant 0 : index
      %124 = vector.load %arg13[%c3_75, %c0_76, %c0_77] : memref<4x8x8xbf16, #tpu.memory_space<vmem>>, vector<1x8x8xbf16>
      %125 = vector.shape_cast %124 : vector<1x8x8xbf16> to vector<8x8xbf16>
      %126 = vector.shape_cast %123 : vector<8x8xbf16> to vector<1x8x8xbf16>
      tpu.vector_store %arg13[%c3_75, %c0_76, %c0_77], %126 {strides = array<i32>} : memref<4x8x8xbf16, #tpu.memory_space<vmem>>, vector<1x8x8xbf16>,
      %127 = vector.extract_strided_slice %87 {offsets = [0, 24], sizes = [8, 8], strides = [1, 1]} : vector<8x32xf32> to vector<8x8xf32>
      %128 = arith.truncf %127 : vector<8x8xf32> to vector<8x8xbf16>
      %c3_78 = arith.constant 3 : index
      %c0_79 = arith.constant 0 : index
      %c0_80 = arith.constant 0 : index
      %129 = vector.load %arg14[%c3_78, %c0_79, %c0_80] : memref<4x8x8xbf16, #tpu.memory_space<vmem>>, vector<1x8x8xbf16>
      %130 = vector.shape_cast %129 : vector<1x8x8xbf16> to vector<8x8xbf16>
      %131 = vector.shape_cast %128 : vector<8x8xbf16> to vector<1x8x8xbf16>
      tpu.vector_store %arg14[%c3_78, %c0_79, %c0_80], %131 {strides = array<i32>} : memref<4x8x8xbf16, #tpu.memory_space<vmem>>, vector<1x8x8xbf16>,
    } else {
    }
    %c8_i32 = arith.constant 8 : i32
    %3 = arith.muli %arg1, %c8_i32 : i32
    %4 = tpu.assume_multiple %3, 8 : i32
    %c0 = arith.constant 0 : index
    %5 = arith.index_cast %4 : i32 to index
    %c0_1 = arith.constant 0 : index
    %6 = vector.load %arg2[%c0, %5, %c0_1] : memref<1x8x32xbf16, #tpu.memory_space<vmem>>, vector<1x8x32xbf16>
    %7 = vector.shape_cast %6 : vector<1x8x32xbf16> to vector<8x32xbf16>
    %c0_2 = arith.constant 0 : index
    %c0_3 = arith.constant 0 : index
    %8 = vector.load %arg3[%c0_2, %c0_3] : memref<32x32xbf16, #tpu.memory_space<vmem>>, vector<32x32xbf16>
    %cst = arith.constant dense<0.000000e+00> : vector<8x32xf32>
    %9 = tpu.matmul %7, %8, %cst {dimension_numbers = #tpu.dot_dimension_numbers<[1], [0], [0], [1], [0, 0, 1, 1], [], []>} : vector<8x32xbf16>, vector<32x32xbf16>, vector<8x32xf32> -> vector<8x32xf32>
    %c0_4 = arith.constant 0 : index
    %c0_5 = arith.constant 0 : index
    %10 = vector.load %arg4[%c0_4, %c0_5] : memref<1x32xf32, #tpu.memory_space<vmem>>, vector<1x32xf32>
    %11 = vector.broadcast %10 : vector<1x32xf32> to vector<8x32xf32>
    %12 = arith.addf %9, %11 : vector<8x32xf32>
    %cst_6 = arith.constant 0.353553385 : f32
    %13 = vector.broadcast %cst_6 : f32 to vector<8x32xf32>
    %14 = arith.mulf %12, %13 : vector<8x32xf32>
    %15 = vector.extract_strided_slice %14 {offsets = [0, 0], sizes = [8, 8], strides = [1, 1]} : vector<8x32xf32> to vector<8x8xf32>
    %16 = arith.truncf %15 : vector<8x8xf32> to vector<8x8xbf16>
    %c0_7 = arith.constant 0 : index
    %c0_8 = arith.constant 0 : index
    %c0_9 = arith.constant 0 : index
    %17 = vector.load %arg12[%c0_7, %c0_8, %c0_9] : memref<4x8x8xbf16, #tpu.memory_space<vmem>>, vector<1x8x8xbf16>
    %18 = vector.shape_cast %17 : vector<1x8x8xbf16> to vector<8x8xbf16>
    %19 = vector.shape_cast %16 : vector<8x8xbf16> to vector<1x8x8xbf16>
    tpu.vector_store %arg12[%c0_7, %c0_8, %c0_9], %19 {strides = array<i32>} : memref<4x8x8xbf16, #tpu.memory_space<vmem>>, vector<1x8x8xbf16>,
    %20 = vector.extract_strided_slice %14 {offsets = [0, 8], sizes = [8, 8], strides = [1, 1]} : vector<8x32xf32> to vector<8x8xf32>
    %21 = arith.truncf %20 : vector<8x8xf32> to vector<8x8xbf16>
    %c1 = arith.constant 1 : index
    %c0_10 = arith.constant 0 : index
    %c0_11 = arith.constant 0 : index
    %22 = vector.load %arg12[%c1, %c0_10, %c0_11] : memref<4x8x8xbf16, #tpu.memory_space<vmem>>, vector<1x8x8xbf16>
    %23 = vector.shape_cast %22 : vector<1x8x8xbf16> to vector<8x8xbf16>
    %24 = vector.shape_cast %21 : vector<8x8xbf16> to vector<1x8x8xbf16>
    tpu.vector_store %arg12[%c1, %c0_10, %c0_11], %24 {strides = array<i32>} : memref<4x8x8xbf16, #tpu.memory_space<vmem>>, vector<1x8x8xbf16>,
    %25 = vector.extract_strided_slice %14 {offsets = [0, 16], sizes = [8, 8], strides = [1, 1]} : vector<8x32xf32> to vector<8x8xf32>
    %26 = arith.truncf %25 : vector<8x8xf32> to vector<8x8xbf16>
    %c2 = arith.constant 2 : index
    %c0_12 = arith.constant 0 : index
    %c0_13 = arith.constant 0 : index
    %27 = vector.load %arg12[%c2, %c0_12, %c0_13] : memref<4x8x8xbf16, #tpu.memory_space<vmem>>, vector<1x8x8xbf16>
    %28 = vector.shape_cast %27 : vector<1x8x8xbf16> to vector<8x8xbf16>
    %29 = vector.shape_cast %26 : vector<8x8xbf16> to vector<1x8x8xbf16>
    tpu.vector_store %arg12[%c2, %c0_12, %c0_13], %29 {strides = array<i32>} : memref<4x8x8xbf16, #tpu.memory_space<vmem>>, vector<1x8x8xbf16>,
    %30 = vector.extract_strided_slice %14 {offsets = [0, 24], sizes = [8, 8], strides = [1, 1]} : vector<8x32xf32> to vector<8x8xf32>
    %31 = arith.truncf %30 : vector<8x8xf32> to vector<8x8xbf16>
    %c3 = arith.constant 3 : index
    %c0_14 = arith.constant 0 : index
    %c0_15 = arith.constant 0 : index
    %32 = vector.load %arg12[%c3, %c0_14, %c0_15] : memref<4x8x8xbf16, #tpu.memory_space<vmem>>, vector<1x8x8xbf16>
    %33 = vector.shape_cast %32 : vector<1x8x8xbf16> to vector<8x8xbf16>
    %34 = vector.shape_cast %31 : vector<8x8xbf16> to vector<1x8x8xbf16>
    tpu.vector_store %arg12[%c3, %c0_14, %c0_15], %34 {strides = array<i32>} : memref<4x8x8xbf16, #tpu.memory_space<vmem>>, vector<1x8x8xbf16>,
    %c0_16 = arith.constant 0 : index
    %c0_17 = arith.constant 0 : index
    %c0_18 = arith.constant 0 : index
    %35 = vector.load %arg12[%c0_16, %c0_17, %c0_18] : memref<4x8x8xbf16, #tpu.memory_space<vmem>>, vector<4x8x8xbf16>
    %c0_19 = arith.constant 0 : index
    %c0_20 = arith.constant 0 : index
    %c0_21 = arith.constant 0 : index
    %36 = vector.load %arg13[%c0_19, %c0_20, %c0_21] : memref<4x8x8xbf16, #tpu.memory_space<vmem>>, vector<4x8x8xbf16>
    %c0_22 = arith.constant 0 : index
    %c0_23 = arith.constant 0 : index
    %c0_24 = arith.constant 0 : index
    %37 = vector.load %arg14[%c0_22, %c0_23, %c0_24] : memref<4x8x8xbf16, #tpu.memory_space<vmem>>, vector<4x8x8xbf16>
    "tpu.trace_start"() <{level = 10 : i32, message = "hqd,hdk->hqk"}> : () -> ()
    %cst_25 = arith.constant dense<0.000000e+00> : vector<4x8x8xf32>
    %38 = tpu.matmul %35, %36, %cst_25 {dimension_numbers = #tpu.dot_dimension_numbers<[2], [1], [1], [2], [0, 0, 0, 1, 1, 2], [0], [0]>} : vector<4x8x8xbf16>, vector<4x8x8xbf16>, vector<4x8x8xf32> -> vector<4x8x8xf32>
    "tpu.trace_stop"() : () -> ()
    %cst_26 = arith.constant dense<0xFF800000> : vector<4x8xf32>
    %39 = vector.multi_reduction <maximumf>, %38, %cst_26 [2] : vector<4x8x8xf32> to vector<4x8xf32>
    %40 = vector.shape_cast %39 : vector<4x8xf32> to vector<4x8x1xf32>
    %41 = vector.broadcast %40 : vector<4x8x1xf32> to vector<4x8x8xf32>
    %42 = arith.subf %38, %41 : vector<4x8x8xf32>
    %43 = math.exp %42 : vector<4x8x8xf32>
    %cst_27 = arith.constant dense<0.000000e+00> : vector<4x8xf32>
    %44 = vector.multi_reduction <add>, %43, %cst_27 [2] : vector<4x8x8xf32> to vector<4x8xf32>
    %45 = vector.shape_cast %44 : vector<4x8xf32> to vector<4x8x1xf32>
    %46 = tpu.reciprocal %45 {approx = true} : vector<4x8x1xf32> -> vector<4x8x1xf32>
    %47 = vector.broadcast %46 : vector<4x8x1xf32> to vector<4x8x8xf32>
    %48 = arith.mulf %43, %47 : vector<4x8x8xf32>
    %49 = arith.truncf %48 : vector<4x8x8xf32> to vector<4x8x8xbf16>
    "tpu.trace_start"() <{level = 10 : i32, message = "hqk,hkd->hqd"}> : () -> ()
    %cst_28 = arith.constant dense<0.000000e+00> : vector<4x8x8xf32>
    %50 = tpu.matmul %49, %37, %cst_28 {dimension_numbers = #tpu.dot_dimension_numbers<[2], [1], [1], [2], [0, 0, 0, 1, 1, 2], [0], [0]>} : vector<4x8x8xbf16>, vector<4x8x8xbf16>, vector<4x8x8xf32> -> vector<4x8x8xf32>
    "tpu.trace_stop"() : () -> ()
    %51 = vector.extract_strided_slice %50 {offsets = [0, 0, 0], sizes = [1, 8, 8], strides = [1, 1, 1]} : vector<4x8x8xf32> to vector<1x8x8xf32>
    %52 = vector.shape_cast %51 : vector<1x8x8xf32> to vector<8x8xf32>
    %53 = arith.truncf %52 : vector<8x8xf32> to vector<8x8xbf16>
    %c0_29 = arith.constant 0 : index
    %c0_30 = arith.constant 0 : index
    %54 = vector.load %arg15[%c0_29, %c0_30] : memref<8x32xbf16, #tpu.memory_space<vmem>>, vector<8x8xbf16>
    tpu.vector_store %arg15[%c0_29, %c0_30], %53 {strides = array<i32>} : memref<8x32xbf16, #tpu.memory_space<vmem>>, vector<8x8xbf16>,
    %55 = vector.extract_strided_slice %50 {offsets = [1, 0, 0], sizes = [1, 8, 8], strides = [1, 1, 1]} : vector<4x8x8xf32> to vector<1x8x8xf32>
    %56 = vector.shape_cast %55 : vector<1x8x8xf32> to vector<8x8xf32>
    %57 = arith.truncf %56 : vector<8x8xf32> to vector<8x8xbf16>
    %c0_31 = arith.constant 0 : index
    %c8 = arith.constant 8 : index
    %58 = vector.load %arg15[%c0_31, %c8] : memref<8x32xbf16, #tpu.memory_space<vmem>>, vector<8x8xbf16>
    tpu.vector_store %arg15[%c0_31, %c8], %57 {strides = array<i32>} : memref<8x32xbf16, #tpu.memory_space<vmem>>, vector<8x8xbf16>,
    %59 = vector.extract_strided_slice %50 {offsets = [2, 0, 0], sizes = [1, 8, 8], strides = [1, 1, 1]} : vector<4x8x8xf32> to vector<1x8x8xf32>
    %60 = vector.shape_cast %59 : vector<1x8x8xf32> to vector<8x8xf32>
    %61 = arith.truncf %60 : vector<8x8xf32> to vector<8x8xbf16>
    %c0_32 = arith.constant 0 : index
    %c16 = arith.constant 16 : index
    %62 = vector.load %arg15[%c0_32, %c16] : memref<8x32xbf16, #tpu.memory_space<vmem>>, vector<8x8xbf16>
    tpu.vector_store %arg15[%c0_32, %c16], %61 {strides = array<i32>} : memref<8x32xbf16, #tpu.memory_space<vmem>>, vector<8x8xbf16>,
    %63 = vector.extract_strided_slice %50 {offsets = [3, 0, 0], sizes = [1, 8, 8], strides = [1, 1, 1]} : vector<4x8x8xf32> to vector<1x8x8xf32>
    %64 = vector.shape_cast %63 : vector<1x8x8xf32> to vector<8x8xf32>
    %65 = arith.truncf %64 : vector<8x8xf32> to vector<8x8xbf16>
    %c0_33 = arith.constant 0 : index
    %c24 = arith.constant 24 : index
    %66 = vector.load %arg15[%c0_33, %c24] : memref<8x32xbf16, #tpu.memory_space<vmem>>, vector<8x8xbf16>
    tpu.vector_store %arg15[%c0_33, %c24], %65 {strides = array<i32>} : memref<8x32xbf16, #tpu.memory_space<vmem>>, vector<8x8xbf16>,
    %c0_34 = arith.constant 0 : index
    %c0_35 = arith.constant 0 : index
    %67 = vector.load %arg15[%c0_34, %c0_35] : memref<8x32xbf16, #tpu.memory_space<vmem>>, vector<8x32xbf16>
    %c0_36 = arith.constant 0 : index
    %c0_37 = arith.constant 0 : index
    %68 = vector.load %arg9[%c0_36, %c0_37] : memref<32x32xbf16, #tpu.memory_space<vmem>>, vector<32x32xbf16>
    %cst_38 = arith.constant dense<0.000000e+00> : vector<8x32xf32>
    %69 = tpu.matmul %67, %68, %cst_38 {dimension_numbers = #tpu.dot_dimension_numbers<[1], [0], [0], [1], [0, 0, 1, 1], [], []>} : vector<8x32xbf16>, vector<32x32xbf16>, vector<8x32xf32> -> vector<8x32xf32>
    %c0_39 = arith.constant 0 : index
    %c0_40 = arith.constant 0 : index
    %70 = vector.load %arg10[%c0_39, %c0_40] : memref<1x32xf32, #tpu.memory_space<vmem>>, vector<1x32xf32>
    %71 = vector.broadcast %70 : vector<1x32xf32> to vector<8x32xf32>
    %72 = arith.addf %69, %71 : vector<8x32xf32>
    %c0_41 = arith.constant 0 : index
    %c0_42 = arith.constant 0 : index
    %c0_43 = arith.constant 0 : index
    %73 = vector.load %arg11[%c0_41, %c0_42, %c0_43] : memref<1x8x32xf32, #tpu.memory_space<vmem>>, vector<1x8x32xf32>
    %74 = vector.shape_cast %73 : vector<1x8x32xf32> to vector<8x32xf32>
    %75 = vector.shape_cast %72 : vector<8x32xf32> to vector<1x8x32xf32>
    tpu.vector_store %arg11[%c0_41, %c0_42, %c0_43], %75 {strides = array<i32>} : memref<1x8x32xf32, #tpu.memory_space<vmem>>, vector<1x8x32xf32>,
    return
  }
  func.func @transform_0(%arg0: i32, %arg1: i32) -> (i32, i32, i32) {
    %c0_i32 = arith.constant 0 : i32
    %c0_i32_0 = arith.constant 0 : i32
    %c0_i32_1 = arith.constant 0 : i32
    return %arg0, %c0_i32, %c0_i32_0 : i32, i32, i32
  }
  func.func @transform_1(%arg0: i32, %arg1: i32) -> (i32, i32) {
    %c0_i32 = arith.constant 0 : i32
    %c0_i32_0 = arith.constant 0 : i32
    %c0_i32_1 = arith.constant 0 : i32
    return %c0_i32, %c0_i32_0 : i32, i32
  }
  func.func @transform_2(%arg0: i32, %arg1: i32) -> (i32, i32) {
    %c0_i32 = arith.constant 0 : i32
    %c0_i32_0 = arith.constant 0 : i32
    %c0_i32_1 = arith.constant 0 : i32
    return %c0_i32, %c0_i32_0 : i32, i32
  }
  func.func @transform_3(%arg0: i32, %arg1: i32) -> (i32, i32) {
    %c0_i32 = arith.constant 0 : i32
    %c0_i32_0 = arith.constant 0 : i32
    %c0_i32_1 = arith.constant 0 : i32
    return %c0_i32, %c0_i32_0 : i32, i32
  }
  func.func @transform_4(%arg0: i32, %arg1: i32) -> (i32, i32) {
    %c0_i32 = arith.constant 0 : i32
    %c0_i32_0 = arith.constant 0 : i32
    %c0_i32_1 = arith.constant 0 : i32
    return %c0_i32, %c0_i32_0 : i32, i32
  }
  func.func @transform_5(%arg0: i32, %arg1: i32) -> (i32, i32) {
    %c0_i32 = arith.constant 0 : i32
    %c0_i32_0 = arith.constant 0 : i32
    %c0_i32_1 = arith.constant 0 : i32
    return %c0_i32, %c0_i32_0 : i32, i32
  }
  func.func @transform_6(%arg0: i32, %arg1: i32) -> (i32, i32) {
    %c0_i32 = arith.constant 0 : i32
    %c0_i32_0 = arith.constant 0 : i32
    %c0_i32_1 = arith.constant 0 : i32
    return %c0_i32, %c0_i32_0 : i32, i32
  }
  func.func @transform_7(%arg0: i32, %arg1: i32) -> (i32, i32) {
    %c0_i32 = arith.constant 0 : i32
    %c0_i32_0 = arith.constant 0 : i32
    %c0_i32_1 = arith.constant 0 : i32
    return %c0_i32, %c0_i32_0 : i32, i32
  }
  func.func @transform_8(%arg0: i32, %arg1: i32) -> (i32, i32) {
    %c0_i32 = arith.constant 0 : i32
    %c0_i32_0 = arith.constant 0 : i32
    %c0_i32_1 = arith.constant 0 : i32
    return %c0_i32, %c0_i32_0 : i32, i32
  }
  func.func @transform_9(%arg0: i32, %arg1: i32) -> (i32, i32, i32) {
    %c0_i32 = arith.constant 0 : i32
    %c0_i32_0 = arith.constant 0 : i32
    return %arg0, %arg1, %c0_i32 : i32, i32, i32
  }
}

module attributes {stable_mosaic.version = 11 : i64} {
  func.func @attention_kernel(%arg0: i32, %arg1: i32, %arg2: memref<1x8x32xbf16, #tpu.memory_space<vmem>>, %arg3: memref<32x32xbf16, #tpu.memory_space<vmem>>, %arg4: memref<1x32xf32, #tpu.memory_space<vmem>>, %arg5: memref<32x32xbf16, #tpu.memory_space<vmem>>, %arg6: memref<1x32xf32, #tpu.memory_space<vmem>>, %arg7: memref<32x32xbf16, #tpu.memory_space<vmem>>, %arg8: memref<1x32xf32, #tpu.memory_space<vmem>>, %arg9: memref<32x32xbf16, #tpu.memory_space<vmem>>, %arg10: memref<1x32xf32, #tpu.memory_space<vmem>>, %arg11: memref<1x8x32xf32, #tpu.memory_space<vmem>>, %arg12: memref<4x8x8xbf16, #tpu.memory_space<vmem>>, %arg13: memref<4x8x8xbf16, #tpu.memory_space<vmem>>, %arg14: memref<4x8x8xbf16, #tpu.memory_space<vmem>>, %arg15: memref<8x32xbf16, #tpu.memory_space<vmem>>) attributes {dimension_semantics = [#tpu.dimension_semantics<parallel>, #tpu.dimension_semantics<arbitrary>], iteration_bounds = array<i64: 2, 1>, scalar_prefetch = 0 : i64, scratch_operands = 4 : i64, tpu.core_type = #tpu.core_type<tc>, window_params = [{transform_indices = @transform_0, window_bounds = array<i64: 1, 8, 32>}, {pipeline_mode = #tpu.pipeline_mode<synchronous>, transform_indices = @transform_1, window_bounds = array<i64: 32, 32>}, {pipeline_mode = #tpu.pipeline_mode<synchronous>, transform_indices = @transform_2, window_bounds = array<i64: 1, 32>}, {pipeline_mode = #tpu.pipeline_mode<synchronous>, transform_indices = @transform_3, window_bounds = array<i64: 32, 32>}, {pipeline_mode = #tpu.pipeline_mode<synchronous>, transform_indices = @transform_4, window_bounds = array<i64: 1, 32>}, {pipeline_mode = #tpu.pipeline_mode<synchronous>, transform_indices = @transform_5, window_bounds = array<i64: 32, 32>}, {pipeline_mode = #tpu.pipeline_mode<synchronous>, transform_indices = @transform_6, window_bounds = array<i64: 1, 32>}, {pipeline_mode = #tpu.pipeline_mode<synchronous>, transform_indices = @transform_7, window_bounds = array<i64: 32, 32>}, {pipeline_mode = #tpu.pipeline_mode<synchronous>, transform_indices = @transform_8, window_bounds = array<i64: 1, 32>}, {transform_indices = @transform_9, window_bounds = array<i64: 1, 8, 32>}]} {
    %c0_i32 = arith.constant 0 : i32
    %0 = arith.cmpi eq, %arg1, %c0_i32 : i32
    %1 = arith.extui %0 : i1 to i32
    %c0_i32_0 = arith.constant 0 : i32
    %2 = arith.cmpi ne, %1, %c0_i32_0 : i32
    scf.if %2 {
      %c0_44 = arith.constant 0 : index
      %c0_45 = arith.constant 0 : index
      %c0_46 = arith.constant 0 : index
      %76 = vector.load %arg2[%c0_44, %c0_45, %c0_46] : memref<1x8x32xbf16, #tpu.memory_space<vmem>>, vector<1x8x32xbf16>
      %77 = vector.shape_cast %76 : vector<1x8x32xbf16> to vector<8x32xbf16>
      %c0_47 = arith.constant 0 : index
      %c0_48 = arith.constant 0 : index
      %78 = vector.load %arg5[%c0_47, %c0_48] : memref<32x32xbf16, #tpu.memory_space<vmem>>, vector<32x32xbf16>
      %cst_49 = arith.constant dense<0.000000e+00> : vector<8x32xf32>
      %79 = tpu.matmul %77, %78, %cst_49 {dimension_numbers = #tpu.dot_dimension_numbers<[1], [0], [0], [1], [0, 0, 1, 1], [], []>} : vector<8x32xbf16>, vector<32x32xbf16>, vector<8x32xf32> -> vector<8x32xf32>
      %c0_50 = arith.constant 0 : index
      %c0_51 = arith.constant 0 : index
      %80 = vector.load %arg6[%c0_50, %c0_51] : memref<1x32xf32, #tpu.memory_space<vmem>>, vector<1x32xf32>
      %81 = vector.broadcast %80 : vector<1x32xf32> to vector<8x32xf32>
      %82 = arith.addf %79, %81 : vector<8x32xf32>
      %c0_52 = arith.constant 0 : index
      %c0_53 = arith.constant 0 : index
      %83 = vector.load %arg7[%c0_52, %c0_53] : memref<32x32xbf16, #tpu.memory_space<vmem>>, vector<32x32xbf16>
      %cst_54 = arith.constant dense<0.000000e+00> : vector<8x32xf32>
      %84 = tpu.matmul %77, %83, %cst_54 {dimension_numbers = #tpu.dot_dimension_numbers<[1], [0], [0], [1], [0, 0, 1, 1], [], []>} : vector<8x32xbf16>, vector<32x32xbf16>, vector<8x32xf32> -> vector<8x32xf32>
      %c0_55 = arith.constant 0 : index
      %c0_56 = arith.constant 0 : index
      %85 = vector.load %arg8[%c0_55, %c0_56] : memref<1x32xf32, #tpu.memory_space<vmem>>, vector<1x32xf32>
      %86 = vector.broadcast %85 : vector<1x32xf32> to vector<8x32xf32>
      %87 = arith.addf %84, %86 : vector<8x32xf32>
      %88 = vector.extract_strided_slice %82 {offsets = [0, 0], sizes = [8, 8], strides = [1, 1]} : vector<8x32xf32> to vector<8x8xf32>
      %89 = tpu.transpose %88, [1, 0] : vector<8x8xf32> -> vector<8x8xf32>
      %90 = arith.truncf %89 : vector<8x8xf32> to vector<8x8xbf16>
      %c0_57 = arith.constant 0 : index
      %c0_58 = arith.constant 0 : index
      %c0_59 = arith.constant 0 : index
      %91 = vector.load %arg13[%c0_57, %c0_58, %c0_59] : memref<4x8x8xbf16, #tpu.memory_space<vmem>>, vector<1x8x8xbf16>
      %92 = vector.shape_cast %91 : vector<1x8x8xbf16> to vector<8x8xbf16>
      %93 = vector.shape_cast %90 : vector<8x8xbf16> to vector<1x8x8xbf16>
      tpu.vector_store %arg13[%c0_57, %c0_58, %c0_59], %93 {strides = array<i32>} : memref<4x8x8xbf16, #tpu.memory_space<vmem>>, vector<1x8x8xbf16>,
      %94 = vector.extract_strided_slice %87 {offsets = [0, 0], sizes = [8, 8], strides = [1, 1]} : vector<8x32xf32> to vector<8x8xf32>
      %95 = arith.truncf %94 : vector<8x8xf32> to vector<8x8xbf16>
      %c0_60 = arith.constant 0 : index
      %c0_61 = arith.constant 0 : index
      %c0_62 = arith.constant 0 : index
      %96 = vector.load %arg14[%c0_60, %c0_61, %c0_62] : memref<4x8x8xbf16, #tpu.memory_space<vmem>>, vector<1x8x8xbf16>
      %97 = vector.shape_cast %96 : vector<1x8x8xbf16> to vector<8x8xbf16>
      %98 = vector.shape_cast %95 : vector<8x8xbf16> to vector<1x8x8xbf16>
      tpu.vector_store %arg14[%c0_60, %c0_61, %c0_62], %98 {strides = array<i32>} : memref<4x8x8xbf16, #tpu.memory_space<vmem>>, vector<1x8x8xbf16>,
      %99 = vector.extract_strided_slice %82 {offsets = [0, 8], sizes = [8, 8], strides = [1, 1]} : vector<8x32xf32> to vector<8x8xf32>
      %100 = tpu.transpose %99, [1, 0] : vector<8x8xf32> -> vector<8x8xf32>
      %101 = arith.truncf %100 : vector<8x8xf32> to vector<8x8xbf16>
      %c1_63 = arith.constant 1 : index
      %c0_64 = arith.constant 0 : index
      %c0_65 = arith.constant 0 : index
      %102 = vector.load %arg13[%c1_63, %c0_64, %c0_65] : memref<4x8x8xbf16, #tpu.memory_space<vmem>>, vector<1x8x8xbf16>
      %103 = vector.shape_cast %102 : vector<1x8x8xbf16> to vector<8x8xbf16>
      %104 = vector.shape_cast %101 : vector<8x8xbf16> to vector<1x8x8xbf16>
      tpu.vector_store %arg13[%c1_63, %c0_64, %c0_65], %104 {strides = array<i32>} : memref<4x8x8xbf16, #tpu.memory_space<vmem>>, vector<1x8x8xbf16>,
      %105 = vector.extract_strided_slice %87 {offsets = [0, 8], sizes = [8, 8], strides = [1, 1]} : vector<8x32xf32> to vector<8x8xf32>
      %106 = arith.truncf %105 : vector<8x8xf32> to vector<8x8xbf16>
      %c1_66 = arith.constant 1 : index
      %c0_67 = arith.constant 0 : index
      %c0_68 = arith.constant 0 : index
      %107 = vector.load %arg14[%c1_66, %c0_67, %c0_68] : memref<4x8x8xbf16, #tpu.memory_space<vmem>>, vector<1x8x8xbf16>
      %108 = vector.shape_cast %107 : vector<1x8x8xbf16> to vector<8x8xbf16>
      %109 = vector.shape_cast %106 : vector<8x8xbf16> to vector<1x8x8xbf16>
      tpu.vector_store %arg14[%c1_66, %c0_67, %c0_68], %109 {strides = array<i32>} : memref<4x8x8xbf16, #tpu.memory_space<vmem>>, vector<1x8x8xbf16>,
      %110 = vector.extract_strided_slice %82 {offsets = [0, 16], sizes = [8, 8], strides = [1, 1]} : vector<8x32xf32> to vector<8x8xf32>
      %111 = tpu.transpose %110, [1, 0] : vector<8x8xf32> -> vector<8x8xf32>
      %112 = arith.truncf %111 : vector<8x8xf32> to vector<8x8xbf16>
      %c2_69 = arith.constant 2 : index
      %c0_70 = arith.constant 0 : index
      %c0_71 = arith.constant 0 : index
      %113 = vector.load %arg13[%c2_69, %c0_70, %c0_71] : memref<4x8x8xbf16, #tpu.memory_space<vmem>>, vector<1x8x8xbf16>
      %114 = vector.shape_cast %113 : vector<1x8x8xbf16> to vector<8x8xbf16>
      %115 = vector.shape_cast %112 : vector<8x8xbf16> to vector<1x8x8xbf16>
      tpu.vector_store %arg13[%c2_69, %c0_70, %c0_71], %115 {strides = array<i32>} : memref<4x8x8xbf16, #tpu.memory_space<vmem>>, vector<1x8x8xbf16>,
      %116 = vector.extract_strided_slice %87 {offsets = [0, 16], sizes = [8, 8], strides = [1, 1]} : vector<8x32xf32> to vector<8x8xf32>
      %117 = arith.truncf %116 : vector<8x8xf32> to vector<8x8xbf16>
      %c2_72 = arith.constant 2 : index
      %c0_73 = arith.constant 0 : index
      %c0_74 = arith.constant 0 : index
      %118 = vector.load %arg14[%c2_72, %c0_73, %c0_74] : memref<4x8x8xbf16, #tpu.memory_space<vmem>>, vector<1x8x8xbf16>
      %119 = vector.shape_cast %118 : vector<1x8x8xbf16> to vector<8x8xbf16>
      %120 = vector.shape_cast %117 : vector<8x8xbf16> to vector<1x8x8xbf16>
      tpu.vector_store %arg14[%c2_72, %c0_73, %c0_74], %120 {strides = array<i32>} : memref<4x8x8xbf16, #tpu.memory_space<vmem>>, vector<1x8x8xbf16>,
      %121 = vector.extract_strided_slice %82 {offsets = [0, 24], sizes = [8, 8], strides = [1, 1]} : vector<8x32xf32> to vector<8x8xf32>
      %122 = tpu.transpose %121, [1, 0] : vector<8x8xf32> -> vector<8x8xf32>
      %123 = arith.truncf %122 : vector<8x8xf32> to vector<8x8xbf16>
      %c3_75 = arith.constant 3 : index
      %c0_76 = arith.constant 0 : index
      %c0_77 = arith.constant 0 : index
      %124 = vector.load %arg13[%c3_75, %c0_76, %c0_77] : memref<4x8x8xbf16, #tpu.memory_space<vmem>>, vector<1x8x8xbf16>
      %125 = vector.shape_cast %124 : vector<1x8x8xbf16> to vector<8x8xbf16>
      %126 = vector.shape_cast %123 : vector<8x8xbf16> to vector<1x8x8xbf16>
      tpu.vector_store %arg13[%c3_75, %c0_76, %c0_77], %126 {strides = array<i32>} : memref<4x8x8xbf16, #tpu.memory_space<vmem>>, vector<1x8x8xbf16>,
      %127 = vector.extract_strided_slice %87 {offsets = [0, 24], sizes = [8, 8], strides = [1, 1]} : vector<8x32xf32> to vector<8x8xf32>
      %128 = arith.truncf %127 : vector<8x8xf32> to vector<8x8xbf16>
      %c3_78 = arith.constant 3 : index
      %c0_79 = arith.constant 0 : index
      %c0_80 = arith.constant 0 : index
      %129 = vector.load %arg14[%c3_78, %c0_79, %c0_80] : memref<4x8x8xbf16, #tpu.memory_space<vmem>>, vector<1x8x8xbf16>
      %130 = vector.shape_cast %129 : vector<1x8x8xbf16> to vector<8x8xbf16>
      %131 = vector.shape_cast %128 : vector<8x8xbf16> to vector<1x8x8xbf16>
      tpu.vector_store %arg14[%c3_78, %c0_79, %c0_80], %131 {strides = array<i32>} : memref<4x8x8xbf16, #tpu.memory_space<vmem>>, vector<1x8x8xbf16>,
    } else {
    }
    %c8_i32 = arith.constant 8 : i32
    %3 = arith.muli %arg1, %c8_i32 : i32
    %4 = tpu.assume_multiple %3, 8 : i32
    %c0 = arith.constant 0 : index
    %5 = arith.index_cast %4 : i32 to index
    %c0_1 = arith.constant 0 : index
    %6 = vector.load %arg2[%c0, %5, %c0_1] : memref<1x8x32xbf16, #tpu.memory_space<vmem>>, vector<1x8x32xbf16>
    %7 = vector.shape_cast %6 : vector<1x8x32xbf16> to vector<8x32xbf16>
    %c0_2 = arith.constant 0 : index
    %c0_3 = arith.constant 0 : index
    %8 = vector.load %arg3[%c0_2, %c0_3] : memref<32x32xbf16, #tpu.memory_space<vmem>>, vector<32x32xbf16>
    %cst = arith.constant dense<0.000000e+00> : vector<8x32xf32>
    %9 = tpu.matmul %7, %8, %cst {dimension_numbers = #tpu.dot_dimension_numbers<[1], [0], [0], [1], [0, 0, 1, 1], [], []>} : vector<8x32xbf16>, vector<32x32xbf16>, vector<8x32xf32> -> vector<8x32xf32>
    %c0_4 = arith.constant 0 : index
    %c0_5 = arith.constant 0 : index
    %10 = vector.load %arg4[%c0_4, %c0_5] : memref<1x32xf32, #tpu.memory_space<vmem>>, vector<1x32xf32>
    %11 = vector.broadcast %10 : vector<1x32xf32> to vector<8x32xf32>
    %12 = arith.addf %9, %11 : vector<8x32xf32>
    %cst_6 = arith.constant 0.353553385 : f32
    %13 = vector.broadcast %cst_6 : f32 to vector<8x32xf32>
    %14 = arith.mulf %12, %13 : vector<8x32xf32>
    %15 = vector.extract_strided_slice %14 {offsets = [0, 0], sizes = [8, 8], strides = [1, 1]} : vector<8x32xf32> to vector<8x8xf32>
    %16 = arith.truncf %15 : vector<8x8xf32> to vector<8x8xbf16>
    %c0_7 = arith.constant 0 : index
    %c0_8 = arith.constant 0 : index
    %c0_9 = arith.constant 0 : index
    %17 = vector.load %arg12[%c0_7, %c0_8, %c0_9] : memref<4x8x8xbf16, #tpu.memory_space<vmem>>, vector<1x8x8xbf16>
    %18 = vector.shape_cast %17 : vector<1x8x8xbf16> to vector<8x8xbf16>
    %19 = vector.shape_cast %16 : vector<8x8xbf16> to vector<1x8x8xbf16>
    tpu.vector_store %arg12[%c0_7, %c0_8, %c0_9], %19 {strides = array<i32>} : memref<4x8x8xbf16, #tpu.memory_space<vmem>>, vector<1x8x8xbf16>,
    %20 = vector.extract_strided_slice %14 {offsets = [0, 8], sizes = [8, 8], strides = [1, 1]} : vector<8x32xf32> to vector<8x8xf32>
    %21 = arith.truncf %20 : vector<8x8xf32> to vector<8x8xbf16>
    %c1 = arith.constant 1 : index
    %c0_10 = arith.constant 0 : index
    %c0_11 = arith.constant 0 : index
    %22 = vector.load %arg12[%c1, %c0_10, %c0_11] : memref<4x8x8xbf16, #tpu.memory_space<vmem>>, vector<1x8x8xbf16>
    %23 = vector.shape_cast %22 : vector<1x8x8xbf16> to vector<8x8xbf16>
    %24 = vector.shape_cast %21 : vector<8x8xbf16> to vector<1x8x8xbf16>
    tpu.vector_store %arg12[%c1, %c0_10, %c0_11], %24 {strides = array<i32>} : memref<4x8x8xbf16, #tpu.memory_space<vmem>>, vector<1x8x8xbf16>,
    %25 = vector.extract_strided_slice %14 {offsets = [0, 16], sizes = [8, 8], strides = [1, 1]} : vector<8x32xf32> to vector<8x8xf32>
    %26 = arith.truncf %25 : vector<8x8xf32> to vector<8x8xbf16>
    %c2 = arith.constant 2 : index
    %c0_12 = arith.constant 0 : index
    %c0_13 = arith.constant 0 : index
    %27 = vector.load %arg12[%c2, %c0_12, %c0_13] : memref<4x8x8xbf16, #tpu.memory_space<vmem>>, vector<1x8x8xbf16>
    %28 = vector.shape_cast %27 : vector<1x8x8xbf16> to vector<8x8xbf16>
    %29 = vector.shape_cast %26 : vector<8x8xbf16> to vector<1x8x8xbf16>
    tpu.vector_store %arg12[%c2, %c0_12, %c0_13], %29 {strides = array<i32>} : memref<4x8x8xbf16, #tpu.memory_space<vmem>>, vector<1x8x8xbf16>,
    %30 = vector.extract_strided_slice %14 {offsets = [0, 24], sizes = [8, 8], strides = [1, 1]} : vector<8x32xf32> to vector<8x8xf32>
    %31 = arith.truncf %30 : vector<8x8xf32> to vector<8x8xbf16>
    %c3 = arith.constant 3 : index
    %c0_14 = arith.constant 0 : index
    %c0_15 = arith.constant 0 : index
    %32 = vector.load %arg12[%c3, %c0_14, %c0_15] : memref<4x8x8xbf16, #tpu.memory_space<vmem>>, vector<1x8x8xbf16>
    %33 = vector.shape_cast %32 : vector<1x8x8xbf16> to vector<8x8xbf16>
    %34 = vector.shape_cast %31 : vector<8x8xbf16> to vector<1x8x8xbf16>
    tpu.vector_store %arg12[%c3, %c0_14, %c0_15], %34 {strides = array<i32>} : memref<4x8x8xbf16, #tpu.memory_space<vmem>>, vector<1x8x8xbf16>,
    %c0_16 = arith.constant 0 : index
    %c0_17 = arith.constant 0 : index
    %c0_18 = arith.constant 0 : index
    %35 = vector.load %arg12[%c0_16, %c0_17, %c0_18] : memref<4x8x8xbf16, #tpu.memory_space<vmem>>, vector<4x8x8xbf16>
    %c0_19 = arith.constant 0 : index
    %c0_20 = arith.constant 0 : index
    %c0_21 = arith.constant 0 : index
    %36 = vector.load %arg13[%c0_19, %c0_20, %c0_21] : memref<4x8x8xbf16, #tpu.memory_space<vmem>>, vector<4x8x8xbf16>
    %c0_22 = arith.constant 0 : index
    %c0_23 = arith.constant 0 : index
    %c0_24 = arith.constant 0 : index
    %37 = vector.load %arg14[%c0_22, %c0_23, %c0_24] : memref<4x8x8xbf16, #tpu.memory_space<vmem>>, vector<4x8x8xbf16>
    "tpu.trace_start"() <{level = 10 : i32, message = "hqd,hdk->hqk"}> : () -> ()
    %cst_25 = arith.constant dense<0.000000e+00> : vector<4x8x8xf32>
    %38 = tpu.matmul %35, %36, %cst_25 {dimension_numbers = #tpu.dot_dimension_numbers<[2], [1], [1], [2], [0, 0, 0, 1, 1, 2], [0], [0]>} : vector<4x8x8xbf16>, vector<4x8x8xbf16>, vector<4x8x8xf32> -> vector<4x8x8xf32>
    "tpu.trace_stop"() : () -> ()
    %cst_26 = arith.constant dense<0xFF800000> : vector<4x8xf32>
    %39 = vector.multi_reduction <maximumf>, %38, %cst_26 [2] : vector<4x8x8xf32> to vector<4x8xf32>
    %40 = vector.shape_cast %39 : vector<4x8xf32> to vector<4x8x1xf32>
    %41 = vector.broadcast %40 : vector<4x8x1xf32> to vector<4x8x8xf32>
    %42 = arith.subf %38, %41 : vector<4x8x8xf32>
    %43 = math.exp %42 : vector<4x8x8xf32>
    %cst_27 = arith.constant dense<0.000000e+00> : vector<4x8xf32>
    %44 = vector.multi_reduction <add>, %43, %cst_27 [2] : vector<4x8x8xf32> to vector<4x8xf32>
    %45 = vector.shape_cast %44 : vector<4x8xf32> to vector<4x8x1xf32>
    %46 = tpu.reciprocal %45 {approx = true} : vector<4x8x1xf32> -> vector<4x8x1xf32>
    %47 = vector.broadcast %46 : vector<4x8x1xf32> to vector<4x8x8xf32>
    %48 = arith.mulf %43, %47 : vector<4x8x8xf32>
    %49 = arith.truncf %48 : vector<4x8x8xf32> to vector<4x8x8xbf16>
    "tpu.trace_start"() <{level = 10 : i32, message = "hqk,hkd->hqd"}> : () -> ()
    %cst_28 = arith.constant dense<0.000000e+00> : vector<4x8x8xf32>
    %50 = tpu.matmul %49, %37, %cst_28 {dimension_numbers = #tpu.dot_dimension_numbers<[2], [1], [1], [2], [0, 0, 0, 1, 1, 2], [0], [0]>} : vector<4x8x8xbf16>, vector<4x8x8xbf16>, vector<4x8x8xf32> -> vector<4x8x8xf32>
    "tpu.trace_stop"() : () -> ()
    %51 = vector.extract_strided_slice %50 {offsets = [0, 0, 0], sizes = [1, 8, 8], strides = [1, 1, 1]} : vector<4x8x8xf32> to vector<1x8x8xf32>
    %52 = vector.shape_cast %51 : vector<1x8x8xf32> to vector<8x8xf32>
    %53 = arith.truncf %52 : vector<8x8xf32> to vector<8x8xbf16>
    %c0_29 = arith.constant 0 : index
    %c0_30 = arith.constant 0 : index
    %54 = vector.load %arg15[%c0_29, %c0_30] : memref<8x32xbf16, #tpu.memory_space<vmem>>, vector<8x8xbf16>
    tpu.vector_store %arg15[%c0_29, %c0_30], %53 {strides = array<i32>} : memref<8x32xbf16, #tpu.memory_space<vmem>>, vector<8x8xbf16>,
    %55 = vector.extract_strided_slice %50 {offsets = [1, 0, 0], sizes = [1, 8, 8], strides = [1, 1, 1]} : vector<4x8x8xf32> to vector<1x8x8xf32>
    %56 = vector.shape_cast %55 : vector<1x8x8xf32> to vector<8x8xf32>
    %57 = arith.truncf %56 : vector<8x8xf32> to vector<8x8xbf16>
    %c0_31 = arith.constant 0 : index
    %c8 = arith.constant 8 : index
    %58 = vector.load %arg15[%c0_31, %c8] : memref<8x32xbf16, #tpu.memory_space<vmem>>, vector<8x8xbf16>
    tpu.vector_store %arg15[%c0_31, %c8], %57 {strides = array<i32>} : memref<8x32xbf16, #tpu.memory_space<vmem>>, vector<8x8xbf16>,
    %59 = vector.extract_strided_slice %50 {offsets = [2, 0, 0], sizes = [1, 8, 8], strides = [1, 1, 1]} : vector<4x8x8xf32> to vector<1x8x8xf32>
    %60 = vector.shape_cast %59 : vector<1x8x8xf32> to vector<8x8xf32>
    %61 = arith.truncf %60 : vector<8x8xf32> to vector<8x8xbf16>
    %c0_32 = arith.constant 0 : index
    %c16 = arith.constant 16 : index
    %62 = vector.load %arg15[%c0_32, %c16] : memref<8x32xbf16, #tpu.memory_space<vmem>>, vector<8x8xbf16>
    tpu.vector_store %arg15[%c0_32, %c16], %61 {strides = array<i32>} : memref<8x32xbf16, #tpu.memory_space<vmem>>, vector<8x8xbf16>,
    %63 = vector.extract_strided_slice %50 {offsets = [3, 0, 0], sizes = [1, 8, 8], strides = [1, 1, 1]} : vector<4x8x8xf32> to vector<1x8x8xf32>
    %64 = vector.shape_cast %63 : vector<1x8x8xf32> to vector<8x8xf32>
    %65 = arith.truncf %64 : vector<8x8xf32> to vector<8x8xbf16>
    %c0_33 = arith.constant 0 : index
    %c24 = arith.constant 24 : index
    %66 = vector.load %arg15[%c0_33, %c24] : memref<8x32xbf16, #tpu.memory_space<vmem>>, vector<8x8xbf16>
    tpu.vector_store %arg15[%c0_33, %c24], %65 {strides = array<i32>} : memref<8x32xbf16, #tpu.memory_space<vmem>>, vector<8x8xbf16>,
    %c0_34 = arith.constant 0 : index
    %c0_35 = arith.constant 0 : index
    %67 = vector.load %arg15[%c0_34, %c0_35] : memref<8x32xbf16, #tpu.memory_space<vmem>>, vector<8x32xbf16>
    %c0_36 = arith.constant 0 : index
    %c0_37 = arith.constant 0 : index
    %68 = vector.load %arg9[%c0_36, %c0_37] : memref<32x32xbf16, #tpu.memory_space<vmem>>, vector<32x32xbf16>
    %cst_38 = arith.constant dense<0.000000e+00> : vector<8x32xf32>
    %69 = tpu.matmul %67, %68, %cst_38 {dimension_numbers = #tpu.dot_dimension_numbers<[1], [0], [0], [1], [0, 0, 1, 1], [], []>} : vector<8x32xbf16>, vector<32x32xbf16>, vector<8x32xf32> -> vector<8x32xf32>
    %c0_39 = arith.constant 0 : index
    %c0_40 = arith.constant 0 : index
    %70 = vector.load %arg10[%c0_39, %c0_40] : memref<1x32xf32, #tpu.memory_space<vmem>>, vector<1x32xf32>
    %71 = vector.broadcast %70 : vector<1x32xf32> to vector<8x32xf32>
    %72 = arith.addf %69, %71 : vector<8x32xf32>
    %c0_41 = arith.constant 0 : index
    %c0_42 = arith.constant 0 : index
    %c0_43 = arith.constant 0 : index
    %73 = vector.load %arg11[%c0_41, %c0_42, %c0_43] : memref<1x8x32xf32, #tpu.memory_space<vmem>>, vector<1x8x32xf32>
    %74 = vector.shape_cast %73 : vector<1x8x32xf32> to vector<8x32xf32>
    %75 = vector.shape_cast %72 : vector<8x32xf32> to vector<1x8x32xf32>
    tpu.vector_store %arg11[%c0_41, %c0_42, %c0_43], %75 {strides = array<i32>} : memref<1x8x32xf32, #tpu.memory_space<vmem>>, vector<1x8x32xf32>,
    return
  }
  func.func @transform_0(%arg0: i32, %arg1: i32) -> (i32, i32, i32) {
    %c0_i32 = arith.constant 0 : i32
    %c0_i32_0 = arith.constant 0 : i32
    %c0_i32_1 = arith.constant 0 : i32
    return %arg0, %c0_i32, %c0_i32_0 : i32, i32, i32
  }
  func.func @transform_1(%arg0: i32, %arg1: i32) -> (i32, i32) {
    %c0_i32 = arith.constant 0 : i32
    %c0_i32_0 = arith.constant 0 : i32
    %c0_i32_1 = arith.constant 0 : i32
    return %c0_i32, %c0_i32_0 : i32, i32
  }
  func.func @transform_2(%arg0: i32, %arg1: i32) -> (i32, i32) {
    %c0_i32 = arith.constant 0 : i32
    %c0_i32_0 = arith.constant 0 : i32
    %c0_i32_1 = arith.constant 0 : i32
    return %c0_i32, %c0_i32_0 : i32, i32
  }
  func.func @transform_3(%arg0: i32, %arg1: i32) -> (i32, i32) {
    %c0_i32 = arith.constant 0 : i32
    %c0_i32_0 = arith.constant 0 : i32
    %c0_i32_1 = arith.constant 0 : i32
    return %c0_i32, %c0_i32_0 : i32, i32
  }
  func.func @transform_4(%arg0: i32, %arg1: i32) -> (i32, i32) {
    %c0_i32 = arith.constant 0 : i32
    %c0_i32_0 = arith.constant 0 : i32
    %c0_i32_1 = arith.constant 0 : i32
    return %c0_i32, %c0_i32_0 : i32, i32
  }
  func.func @transform_5(%arg0: i32, %arg1: i32) -> (i32, i32) {
    %c0_i32 = arith.constant 0 : i32
    %c0_i32_0 = arith.constant 0 : i32
    %c0_i32_1 = arith.constant 0 : i32
    return %c0_i32, %c0_i32_0 : i32, i32
  }
  func.func @transform_6(%arg0: i32, %arg1: i32) -> (i32, i32) {
    %c0_i32 = arith.constant 0 : i32
    %c0_i32_0 = arith.constant 0 : i32
    %c0_i32_1 = arith.constant 0 : i32
    return %c0_i32, %c0_i32_0 : i32, i32
  }
  func.func @transform_7(%arg0: i32, %arg1: i32) -> (i32, i32) {
    %c0_i32 = arith.constant 0 : i32
    %c0_i32_0 = arith.constant 0 : i32
    %c0_i32_1 = arith.constant 0 : i32
    return %c0_i32, %c0_i32_0 : i32, i32
  }
  func.func @transform_8(%arg0: i32, %arg1: i32) -> (i32, i32) {
    %c0_i32 = arith.constant 0 : i32
    %c0_i32_0 = arith.constant 0 : i32
    %c0_i32_1 = arith.constant 0 : i32
    return %c0_i32, %c0_i32_0 : i32, i32
  }
  func.func @transform_9(%arg0: i32, %arg1: i32) -> (i32, i32, i32) {
    %c0_i32 = arith.constant 0 : i32
    %c0_i32_0 = arith.constant 0 : i32
    return %arg0, %arg1, %c0_i32 : i32, i32, i32
  }
}

</mosaic_0001>

<llo_original>
// kernel: tpu_custom_call.1
$region0: #{tpu_custom_call.1}
  #allocation0 [shape = 'u32[]', space=smem, size = 0x4, offset = 0x4, fixed_abs, tag = 'smem constant byte address 0x4 - core index']
  #allocation1 [shape = 'u32[144,128]{1,0:T(1,128)}', space=vmem, size = 0x12000, scoped, tag = 'internal scratch']
  #allocation2 [shape = 'bf16[4,8,8]{2,1,0:T(8,128)(2,1)}', space=vmem, size = 0x2000, scoped, tag = 'scratch operand']
  #allocation3 [shape = 'bf16[4,8,8]{2,1,0:T(8,128)(2,1)}', space=vmem, size = 0x2000, scoped, tag = 'scratch operand']
  #allocation4 [shape = 'bf16[4,8,8]{2,1,0:T(8,128)(2,1)}', space=vmem, size = 0x2000, scoped, tag = 'scratch operand']
  #allocation5 [shape = 'bf16[8,32]{1,0:T(8,128)(2,1)}', space=vmem, size = 0x800, scoped, tag = 'scratch operand']
  %s0 = inlined_call_operand.hbm [shape: bf16[2,8,32], index: 0, kind: input, shape index: {}]
  %s1 = inlined_call_operand.hbm [shape: bf16[32,32], index: 1, kind: input, shape index: {}]
  %s2 = inlined_call_operand.vmem [shape: f32[1,32], index: 2, kind: input, shape index: {}]
  %s3 = inlined_call_operand.hbm [shape: bf16[32,32], index: 3, kind: input, shape index: {}]
  %s4 = inlined_call_operand.vmem [shape: f32[1,32], index: 4, kind: input, shape index: {}]
  %s5 = inlined_call_operand.hbm [shape: bf16[32,32], index: 5, kind: input, shape index: {}]
  %s6 = inlined_call_operand.vmem [shape: f32[1,32], index: 6, kind: input, shape index: {}]
  %s7 = inlined_call_operand.hbm [shape: bf16[32,32], index: 7, kind: input, shape index: {}]
  %s8 = inlined_call_operand.vmem [shape: f32[1,32], index: 8, kind: input, shape index: {}]
  %s9 = inlined_call_operand.hbm [shape: f32[2,8,32], index: 9, kind: output, shape index: {}]
  %s10 = sld [smem:[#allocation0]]
  $region93: #{tpu_custom_call.1} parent=0
    _
  %s12 = ssub.s32 1, %s10
  %s13 = scalar_select 0, %s12, %s10
  $region1: #{tpu_custom_call.1} parent=0
    #allocation6 [shape = 'u8[4096]{0}', space=vmem, size = 0x1000, scoped, tag = 'input window, operand 0']
    #allocation7 [shape = 's32[2]{0}', space=sflag, size = 0x8, scoped, tag = 'scoped memory for tpu_custom_call.1']
    #allocation8 [shape = 's32[2]{0}', space=sflag, size = 0x8, scoped, tag = 'scoped memory for tpu_custom_call.1']
    #allocation9 [shape = 'u8[8192]{0}', space=vmem, size = 0x2000, scoped, tag = 'input window, operand 1, single buffered']
    #allocation10 [shape = 's32[1]{0}', space=sflag, size = 0x4, scoped, tag = 'scoped memory for tpu_custom_call.1']
    #allocation11 [shape = 'u8[8192]{0}', space=vmem, size = 0x2000, scoped, tag = 'input window, operand 3, single buffered']
    #allocation12 [shape = 'u8[8192]{0}', space=vmem, size = 0x2000, scoped, tag = 'input window, operand 5, single buffered']
    #allocation13 [shape = 's32[1]{0}', space=sflag, size = 0x4, scoped, tag = 'scoped memory for tpu_custom_call.1']
    #allocation14 [shape = 'u8[8192]{0}', space=vmem, size = 0x2000, scoped, tag = 'input window, operand 7, single buffered']
    #allocation15 [shape = 'u8[8192]{0}', space=vmem, size = 0x2000, scoped, tag = 'output window, operand 0']
    %14 = vsyncpa [#allocation7], 0
    %s15 = scalar_lea.sflag [#allocation7], 1
    %16 = vsyncpa %s15, 0
    %17 = vsyncpa [#allocation10], 0
    %18 = vsyncpa [#allocation13], 0
    %19 = vsyncpa [#allocation8], 0
    %s20 = scalar_lea.sflag [#allocation8], 1
    %21 = vsyncpa %s20, 0
    loop: start=0, step=1, limit=4
    $region2: #{tpu_custom_call.1} parent=1 // loop_pre_header
      _
    $region3: #{tpu_custom_call.1} parent=1 // loop_header
      %s23 = sphi 0, %s27
      %p24 = scmp.ge.s32.totalorder %s23, 4
      %s30 = sphi 0, %s42
      %s31 = sphi 0, %s38
      %s32 = sphi 0, %s30
      %s33 = sphi 0, %s31
      %s34 = sphi 0, %s32
      %s35 = sphi 0, %s33
      %s45 = sphi 0, %s47
      %s48 = sphi 0, %s45
      %s49 = sphi 0, %s48
      %s65 = sphi 0, %s49
      %s69 = sphi 0, %s69
      %s71 = sphi 0, %s69
      %s72 = sphi 0, %s71
      %s86 = sphi 0, %s72
      %s90 = sphi 0, %s90
      %s92 = sphi 0, %s90
      %s93 = sphi 0, %s92
      %s107 = sphi 0, %s93
      %s111 = sphi 0, %s111
      %s113 = sphi 0, %s111
      %s114 = sphi 0, %s113
      %s128 = sphi 0, %s114
      %s132 = sphi 0, %s132
      %s134 = sphi 0, %s132
      %s135 = sphi 0, %s134
      %s149 = sphi 0, %s135
      %s153 = sphi 0, %s153
      %s155 = sphi 0, %s153
      %s156 = sphi 0, %s155
      %s170 = sphi 0, %s156
      %s174 = sphi 0, %s174
      %s176 = sphi 0, %s174
      %s177 = sphi 0, %s176
      %s191 = sphi 0, %s177
      %s195 = sphi 0, %s195
      %s197 = sphi 0, %s195
      %s198 = sphi 0, %s197
      %s212 = sphi 0, %s198
      %s216 = sphi 0, %s216
      %s218 = sphi 0, %s216
      %s219 = sphi 0, %s218
      %s233 = sphi 0, %s219
      %s241 = sphi 0, %s243
      %s244 = sphi 0, %s241
      %s245 = sphi 0, %s244
      %s261 = sphi 0, %s245
    $region4: #{tpu_custom_call.1} parent=1 // loop_header_branch
      %26 = sbr.rel (%p24) target = $region8
    $region5: #{tpu_custom_call.1} parent=1 // loop_body
      %s28 = ssub.s32 %s23, 1
      %s29 = ssub.s32 %s23, 2
      %s36 = sadd.s32 1, %s31
      %p37 = scmp.ge.s32.totalorder %s36, 1
      %s38 = scalar_select %p37, 0, %s36
      %s39 = sadd.s32 1, %s30
      %s40 = scalar_select %p37, %s39, %s30
      %p41 = scmp.ge.s32.totalorder %s40, 2
      %s42 = scalar_select %p41, 0, %s40
      %s43 = ssub.s32 %s30, %s42
      %p44 = scmp.eq.s32.totalorder %s43, 0
      %s46 = sadd.s32 %s45, 1
      %s47 = scalar_select %p44, %s45, %s46
      %p50 = pneg %p44
      %p51 = scmp.eq.s32.totalorder %s23, 1
      %p52 = por %p50, %p51
      %p53 = scmp.ne.s32.totalorder %s45, %s48
      %p54 = scmp.eq.s32.totalorder %s23, 0
      %p55 = por %p53, %p54
      %p56 = scmp.ne.s32.totalorder %s45, %s48
      %p57 = scmp.eq.s32.totalorder %s28, 1
      %p58 = por %p56, %p57
      %p59 = scmp.ne.s32.totalorder %s48, %s49
      %p60 = scmp.eq.s32.totalorder %s28, 0
      %p61 = por %p59, %p60
      %p62 = scmp.ne.s32.totalorder %s48, %s49
      %p63 = scmp.eq.s32.totalorder %s29, 1
      %p64 = por %p62, %p63
      %p66 = scmp.ne.s32.totalorder %s49, %s65
      %p67 = scmp.eq.s32.totalorder %s29, 0
      %p68 = por %p66, %p67
      %s70 = sadd.s32 %s69, 1
      %p73 = scmp.eq.s32.totalorder %s23, 1
      %p74 = scmp.ne.s32.totalorder %s69, %s71
      %p75 = scmp.eq.s32.totalorder %s23, 0
      %p76 = por %p74, %p75
      %p77 = scmp.ne.s32.totalorder %s69, %s71
      %p78 = scmp.eq.s32.totalorder %s28, 1
      %p79 = por %p77, %p78
      %p80 = scmp.ne.s32.totalorder %s71, %s72
      %p81 = scmp.eq.s32.totalorder %s28, 0
      %p82 = por %p80, %p81
      %p83 = scmp.ne.s32.totalorder %s71, %s72
      %p84 = scmp.eq.s32.totalorder %s29, 1
      %p85 = por %p83, %p84
      %p87 = scmp.ne.s32.totalorder %s72, %s86
      %p88 = scmp.eq.s32.totalorder %s29, 0
      %p89 = por %p87, %p88
      %s91 = sadd.s32 %s90, 1
      %p94 = scmp.eq.s32.totalorder %s23, 1
      %p95 = scmp.ne.s32.totalorder %s90, %s92
      %p96 = scmp.eq.s32.totalorder %s23, 0
      %p97 = por %p95, %p96
      %p98 = scmp.ne.s32.totalorder %s90, %s92
      %p99 = scmp.eq.s32.totalorder %s28, 1
      %p100 = por %p98, %p99
      %p101 = scmp.ne.s32.totalorder %s92, %s93
      %p102 = scmp.eq.s32.totalorder %s28, 0
      %p103 = por %p101, %p102
      %p104 = scmp.ne.s32.totalorder %s92, %s93
      %p105 = scmp.eq.s32.totalorder %s29, 1
      %p106 = por %p104, %p105
      %p108 = scmp.ne.s32.totalorder %s93, %s107
      %p109 = scmp.eq.s32.totalorder %s29, 0
      %p110 = por %p108, %p109
      %s112 = sadd.s32 %s111, 1
      %p115 = scmp.eq.s32.totalorder %s23, 1
      %p116 = scmp.ne.s32.totalorder %s111, %s113
      %p117 = scmp.eq.s32.totalorder %s23, 0
      %p118 = por %p116, %p117
      %p119 = scmp.ne.s32.totalorder %s111, %s113
      %p120 = scmp.eq.s32.totalorder %s28, 1
      %p121 = por %p119, %p120
      %p122 = scmp.ne.s32.totalorder %s113, %s114
      %p123 = scmp.eq.s32.totalorder %s28, 0
      %p124 = por %p122, %p123
      %p125 = scmp.ne.s32.totalorder %s113, %s114
      %p126 = scmp.eq.s32.totalorder %s29, 1
      %p127 = por %p125, %p126
      %p129 = scmp.ne.s32.totalorder %s114, %s128
      %p130 = scmp.eq.s32.totalorder %s29, 0
      %p131 = por %p129, %p130
      %s133 = sadd.s32 %s132, 1
      %p136 = scmp.eq.s32.totalorder %s23, 1
      %p137 = scmp.ne.s32.totalorder %s132, %s134
      %p138 = scmp.eq.s32.totalorder %s23, 0
      %p139 = por %p137, %p138
      %p140 = scmp.ne.s32.totalorder %s132, %s134
      %p141 = scmp.eq.s32.totalorder %s28, 1
      %p142 = por %p140, %p141
      %p143 = scmp.ne.s32.totalorder %s134, %s135
      %p144 = scmp.eq.s32.totalorder %s28, 0
      %p145 = por %p143, %p144
      %p146 = scmp.ne.s32.totalorder %s134, %s135
      %p147 = scmp.eq.s32.totalorder %s29, 1
      %p148 = por %p146, %p147
      %p150 = scmp.ne.s32.totalorder %s135, %s149
      %p151 = scmp.eq.s32.totalorder %s29, 0
      %p152 = por %p150, %p151
      %s154 = sadd.s32 %s153, 1
      %p157 = scmp.eq.s32.totalorder %s23, 1
      %p158 = scmp.ne.s32.totalorder %s153, %s155
      %p159 = scmp.eq.s32.totalorder %s23, 0
      %p160 = por %p158, %p159
      %p161 = scmp.ne.s32.totalorder %s153, %s155
      %p162 = scmp.eq.s32.totalorder %s28, 1
      %p163 = por %p161, %p162
      %p164 = scmp.ne.s32.totalorder %s155, %s156
      %p165 = scmp.eq.s32.totalorder %s28, 0
      %p166 = por %p164, %p165
      %p167 = scmp.ne.s32.totalorder %s155, %s156
      %p168 = scmp.eq.s32.totalorder %s29, 1
      %p169 = por %p167, %p168
      %p171 = scmp.ne.s32.totalorder %s156, %s170
      %p172 = scmp.eq.s32.totalorder %s29, 0
      %p173 = por %p171, %p172
      %s175 = sadd.s32 %s174, 1
      %p178 = scmp.eq.s32.totalorder %s23, 1
      %p179 = scmp.ne.s32.totalorder %s174, %s176
      %p180 = scmp.eq.s32.totalorder %s23, 0
      %p181 = por %p179, %p180
      %p182 = scmp.ne.s32.totalorder %s174, %s176
      %p183 = scmp.eq.s32.totalorder %s28, 1
      %p184 = por %p182, %p183
      %p185 = scmp.ne.s32.totalorder %s176, %s177
      %p186 = scmp.eq.s32.totalorder %s28, 0
      %p187 = por %p185, %p186
      %p188 = scmp.ne.s32.totalorder %s176, %s177
      %p189 = scmp.eq.s32.totalorder %s29, 1
      %p190 = por %p188, %p189
      %p192 = scmp.ne.s32.totalorder %s177, %s191
      %p193 = scmp.eq.s32.totalorder %s29, 0
      %p194 = por %p192, %p193
      %s196 = sadd.s32 %s195, 1
      %p199 = scmp.eq.s32.totalorder %s23, 1
      %p200 = scmp.ne.s32.totalorder %s195, %s197
      %p201 = scmp.eq.s32.totalorder %s23, 0
      %p202 = por %p200, %p201
      %p203 = scmp.ne.s32.totalorder %s195, %s197
      %p204 = scmp.eq.s32.totalorder %s28, 1
      %p205 = por %p203, %p204
      %p206 = scmp.ne.s32.totalorder %s197, %s198
      %p207 = scmp.eq.s32.totalorder %s28, 0
      %p208 = por %p206, %p207
      %p209 = scmp.ne.s32.totalorder %s197, %s198
      %p210 = scmp.eq.s32.totalorder %s29, 1
      %p211 = por %p209, %p210
      %p213 = scmp.ne.s32.totalorder %s198, %s212
      %p214 = scmp.eq.s32.totalorder %s29, 0
      %p215 = por %p213, %p214
      %s217 = sadd.s32 %s216, 1
      %p220 = scmp.eq.s32.totalorder %s23, 1
      %p221 = scmp.ne.s32.totalorder %s216, %s218
      %p222 = scmp.eq.s32.totalorder %s23, 0
      %p223 = por %p221, %p222
      %p224 = scmp.ne.s32.totalorder %s216, %s218
      %p225 = scmp.eq.s32.totalorder %s28, 1
      %p226 = por %p224, %p225
      %p227 = scmp.ne.s32.totalorder %s218, %s219
      %p228 = scmp.eq.s32.totalorder %s28, 0
      %p229 = por %p227, %p228
      %p230 = scmp.ne.s32.totalorder %s218, %s219
      %p231 = scmp.eq.s32.totalorder %s29, 1
      %p232 = por %p230, %p231
      %p234 = scmp.ne.s32.totalorder %s219, %s233
      %p235 = scmp.eq.s32.totalorder %s29, 0
      %p236 = por %p234, %p235
      %s237 = ssub.s32 %s30, %s42
      %s238 = ssub.s32 %s31, %s38
      %s239 = sor.u32 %s237, %s238
      %p240 = scmp.eq.s32.totalorder %s239, 0
      %s242 = sadd.s32 %s241, 1
      %s243 = scalar_select %p240, %s241, %s242
      %p246 = pneg %p240
      %p247 = scmp.eq.s32.totalorder %s23, 1
      %p248 = por %p246, %p247
      %p249 = scmp.ne.s32.totalorder %s241, %s244
      %p250 = scmp.eq.s32.totalorder %s23, 0
      %p251 = por %p249, %p250
      %p252 = scmp.ne.s32.totalorder %s241, %s244
      %p253 = scmp.eq.s32.totalorder %s28, 1
      %p254 = por %p252, %p253
      %p255 = scmp.ne.s32.totalorder %s244, %s245
      %p256 = scmp.eq.s32.totalorder %s28, 0
      %p257 = por %p255, %p256
      %p258 = scmp.ne.s32.totalorder %s244, %s245
      %p259 = scmp.eq.s32.totalorder %s29, 1
      %p260 = por %p258, %p259
      %p262 = scmp.ne.s32.totalorder %s245, %s261
      %p263 = scmp.eq.s32.totalorder %s29, 0
      %p264 = por %p262, %p263
      %p265 = scmp.le.s32.totalorder 1, %s23
      %p266 = scmp.lt.s32.totalorder %s23, 3
      %p267 = pnand %p265, %p266
      %p268 = pneg %p267
      // Predicated region
      $region9: #{tpu_custom_call.1} parent=5 // pred_check
        _
      $region10: #{tpu_custom_call.1} parent=5 // pred_check_branch
        %270 = sbr.rel (%p267) target = $region12
      $region11: #{tpu_custom_call.1} parent=5 // pred_region
        %s271 = ssub.s32 %s23, 1
        // Predicated region
        $region13: #{tpu_custom_call.1} parent=11 // pred_check
          %p272 = pneg %p82
        $region14: #{tpu_custom_call.1} parent=11 // pred_check_branch
          %274 = sbr.rel (%p272) target = $region16
        $region15: #{tpu_custom_call.1} parent=11 // pred_region
          %s276 = ssub.s32 256, 256
          %277 = vsyncadd [#allocation10], %s276
          %s278 = sshll.u32 [#allocation9], 4
          %s279 = int_to_ptr.vmem [resolvable:$true] %s278
          %284 = dma.hbm_to_vmem [thread:$0]  %s1, 256, %s279, [#allocation10], 64, 64, 4
        $region16: #{tpu_custom_call.1} parent=11 // pred_fallthru
          _
        // Predicated region
        $region17: #{tpu_custom_call.1} parent=11 // pred_check
          %p285 = pneg %p103
        $region18: #{tpu_custom_call.1} parent=11 // pred_check_branch
          %287 = sbr.rel (%p285) target = $region20
        $region19: #{tpu_custom_call.1} parent=11 // pred_region
          _
        $region20: #{tpu_custom_call.1} parent=11 // pred_fallthru
          _
        // Predicated region
        $region21: #{tpu_custom_call.1} parent=11 // pred_check
          %p288 = pneg %p124
        $region22: #{tpu_custom_call.1} parent=11 // pred_check_branch
          %290 = sbr.rel (%p288) target = $region24
        $region23: #{tpu_custom_call.1} parent=11 // pred_region
          %s292 = ssub.s32 256, 256
          %293 = vsyncadd [#allocation10], %s292
          %s294 = sshll.u32 [#allocation11], 4
          %s295 = int_to_ptr.vmem [resolvable:$true] %s294
          %300 = dma.hbm_to_vmem [thread:$0]  %s3, 256, %s295, [#allocation10], 64, 64, 4
        $region24: #{tpu_custom_call.1} parent=11 // pred_fallthru
          _
        // Predicated region
        $region25: #{tpu_custom_call.1} parent=11 // pred_check
          %p301 = pneg %p145
        $region26: #{tpu_custom_call.1} parent=11 // pred_check_branch
          %303 = sbr.rel (%p301) target = $region28
        $region27: #{tpu_custom_call.1} parent=11 // pred_region
          _
        $region28: #{tpu_custom_call.1} parent=11 // pred_fallthru
          _
        // Predicated region
        $region29: #{tpu_custom_call.1} parent=11 // pred_check
          %p304 = pneg %p166
        $region30: #{tpu_custom_call.1} parent=11 // pred_check_branch
          %306 = sbr.rel (%p304) target = $region32
        $region31: #{tpu_custom_call.1} parent=11 // pred_region
          %s308 = ssub.s32 256, 256
          %309 = vsyncadd [#allocation13], %s308
          %s310 = sshll.u32 [#allocation12], 4
          %s311 = int_to_ptr.vmem [resolvable:$true] %s310
          %316 = dma.hbm_to_vmem [thread:$0]  %s5, 256, %s311, [#allocation13], 64, 64, 4
        $region32: #{tpu_custom_call.1} parent=11 // pred_fallthru
          _
        // Predicated region
        $region33: #{tpu_custom_call.1} parent=11 // pred_check
          %p317 = pneg %p187
        $region34: #{tpu_custom_call.1} parent=11 // pred_check_branch
          %319 = sbr.rel (%p317) target = $region36
        $region35: #{tpu_custom_call.1} parent=11 // pred_region
          _
        $region36: #{tpu_custom_call.1} parent=11 // pred_fallthru
          _
        // Predicated region
        $region37: #{tpu_custom_call.1} parent=11 // pred_check
          %p320 = pneg %p208
        $region38: #{tpu_custom_call.1} parent=11 // pred_check_branch
          %322 = sbr.rel (%p320) target = $region40
        $region39: #{tpu_custom_call.1} parent=11 // pred_region
          %s324 = ssub.s32 256, 256
          %325 = vsyncadd [#allocation13], %s324
          %s326 = sshll.u32 [#allocation14], 4
          %s327 = int_to_ptr.vmem [resolvable:$true] %s326
          %332 = dma.hbm_to_vmem [thread:$0]  %s7, 256, %s327, [#allocation13], 64, 64, 4
        $region40: #{tpu_custom_call.1} parent=11 // pred_fallthru
          _
        // Predicated region
        $region41: #{tpu_custom_call.1} parent=11 // pred_check
          %p333 = pneg %p229
        $region42: #{tpu_custom_call.1} parent=11 // pred_check_branch
          %335 = sbr.rel (%p333) target = $region44
        $region43: #{tpu_custom_call.1} parent=11 // pred_region
          _
        $region44: #{tpu_custom_call.1} parent=11 // pred_fallthru
          _
      $region12: #{tpu_custom_call.1} parent=5 // pred_fallthru
        _
      %p336 = scmp.lt.s32.totalorder %s23, 2
      // Predicated region
      $region45: #{tpu_custom_call.1} parent=5 // pred_check
        %p337 = pneg %p336
      $region46: #{tpu_custom_call.1} parent=5 // pred_check_branch
        %339 = sbr.rel (%p337) target = $region48
      $region47: #{tpu_custom_call.1} parent=5 // pred_region
        // Predicated region
        $region49: #{tpu_custom_call.1} parent=47 // pred_check
          %p340 = pneg %p55
        $region50: #{tpu_custom_call.1} parent=47 // pred_check_branch
          %342 = sbr.rel (%p340) target = $region52
        $region51: #{tpu_custom_call.1} parent=47 // pred_region
          %s343 = sand.u32 %s45, 1
          %s344 = scalar_lea.sflag [#allocation7], %s343
          %s345 = sand.u32 %s45, 1
          %s346 = smul.addr %s345, 4
          %s347 = scalar_lea.vmem [#allocation6], %s346
          %s349 = ssub.s32 64, 64
          %350 = vsyncadd %s344, %s349
          %s351 = smul.addr %s30, 64
          %s352 = scalar_lea.hbm %s0, %s351
          %s354 = sshll.u32 %s347, 4
          %s355 = int_to_ptr.vmem [resolvable:$true] %s354
          %357 = dma.hbm_to_vmem [thread:$0]  %s352, 64, %s355, %s344
        $region52: #{tpu_custom_call.1} parent=47 // pred_fallthru
          _
      $region48: #{tpu_custom_call.1} parent=5 // pred_fallthru
        _
      %p358 = scmp.le.s32.totalorder 1, %s23
      %p359 = scmp.lt.s32.totalorder %s23, 3
      %p360 = pnand %p358, %p359
      %p361 = pneg %p360
      // Predicated region
      $region53: #{tpu_custom_call.1} parent=5 // pred_check
        _
      $region54: #{tpu_custom_call.1} parent=5 // pred_check_branch
        %363 = sbr.rel (%p360) target = $region56
      $region55: #{tpu_custom_call.1} parent=5 // pred_region
        %s364 = ssub.s32 %s23, 1
        %s365 = sand.u32 %s48, 1
        %s366 = scalar_lea.sflag [#allocation7], %s365
        %s367 = sand.u32 %s48, 1
        %s368 = smul.addr %s367, 4
        %s369 = scalar_lea.vmem [#allocation6], %s368
        // Predicated region
        $region57: #{tpu_custom_call.1} parent=55 // pred_check
          %p370 = pneg %p61
        $region58: #{tpu_custom_call.1} parent=55 // pred_check_branch
          %372 = sbr.rel (%p370) target = $region60
        $region59: #{tpu_custom_call.1} parent=55 // pred_region
          %373 = dma.done %s366, 64
        $region60: #{tpu_custom_call.1} parent=55 // pred_fallthru
          _
        // Predicated region
        $region61: #{tpu_custom_call.1} parent=55 // pred_check
          %p374 = pneg %p82
        $region62: #{tpu_custom_call.1} parent=55 // pred_check_branch
          %376 = sbr.rel (%p374) target = $region64
        $region63: #{tpu_custom_call.1} parent=55 // pred_region
          %377 = dma.done [#allocation10], 256
        $region64: #{tpu_custom_call.1} parent=55 // pred_fallthru
          _
        // Predicated region
        $region65: #{tpu_custom_call.1} parent=55 // pred_check
          %p378 = pneg %p124
        $region66: #{tpu_custom_call.1} parent=55 // pred_check_branch
          %380 = sbr.rel (%p378) target = $region68
        $region67: #{tpu_custom_call.1} parent=55 // pred_region
          %381 = dma.done [#allocation10], 256
        $region68: #{tpu_custom_call.1} parent=55 // pred_fallthru
          _
        // Predicated region
        $region69: #{tpu_custom_call.1} parent=55 // pred_check
          %p382 = pneg %p166
        $region70: #{tpu_custom_call.1} parent=55 // pred_check_branch
          %384 = sbr.rel (%p382) target = $region72
        $region71: #{tpu_custom_call.1} parent=55 // pred_region
          %385 = dma.done [#allocation13], 256
        $region72: #{tpu_custom_call.1} parent=55 // pred_fallthru
          _
        // Predicated region
        $region73: #{tpu_custom_call.1} parent=55 // pred_check
          %p386 = pneg %p208
        $region74: #{tpu_custom_call.1} parent=55 // pred_check_branch
          %388 = sbr.rel (%p386) target = $region76
        $region75: #{tpu_custom_call.1} parent=55 // pred_region
          %389 = dma.done [#allocation13], 256
        $region76: #{tpu_custom_call.1} parent=55 // pred_fallthru
          _
        %s390 = sand.u32 %s48, 1
        %s391 = scalar_lea.sflag [#allocation7], %s390
        %s392 = sand.u32 %s48, 1
        %s393 = smul.addr %s392, 4
        %s394 = scalar_lea.vmem [#allocation6], %s393
        %p395 = pneg %p61
        %p396 = pneg %p58
        %p397 = pneg %p82
        %p398 = pneg %p79
        %p399 = pneg %p103
        %p400 = pneg %p100
        %p401 = pneg %p124
        %p402 = pneg %p121
        %p403 = pneg %p145
        %p404 = pneg %p142
        %p405 = pneg %p166
        %p406 = pneg %p163
        %p407 = pneg %p187
        %p408 = pneg %p184
        %p409 = pneg %p208
        %p410 = pneg %p205
        %p411 = pneg %p229
        %p412 = pneg %p226
        %p413 = pneg %p257
        %p414 = pneg %p254
        %s415 = sand.u32 %s244, 1
        %s416 = scalar_lea.sflag [#allocation8], %s415
        %s417 = sand.u32 %s244, 1
        %s418 = smul.addr %s417, 8
        %s419 = scalar_lea.vmem [#allocation15], %s418
        %p421 = scmp.eq.s32.totalorder %s33, 0
        // Predicated region
        $region77: #{tpu_custom_call.1} parent=55 // pred_check
          %p422 = pneg %p421
        $region78: #{tpu_custom_call.1} parent=55 // pred_check_branch
          %424 = sbr.rel (%p422) target = $region80
        $region79: #{tpu_custom_call.1} parent=55 // pred_region
          %v425 = vld [vmem:[%s369] sm:$0xf]
          %v426 = vld [vmem:[#allocation11] sm:$0xf]
          %v427 = vld [vmem:[#allocation11 + $0x4] sm:$0xf]
          %v428 = vld [vmem:[#allocation11 + $0x8] sm:$0xf]
          %v429 = vld [vmem:[#allocation11 + $0xc] sm:$0xf]
          %v430 = vld [vmem:[%s4] sm:$0x1]
          %v432 = vlaneseq
          %v433 = vshrl.u32 %v432, 7
          %v434 = vsub.s32 0, %v433
          %v435 = vrot.slane %v430, %v434
          %v441 = vunpack.c.l.b16 %v426
          %v442 = vunpack.c.l.b16 %v427
          %v443 = vunpack.c.l.b16 %v428
          %v444 = vunpack.c.l.b16 %v429
          %v445 = vpack.c.b16 %v442, %v441
          %v446 = vpack.c.b16 %v444, %v443
          %vm449 = vcmask 261120
          %v451 = vsel %vm449, %v425, 0
          %453 = vmatprep.subr.bf16.mxu0 0
          %454 = vmatpush1.bf16.msra.mxu0 0
          %455 = vmatprep.subr.bf16.mxu0 0
          %456 = vmatpush1.bf16.msra.mxu0 0
          %457 = vmatprep.subr.bf16.mxu0 0
          %458 = vmatpush1.bf16.msra.mxu0 0
          %459 = vmatprep.subr.bf16.mxu0 0
          %460 = vmatpush1.bf16.msra.mxu0 0
          %461 = vmatprep.subr.bf16.mxu0 0
          %462 = vmatpush1.bf16.msra.mxu0 0
          %463 = vmatprep.subr.bf16.mxu0 0
          %464 = vmatpush1.bf16.msra.mxu0 0
          %465 = vmatprep.subr.bf16.mxu0 0
          %466 = vmatpush1.bf16.msra.mxu0 %v446
          %467 = vmatprep.subr.bf16.mxu0 0
          %468 = vmatpush1.bf16.msra.mxu0 %v445
          %469 = vmatprep.subr.bf16.mxu0 0
          %470 = vmatpush2.bf16.msra.mxu0 0
          %471 = vmatprep.subr.bf16.mxu0 0
          %472 = vmatpush2.bf16.msra.mxu0 0
          %473 = vmatprep.subr.bf16.mxu0 0
          %474 = vmatpush2.bf16.msra.mxu0 0
          %475 = vmatprep.subr.bf16.mxu0 0
          %476 = vmatpush2.bf16.msra.mxu0 0
          %477 = vmatprep.subr.bf16.mxu0 0
          %478 = vmatpush2.bf16.msra.mxu0 0
          %479 = vmatprep.subr.bf16.mxu0 0
          %480 = vmatpush2.bf16.msra.mxu0 0
          %481 = vmatprep.subr.bf16.mxu0 0
          %482 = vmatpush2.bf16.msra.mxu0 0
          %483 = vmatprep.subr.bf16.mxu0 0
          %484 = vmatpush2.bf16.msra.mxu0 0
          %485 = vmatprep.mubr.bf16.mxu0 0
          %486 = vmatmul.mubr.bf16.gmra.mxu0 %v451
          %v487 = vpop.f32.mrf.mxu0
          %v488 = vadd.f32 %v435, %v487
          %v489 = vpop.f32.mrf.mxu0
          %v490 = vpop.f32.mrf.mxu0
          %v491 = vpop.f32.mrf.mxu0
          %492 = vdwg.mxu0
          %v493 = vld [vmem:[#allocation12] sm:$0xf]
          %v494 = vld [vmem:[#allocation12 + $0x4] sm:$0xf]
          %v495 = vld [vmem:[#allocation12 + $0x8] sm:$0xf]
          %v496 = vld [vmem:[#allocation12 + $0xc] sm:$0xf]
          %v497 = vld [vmem:[%s6] sm:$0x1]
          %v499 = vlaneseq
          %v500 = vshrl.u32 %v499, 7
          %v501 = vsub.s32 0, %v500
          %v502 = vrot.slane %v497, %v501
          %v508 = vunpack.c.l.b16 %v493
          %v509 = vunpack.c.l.b16 %v494
          %v510 = vunpack.c.l.b16 %v495
          %v511 = vunpack.c.l.b16 %v496
          %v512 = vpack.c.b16 %v509, %v508
          %v513 = vpack.c.b16 %v511, %v510
          %516 = vmatprep.subr.bf16.mxu0 0
          %517 = vmatpush1.bf16.msra.mxu0 0
          %518 = vmatprep.subr.bf16.mxu0 0
          %519 = vmatpush1.bf16.msra.mxu0 0
          %520 = vmatprep.subr.bf16.mxu0 0
          %521 = vmatpush1.bf16.msra.mxu0 0
          %522 = vmatprep.subr.bf16.mxu0 0
          %523 = vmatpush1.bf16.msra.mxu0 0
          %524 = vmatprep.subr.bf16.mxu0 0
          %525 = vmatpush1.bf16.msra.mxu0 0
          %526 = vmatprep.subr.bf16.mxu0 0
          %527 = vmatpush1.bf16.msra.mxu0 0
          %528 = vmatprep.subr.bf16.mxu0 0
          %529 = vmatpush1.bf16.msra.mxu0 %v513
          %530 = vmatprep.subr.bf16.mxu0 0
          %531 = vmatpush1.bf16.msra.mxu0 %v512
          %532 = vmatprep.subr.bf16.mxu0 0
          %533 = vmatpush2.bf16.msra.mxu0 0
          %534 = vmatprep.subr.bf16.mxu0 0
          %535 = vmatpush2.bf16.msra.mxu0 0
          %536 = vmatprep.subr.bf16.mxu0 0
          %537 = vmatpush2.bf16.msra.mxu0 0
          %538 = vmatprep.subr.bf16.mxu0 0
          %539 = vmatpush2.bf16.msra.mxu0 0
          %540 = vmatprep.subr.bf16.mxu0 0
          %541 = vmatpush2.bf16.msra.mxu0 0
          %542 = vmatprep.subr.bf16.mxu0 0
          %543 = vmatpush2.bf16.msra.mxu0 0
          %544 = vmatprep.subr.bf16.mxu0 0
          %545 = vmatpush2.bf16.msra.mxu0 0
          %546 = vmatprep.subr.bf16.mxu0 0
          %547 = vmatpush2.bf16.msra.mxu0 0
          %548 = vmatprep.mubr.bf16.mxu0 0
          %549 = vmatmul.mubr.bf16.gmra.mxu0 %v451
          %v550 = vpop.f32.mrf.mxu0
          %v551 = vadd.f32 %v502, %v550
          %v552 = vpop.f32.mrf.mxu0
          %v553 = vpop.f32.mrf.mxu0
          %v554 = vpop.f32.mrf.mxu0
          %555 = vdwg.mxu0
          %556 = vxpose.xlu0.b32.start [1/16] %v488, 128
          %557 = vxpose.xlu0.b32.cont [2/16] 0.0, 128
          %558 = vxpose.xlu0.b32.cont [3/16] 0.0, 128
          %559 = vxpose.xlu0.b32.cont [4/16] 0.0, 128
          %560 = vxpose.xlu0.b32.cont [5/16] 0.0, 128
          %561 = vxpose.xlu0.b32.cont [6/16] 0.0, 128
          %562 = vxpose.xlu0.b32.cont [7/16] 0.0, 128
          %563 = vxpose.xlu0.b32.cont [8/16] 0.0, 128
          %564 = vxpose.xlu0.b32.cont [9/16] 0.0, 128
          %565 = vxpose.xlu0.b32.cont [10/16] 0.0, 128
          %566 = vxpose.xlu0.b32.cont [11/16] 0.0, 128
          %567 = vxpose.xlu0.b32.cont [12/16] 0.0, 128
          %568 = vxpose.xlu0.b32.cont [13/16] 0.0, 128
          %569 = vxpose.xlu0.b32.cont [14/16] 0.0, 128
          %570 = vxpose.xlu0.b32.cont [15/16] 0.0, 128
          %571 = vxpose.xlu0.b32.end [16/16] 0.0, 128
          %v572 = vpop.trf.xlu0
          %v573 = vpop.trf.xlu0
          %v574 = vpop.trf.xlu0
          %v575 = vpop.trf.xlu0
          %v576 = vpop.trf.xlu0
          %v577 = vpop.trf.xlu0
          %v578 = vpop.trf.xlu0
          %v579 = vpop.trf.xlu0
          %v580 = vpop.trf.xlu0
          %v581 = vpop.trf.xlu0
          %v582 = vpop.trf.xlu0
          %v583 = vpop.trf.xlu0
          %v584 = vpop.trf.xlu0
          %v585 = vpop.trf.xlu0
          %v586 = vpop.trf.xlu0
          %v587 = vpop.trf.xlu0
          %v588 = vpack.c.bf16 %v572, %v572
          %vm589 = vcmask 60416
          %590 = vst.msk [vmem:[#allocation3] sm:$0xf] %vm589, %v588
          %v591 = vpack.c.bf16 %v551, %v551
          %592 = vst.msk [vmem:[#allocation4] sm:$0xf] %vm589, %v591
          %594 = vrot.lane.b32.xlu0 %v488, 120
          %v595 = vpop.permute.xlu0 %594
          %597 = vxpose.xlu0.b32.start [1/16] %v595, 128
          %598 = vxpose.xlu0.b32.cont [2/16] 0.0, 128
          %599 = vxpose.xlu0.b32.cont [3/16] 0.0, 128
          %600 = vxpose.xlu0.b32.cont [4/16] 0.0, 128
          %601 = vxpose.xlu0.b32.cont [5/16] 0.0, 128
          %602 = vxpose.xlu0.b32.cont [6/16] 0.0, 128
          %603 = vxpose.xlu0.b32.cont [7/16] 0.0, 128
          %604 = vxpose.xlu0.b32.cont [8/16] 0.0, 128
          %605 = vxpose.xlu0.b32.cont [9/16] 0.0, 128
          %606 = vxpose.xlu0.b32.cont [10/16] 0.0, 128
          %607 = vxpose.xlu0.b32.cont [11/16] 0.0, 128
          %608 = vxpose.xlu0.b32.cont [12/16] 0.0, 128
          %609 = vxpose.xlu0.b32.cont [13/16] 0.0, 128
          %610 = vxpose.xlu0.b32.cont [14/16] 0.0, 128
          %611 = vxpose.xlu0.b32.cont [15/16] 0.0, 128
          %612 = vxpose.xlu0.b32.end [16/16] 0.0, 128
          %v613 = vpop.trf.xlu0
          %v614 = vpop.trf.xlu0
          %v615 = vpop.trf.xlu0
          %v616 = vpop.trf.xlu0
          %v617 = vpop.trf.xlu0
          %v618 = vpop.trf.xlu0
          %v619 = vpop.trf.xlu0
          %v620 = vpop.trf.xlu0
          %v621 = vpop.trf.xlu0
          %v622 = vpop.trf.xlu0
          %v623 = vpop.trf.xlu0
          %v624 = vpop.trf.xlu0
          %v625 = vpop.trf.xlu0
          %v626 = vpop.trf.xlu0
          %v627 = vpop.trf.xlu0
          %v628 = vpop.trf.xlu0
          %v629 = vpack.c.bf16 %v613, %v613
          %s630 = scalar_lea.vmem [#allocation3], 4
          %631 = vst.msk [vmem:[%s630] sm:$0xf] %vm589, %v629
          %v633 = vunpack.c.l.b16 %v591
          %v634 = vpack.c.b16 %v633, %v633
          %635 = vrot.lane.b32.xlu0 %v634, 120
          %v636 = vpop.permute.xlu0 %635
          %s638 = scalar_lea.vmem [#allocation4], 4
          %639 = vst.msk [vmem:[%s638] sm:$0xf] %vm589, %v636
          %640 = vrot.lane.b32.xlu0 %v488, 112
          %v641 = vpop.permute.xlu0 %640
          %643 = vxpose.xlu0.b32.start [1/16] %v641, 128
          %644 = vxpose.xlu0.b32.cont [2/16] 0.0, 128
          %645 = vxpose.xlu0.b32.cont [3/16] 0.0, 128
          %646 = vxpose.xlu0.b32.cont [4/16] 0.0, 128
          %647 = vxpose.xlu0.b32.cont [5/16] 0.0, 128
          %648 = vxpose.xlu0.b32.cont [6/16] 0.0, 128
          %649 = vxpose.xlu0.b32.cont [7/16] 0.0, 128
          %650 = vxpose.xlu0.b32.cont [8/16] 0.0, 128
          %651 = vxpose.xlu0.b32.cont [9/16] 0.0, 128
          %652 = vxpose.xlu0.b32.cont [10/16] 0.0, 128
          %653 = vxpose.xlu0.b32.cont [11/16] 0.0, 128
          %654 = vxpose.xlu0.b32.cont [12/16] 0.0, 128
          %655 = vxpose.xlu0.b32.cont [13/16] 0.0, 128
          %656 = vxpose.xlu0.b32.cont [14/16] 0.0, 128
          %657 = vxpose.xlu0.b32.cont [15/16] 0.0, 128
          %658 = vxpose.xlu0.b32.end [16/16] 0.0, 128
          %v659 = vpop.trf.xlu0
          %v660 = vpop.trf.xlu0
          %v661 = vpop.trf.xlu0
          %v662 = vpop.trf.xlu0
          %v663 = vpop.trf.xlu0
          %v664 = vpop.trf.xlu0
          %v665 = vpop.trf.xlu0
          %v666 = vpop.trf.xlu0
          %v667 = vpop.trf.xlu0
          %v668 = vpop.trf.xlu0
          %v669 = vpop.trf.xlu0
          %v670 = vpop.trf.xlu0
          %v671 = vpop.trf.xlu0
          %v672 = vpop.trf.xlu0
          %v673 = vpop.trf.xlu0
          %v674 = vpop.trf.xlu0
          %v675 = vpack.c.bf16 %v659, %v659
          %s676 = scalar_lea.vmem [#allocation3], 8
          %677 = vst.msk [vmem:[%s676] sm:$0xf] %vm589, %v675
          %678 = vrot.lane.b32.xlu0 %v634, 112
          %v679 = vpop.permute.xlu0 %678
          %s681 = scalar_lea.vmem [#allocation4], 8
          %682 = vst.msk [vmem:[%s681] sm:$0xf] %vm589, %v679
          %683 = vrot.lane.b32.xlu0 %v488, 104
          %v684 = vpop.permute.xlu0 %683
          %686 = vxpose.xlu0.b32.start [1/16] %v684, 128
          %687 = vxpose.xlu0.b32.cont [2/16] 0.0, 128
          %688 = vxpose.xlu0.b32.cont [3/16] 0.0, 128
          %689 = vxpose.xlu0.b32.cont [4/16] 0.0, 128
          %690 = vxpose.xlu0.b32.cont [5/16] 0.0, 128
          %691 = vxpose.xlu0.b32.cont [6/16] 0.0, 128
          %692 = vxpose.xlu0.b32.cont [7/16] 0.0, 128
          %693 = vxpose.xlu0.b32.cont [8/16] 0.0, 128
          %694 = vxpose.xlu0.b32.cont [9/16] 0.0, 128
          %695 = vxpose.xlu0.b32.cont [10/16] 0.0, 128
          %696 = vxpose.xlu0.b32.cont [11/16] 0.0, 128
          %697 = vxpose.xlu0.b32.cont [12/16] 0.0, 128
          %698 = vxpose.xlu0.b32.cont [13/16] 0.0, 128
          %699 = vxpose.xlu0.b32.cont [14/16] 0.0, 128
          %700 = vxpose.xlu0.b32.cont [15/16] 0.0, 128
          %701 = vxpose.xlu0.b32.end [16/16] 0.0, 128
          %v702 = vpop.trf.xlu0
          %v703 = vpop.trf.xlu0
          %v704 = vpop.trf.xlu0
          %v705 = vpop.trf.xlu0
          %v706 = vpop.trf.xlu0
          %v707 = vpop.trf.xlu0
          %v708 = vpop.trf.xlu0
          %v709 = vpop.trf.xlu0
          %v710 = vpop.trf.xlu0
          %v711 = vpop.trf.xlu0
          %v712 = vpop.trf.xlu0
          %v713 = vpop.trf.xlu0
          %v714 = vpop.trf.xlu0
          %v715 = vpop.trf.xlu0
          %v716 = vpop.trf.xlu0
          %v717 = vpop.trf.xlu0
          %v718 = vpack.c.bf16 %v702, %v702
          %s719 = scalar_lea.vmem [#allocation3], 12
          %720 = vst.msk [vmem:[%s719] sm:$0xf] %vm589, %v718
          %721 = vrot.lane.b32.xlu0 %v634, 104
          %v722 = vpop.permute.xlu0 %721
          %s724 = scalar_lea.vmem [#allocation4], 12
          %725 = vst.msk [vmem:[%s724] sm:$0xf] %vm589, %v722
        $region80: #{tpu_custom_call.1} parent=55 // pred_fallthru
          _
        %s726 = smul.u32 %s33, 8
        %s727 = sshra.s32 %s726, 3
        %s728 = sand.u32 %s726, 7
        %s729 = smul.addr %s727, 4
        %s730 = scalar_lea.vmem %s369, %s729 [#allocation6]
        %v731 = vld [vmem:[%s730] sm:$0xf]
        %v732 = vld [vmem:[#allocation9] sm:$0xf]
        %v733 = vld [vmem:[#allocation9 + $0x4] sm:$0xf]
        %v734 = vld [vmem:[#allocation9 + $0x8] sm:$0xf]
        %v735 = vld [vmem:[#allocation9 + $0xc] sm:$0xf]
        %v736 = vld [vmem:[%s2] sm:$0x1]
        %v738 = vlaneseq
        %v739 = vshrl.u32 %v738, 7
        %v740 = vsub.s32 0, %v739
        %v741 = vrot.slane %v736, %v740
        %v747 = vunpack.c.l.b16 %v732
        %v748 = vunpack.c.l.b16 %v733
        %v749 = vunpack.c.l.b16 %v734
        %v750 = vunpack.c.l.b16 %v735
        %v751 = vpack.c.b16 %v748, %v747
        %v752 = vpack.c.b16 %v750, %v749
        %vm755 = vcmask 261120
        %v757 = vsel %vm755, %v731, 0
        %759 = vmatprep.subr.bf16.mxu0 0
        %760 = vmatpush1.bf16.msra.mxu0 0
        %761 = vmatprep.subr.bf16.mxu0 0
        %762 = vmatpush1.bf16.msra.mxu0 0
        %763 = vmatprep.subr.bf16.mxu0 0
        %764 = vmatpush1.bf16.msra.mxu0 0
        %765 = vmatprep.subr.bf16.mxu0 0
        %766 = vmatpush1.bf16.msra.mxu0 0
        %767 = vmatprep.subr.bf16.mxu0 0
        %768 = vmatpush1.bf16.msra.mxu0 0
        %769 = vmatprep.subr.bf16.mxu0 0
        %770 = vmatpush1.bf16.msra.mxu0 0
        %771 = vmatprep.subr.bf16.mxu0 0
        %772 = vmatpush1.bf16.msra.mxu0 %v752
        %773 = vmatprep.subr.bf16.mxu0 0
        %774 = vmatpush1.bf16.msra.mxu0 %v751
        %775 = vmatprep.subr.bf16.mxu0 0
        %776 = vmatpush2.bf16.msra.mxu0 0
        %777 = vmatprep.subr.bf16.mxu0 0
        %778 = vmatpush2.bf16.msra.mxu0 0
        %779 = vmatprep.subr.bf16.mxu0 0
        %780 = vmatpush2.bf16.msra.mxu0 0
        %781 = vmatprep.subr.bf16.mxu0 0
        %782 = vmatpush2.bf16.msra.mxu0 0
        %783 = vmatprep.subr.bf16.mxu0 0
        %784 = vmatpush2.bf16.msra.mxu0 0
        %785 = vmatprep.subr.bf16.mxu0 0
        %786 = vmatpush2.bf16.msra.mxu0 0
        %787 = vmatprep.subr.bf16.mxu0 0
        %788 = vmatpush2.bf16.msra.mxu0 0
        %789 = vmatprep.subr.bf16.mxu0 0
        %790 = vmatpush2.bf16.msra.mxu0 0
        %791 = vmatprep.mubr.bf16.mxu0 0
        %792 = vmatmul.mubr.bf16.gmra.mxu0 %v757
        %v793 = vpop.f32.mrf.mxu0
        %v794 = vadd.f32 %v741, %v793
        %v795 = vpop.f32.mrf.mxu0
        %v796 = vpop.f32.mrf.mxu0
        %v797 = vpop.f32.mrf.mxu0
        %798 = vdwg.mxu0
        %v799 = vmul.f32 %v794, 0.35355338
        %v800 = vpack.c.bf16 %v799, %v799
        %vm801 = vcmask 60416
        %802 = vst.msk [vmem:[#allocation2] sm:$0xf] %vm801, %v800
        %v804 = vunpack.c.l.b16 %v800
        %v805 = vpack.c.b16 %v804, %v804
        %806 = vrot.lane.b32.xlu0 %v805, 120
        %v807 = vpop.permute.xlu0 %806
        %s809 = scalar_lea.vmem [#allocation2], 4
        %810 = vst.msk [vmem:[%s809] sm:$0xf] %vm801, %v807
        %811 = vrot.lane.b32.xlu0 %v805, 112
        %v812 = vpop.permute.xlu0 %811
        %s814 = scalar_lea.vmem [#allocation2], 8
        %815 = vst.msk [vmem:[%s814] sm:$0xf] %vm801, %v812
        %816 = vrot.lane.b32.xlu0 %v805, 104
        %v817 = vpop.permute.xlu0 %816
        %s819 = scalar_lea.vmem [#allocation2], 12
        %820 = vst.msk [vmem:[%s819] sm:$0xf] %vm801, %v817
        %v821 = vld [vmem:[#allocation2] sm:$0xf]
        %v822 = vld [vmem:[#allocation2 + $0x4] sm:$0xf]
        %v823 = vld [vmem:[#allocation2 + $0x8] sm:$0xf]
        %v824 = vld [vmem:[#allocation2 + $0xc] sm:$0xf]
        %v825 = vld [vmem:[#allocation3] sm:$0xf]
        %v826 = vld [vmem:[#allocation3 + $0x4] sm:$0xf]
        %v827 = vld [vmem:[#allocation3 + $0x8] sm:$0xf]
        %v828 = vld [vmem:[#allocation3 + $0xc] sm:$0xf]
        %v829 = vld [vmem:[#allocation4] sm:$0xf]
        %v830 = vld [vmem:[#allocation4 + $0x4] sm:$0xf]
        %v831 = vld [vmem:[#allocation4 + $0x8] sm:$0xf]
        %v832 = vld [vmem:[#allocation4 + $0xc] sm:$0xf]
        %vm833 = vcmask 64512
        %v835 = vsel %vm833, %v821, 0
        %vm837 = vcmask 1043456
        %v839 = vsel %vm837, %v825, 0
        %841 = vmatprep.subr.bf16.mxu0 0
        %842 = vmatpush1.bf16.msra.mxu0 0
        %843 = vmatprep.subr.bf16.mxu0 0
        %844 = vmatpush1.bf16.msra.mxu0 0
        %845 = vmatprep.subr.bf16.mxu0 0
        %846 = vmatpush1.bf16.msra.mxu0 0
        %847 = vmatprep.subr.bf16.mxu0 0
        %848 = vmatpush1.bf16.msra.mxu0 0
        %849 = vmatprep.subr.bf16.mxu0 0
        %850 = vmatpush1.bf16.msra.mxu0 0
        %851 = vmatprep.subr.bf16.mxu0 0
        %852 = vmatpush1.bf16.msra.mxu0 0
        %853 = vmatprep.subr.bf16.mxu0 0
        %854 = vmatpush1.bf16.msra.mxu0 0
        %855 = vmatprep.subr.bf16.mxu0 0
        %856 = vmatpush1.bf16.msra.mxu0 %v839
        %857 = vmatprep.subr.bf16.mxu0 0
        %858 = vmatpush2.bf16.msra.mxu0 0
        %859 = vmatprep.subr.bf16.mxu0 0
        %860 = vmatpush2.bf16.msra.mxu0 0
        %861 = vmatprep.subr.bf16.mxu0 0
        %862 = vmatpush2.bf16.msra.mxu0 0
        %863 = vmatprep.subr.bf16.mxu0 0
        %864 = vmatpush2.bf16.msra.mxu0 0
        %865 = vmatprep.subr.bf16.mxu0 0
        %866 = vmatpush2.bf16.msra.mxu0 0
        %867 = vmatprep.subr.bf16.mxu0 0
        %868 = vmatpush2.bf16.msra.mxu0 0
        %869 = vmatprep.subr.bf16.mxu0 0
        %870 = vmatpush2.bf16.msra.mxu0 0
        %871 = vmatprep.subr.bf16.mxu0 0
        %872 = vmatpush2.bf16.msra.mxu0 0
        %873 = vmatprep.mubr.bf16.mxu0 0
        %874 = vmatmul.mubr.bf16.gmra.mxu0 %v835
        %v875 = vpop.f32.mrf.mxu0
        %v876 = vadd.f32 0.0, %v875
        %v877 = vpop.f32.mrf.mxu0
        %v878 = vpop.f32.mrf.mxu0
        %v879 = vpop.f32.mrf.mxu0
        %880 = vdwg.mxu0
        %v882 = vsel %vm833, %v822, 0
        %v885 = vsel %vm837, %v826, 0
        %887 = vmatprep.subr.bf16.mxu0 0
        %888 = vmatpush1.bf16.msra.mxu0 0
        %889 = vmatprep.subr.bf16.mxu0 0
        %890 = vmatpush1.bf16.msra.mxu0 0
        %891 = vmatprep.subr.bf16.mxu0 0
        %892 = vmatpush1.bf16.msra.mxu0 0
        %893 = vmatprep.subr.bf16.mxu0 0
        %894 = vmatpush1.bf16.msra.mxu0 0
        %895 = vmatprep.subr.bf16.mxu0 0
        %896 = vmatpush1.bf16.msra.mxu0 0
        %897 = vmatprep.subr.bf16.mxu0 0
        %898 = vmatpush1.bf16.msra.mxu0 0
        %899 = vmatprep.subr.bf16.mxu0 0
        %900 = vmatpush1.bf16.msra.mxu0 0
        %901 = vmatprep.subr.bf16.mxu0 0
        %902 = vmatpush1.bf16.msra.mxu0 %v885
        %903 = vmatprep.subr.bf16.mxu0 0
        %904 = vmatpush2.bf16.msra.mxu0 0
        %905 = vmatprep.subr.bf16.mxu0 0
        %906 = vmatpush2.bf16.msra.mxu0 0
        %907 = vmatprep.subr.bf16.mxu0 0
        %908 = vmatpush2.bf16.msra.mxu0 0
        %909 = vmatprep.subr.bf16.mxu0 0
        %910 = vmatpush2.bf16.msra.mxu0 0
        %911 = vmatprep.subr.bf16.mxu0 0
        %912 = vmatpush2.bf16.msra.mxu0 0
        %913 = vmatprep.subr.bf16.mxu0 0
        %914 = vmatpush2.bf16.msra.mxu0 0
        %915 = vmatprep.subr.bf16.mxu0 0
        %916 = vmatpush2.bf16.msra.mxu0 0
        %917 = vmatprep.subr.bf16.mxu0 0
        %918 = vmatpush2.bf16.msra.mxu0 0
        %919 = vmatprep.mubr.bf16.mxu0 0
        %920 = vmatmul.mubr.bf16.gmra.mxu0 %v882
        %v921 = vpop.f32.mrf.mxu0
        %v922 = vadd.f32 0.0, %v921
        %v923 = vpop.f32.mrf.mxu0
        %v924 = vpop.f32.mrf.mxu0
        %v925 = vpop.f32.mrf.mxu0
        %926 = vdwg.mxu0
        %v928 = vsel %vm833, %v823, 0
        %v931 = vsel %vm837, %v827, 0
        %933 = vmatprep.subr.bf16.mxu0 0
        %934 = vmatpush1.bf16.msra.mxu0 0
        %935 = vmatprep.subr.bf16.mxu0 0
        %936 = vmatpush1.bf16.msra.mxu0 0
        %937 = vmatprep.subr.bf16.mxu0 0
        %938 = vmatpush1.bf16.msra.mxu0 0
        %939 = vmatprep.subr.bf16.mxu0 0
        %940 = vmatpush1.bf16.msra.mxu0 0
        %941 = vmatprep.subr.bf16.mxu0 0
        %942 = vmatpush1.bf16.msra.mxu0 0
        %943 = vmatprep.subr.bf16.mxu0 0
        %944 = vmatpush1.bf16.msra.mxu0 0
        %945 = vmatprep.subr.bf16.mxu0 0
        %946 = vmatpush1.bf16.msra.mxu0 0
        %947 = vmatprep.subr.bf16.mxu0 0
        %948 = vmatpush1.bf16.msra.mxu0 %v931
        %949 = vmatprep.subr.bf16.mxu0 0
        %950 = vmatpush2.bf16.msra.mxu0 0
        %951 = vmatprep.subr.bf16.mxu0 0
        %952 = vmatpush2.bf16.msra.mxu0 0
        %953 = vmatprep.subr.bf16.mxu0 0
        %954 = vmatpush2.bf16.msra.mxu0 0
        %955 = vmatprep.subr.bf16.mxu0 0
        %956 = vmatpush2.bf16.msra.mxu0 0
        %957 = vmatprep.subr.bf16.mxu0 0
        %958 = vmatpush2.bf16.msra.mxu0 0
        %959 = vmatprep.subr.bf16.mxu0 0
        %960 = vmatpush2.bf16.msra.mxu0 0
        %961 = vmatprep.subr.bf16.mxu0 0
        %962 = vmatpush2.bf16.msra.mxu0 0
        %963 = vmatprep.subr.bf16.mxu0 0
        %964 = vmatpush2.bf16.msra.mxu0 0
        %965 = vmatprep.mubr.bf16.mxu0 0
        %966 = vmatmul.mubr.bf16.gmra.mxu0 %v928
        %v967 = vpop.f32.mrf.mxu0
        %v968 = vadd.f32 0.0, %v967
        %v969 = vpop.f32.mrf.mxu0
        %v970 = vpop.f32.mrf.mxu0
        %v971 = vpop.f32.mrf.mxu0
        %972 = vdwg.mxu0
        %v974 = vsel %vm833, %v824, 0
        %v977 = vsel %vm837, %v828, 0
        %979 = vmatprep.subr.bf16.mxu0 0
        %980 = vmatpush1.bf16.msra.mxu0 0
        %981 = vmatprep.subr.bf16.mxu0 0
        %982 = vmatpush1.bf16.msra.mxu0 0
        %983 = vmatprep.subr.bf16.mxu0 0
        %984 = vmatpush1.bf16.msra.mxu0 0
        %985 = vmatprep.subr.bf16.mxu0 0
        %986 = vmatpush1.bf16.msra.mxu0 0
        %987 = vmatprep.subr.bf16.mxu0 0
        %988 = vmatpush1.bf16.msra.mxu0 0
        %989 = vmatprep.subr.bf16.mxu0 0
        %990 = vmatpush1.bf16.msra.mxu0 0
        %991 = vmatprep.subr.bf16.mxu0 0
        %992 = vmatpush1.bf16.msra.mxu0 0
        %993 = vmatprep.subr.bf16.mxu0 0
        %994 = vmatpush1.bf16.msra.mxu0 %v977
        %995 = vmatprep.subr.bf16.mxu0 0
        %996 = vmatpush2.bf16.msra.mxu0 0
        %997 = vmatprep.subr.bf16.mxu0 0
        %998 = vmatpush2.bf16.msra.mxu0 0
        %999 = vmatprep.subr.bf16.mxu0 0
        %1000 = vmatpush2.bf16.msra.mxu0 0
        %1001 = vmatprep.subr.bf16.mxu0 0
        %1002 = vmatpush2.bf16.msra.mxu0 0
        %1003 = vmatprep.subr.bf16.mxu0 0
        %1004 = vmatpush2.bf16.msra.mxu0 0
        %1005 = vmatprep.subr.bf16.mxu0 0
        %1006 = vmatpush2.bf16.msra.mxu0 0
        %1007 = vmatprep.subr.bf16.mxu0 0
        %1008 = vmatpush2.bf16.msra.mxu0 0
        %1009 = vmatprep.subr.bf16.mxu0 0
        %1010 = vmatpush2.bf16.msra.mxu0 0
        %1011 = vmatprep.mubr.bf16.mxu0 0
        %1012 = vmatmul.mubr.bf16.gmra.mxu0 %v974
        %v1013 = vpop.f32.mrf.mxu0
        %v1014 = vadd.f32 0.0, %v1013
        %v1015 = vpop.f32.mrf.mxu0
        %v1016 = vpop.f32.mrf.mxu0
        %v1017 = vpop.f32.mrf.mxu0
        %1018 = vdwg.mxu0
        %v1019 = vsel %vm833, %v876, -inf
        %1020 = vmax.xlane.f32.xlu0 %v1019
        %v1021 = vpop.xlane.xlu0 %1020
        %v1022 = vsel %vm833, %v922, -inf
        %1023 = vmax.xlane.f32.xlu0 %v1022
        %v1024 = vpop.xlane.xlu0 %1023
        %v1025 = vsel %vm833, %v968, -inf
        %1026 = vmax.xlane.f32.xlu0 %v1025
        %v1027 = vpop.xlane.xlu0 %1026
        %v1028 = vsel %vm833, %v1014, -inf
        %1029 = vmax.xlane.f32.xlu0 %v1028
        %v1030 = vpop.xlane.xlu0 %1029
        %v1031 = vsub.f32 %v876, %v1021
        %v1032 = vsub.f32 %v922, %v1024
        %v1033 = vsub.f32 %v968, %v1027
        %v1034 = vsub.f32 %v1014, %v1030
        %v1035 = vmul.f32 %v1031, 1.442695
        %v1036 = vpow.pop %v1035
        %v1037 = vmul.f32 %v1032, 1.442695
        %v1038 = vpow.pop %v1037
        %v1039 = vmul.f32 %v1033, 1.442695
        %v1040 = vpow.pop %v1039
        %v1041 = vmul.f32 %v1034, 1.442695
        %v1042 = vpow.pop %v1041
        %v1043 = vsel %vm833, %v1036, 0.0
        %1044 = vadd.xlane.f32.xlu0 %v1043
        %v1045 = vpop.xlane.xlu0 %1044
        %v1046 = vsel %vm833, %v1038, 0.0
        %1047 = vadd.xlane.f32.xlu0 %v1046
        %v1048 = vpop.xlane.xlu0 %1047
        %v1049 = vsel %vm833, %v1040, 0.0
        %1050 = vadd.xlane.f32.xlu0 %v1049
        %v1051 = vpop.xlane.xlu0 %1050
        %v1052 = vsel %vm833, %v1042, 0.0
        %1053 = vadd.xlane.f32.xlu0 %v1052
        %v1054 = vpop.xlane.xlu0 %1053
        %v1055 = vrcp.pop %v1045
        %v1056 = vrcp.pop %v1048
        %v1057 = vrcp.pop %v1051
        %v1058 = vrcp.pop %v1054
        %v1059 = vmul.f32 %v1036, %v1055
        %v1060 = vmul.f32 %v1038, %v1056
        %v1061 = vmul.f32 %v1040, %v1057
        %v1062 = vmul.f32 %v1042, %v1058
        %v1063 = vpack.c.bf16 %v1059, %v1059
        %v1064 = vpack.c.bf16 %v1060, %v1060
        %v1065 = vpack.c.bf16 %v1061, %v1061
        %v1066 = vpack.c.bf16 %v1062, %v1062
        %v1068 = vsel %vm833, %v1063, 0
        %v1071 = vsel %vm837, %v829, 0
        %1073 = vmatprep.subr.bf16.mxu0 0
        %1074 = vmatpush1.bf16.msra.mxu0 0
        %1075 = vmatprep.subr.bf16.mxu0 0
        %1076 = vmatpush1.bf16.msra.mxu0 0
        %1077 = vmatprep.subr.bf16.mxu0 0
        %1078 = vmatpush1.bf16.msra.mxu0 0
        %1079 = vmatprep.subr.bf16.mxu0 0
        %1080 = vmatpush1.bf16.msra.mxu0 0
        %1081 = vmatprep.subr.bf16.mxu0 0
        %1082 = vmatpush1.bf16.msra.mxu0 0
        %1083 = vmatprep.subr.bf16.mxu0 0
        %1084 = vmatpush1.bf16.msra.mxu0 0
        %1085 = vmatprep.subr.bf16.mxu0 0
        %1086 = vmatpush1.bf16.msra.mxu0 0
        %1087 = vmatprep.subr.bf16.mxu0 0
        %1088 = vmatpush1.bf16.msra.mxu0 %v1071
        %1089 = vmatprep.subr.bf16.mxu0 0
        %1090 = vmatpush2.bf16.msra.mxu0 0
        %1091 = vmatprep.subr.bf16.mxu0 0
        %1092 = vmatpush2.bf16.msra.mxu0 0
        %1093 = vmatprep.subr.bf16.mxu0 0
        %1094 = vmatpush2.bf16.msra.mxu0 0
        %1095 = vmatprep.subr.bf16.mxu0 0
        %1096 = vmatpush2.bf16.msra.mxu0 0
        %1097 = vmatprep.subr.bf16.mxu0 0
        %1098 = vmatpush2.bf16.msra.mxu0 0
        %1099 = vmatprep.subr.bf16.mxu0 0
        %1100 = vmatpush2.bf16.msra.mxu0 0
        %1101 = vmatprep.subr.bf16.mxu0 0
        %1102 = vmatpush2.bf16.msra.mxu0 0
        %1103 = vmatprep.subr.bf16.mxu0 0
        %1104 = vmatpush2.bf16.msra.mxu0 0
        %1105 = vmatprep.mubr.bf16.mxu0 0
        %1106 = vmatmul.mubr.bf16.gmra.mxu0 %v1068
        %v1107 = vpop.f32.mrf.mxu0
        %v1108 = vadd.f32 0.0, %v1107
        %v1109 = vpop.f32.mrf.mxu0
        %v1110 = vpop.f32.mrf.mxu0
        %v1111 = vpop.f32.mrf.mxu0
        %1112 = vdwg.mxu0
        %v1114 = vsel %vm833, %v1064, 0
        %v1117 = vsel %vm837, %v830, 0
        %1119 = vmatprep.subr.bf16.mxu0 0
        %1120 = vmatpush1.bf16.msra.mxu0 0
        %1121 = vmatprep.subr.bf16.mxu0 0
        %1122 = vmatpush1.bf16.msra.mxu0 0
        %1123 = vmatprep.subr.bf16.mxu0 0
        %1124 = vmatpush1.bf16.msra.mxu0 0
        %1125 = vmatprep.subr.bf16.mxu0 0
        %1126 = vmatpush1.bf16.msra.mxu0 0
        %1127 = vmatprep.subr.bf16.mxu0 0
        %1128 = vmatpush1.bf16.msra.mxu0 0
        %1129 = vmatprep.subr.bf16.mxu0 0
        %1130 = vmatpush1.bf16.msra.mxu0 0
        %1131 = vmatprep.subr.bf16.mxu0 0
        %1132 = vmatpush1.bf16.msra.mxu0 0
        %1133 = vmatprep.subr.bf16.mxu0 0
        %1134 = vmatpush1.bf16.msra.mxu0 %v1117
        %1135 = vmatprep.subr.bf16.mxu0 0
        %1136 = vmatpush2.bf16.msra.mxu0 0
        %1137 = vmatprep.subr.bf16.mxu0 0
        %1138 = vmatpush2.bf16.msra.mxu0 0
        %1139 = vmatprep.subr.bf16.mxu0 0
        %1140 = vmatpush2.bf16.msra.mxu0 0
        %1141 = vmatprep.subr.bf16.mxu0 0
        %1142 = vmatpush2.bf16.msra.mxu0 0
        %1143 = vmatprep.subr.bf16.mxu0 0
        %1144 = vmatpush2.bf16.msra.mxu0 0
        %1145 = vmatprep.subr.bf16.mxu0 0
        %1146 = vmatpush2.bf16.msra.mxu0 0
        %1147 = vmatprep.subr.bf16.mxu0 0
        %1148 = vmatpush2.bf16.msra.mxu0 0
        %1149 = vmatprep.subr.bf16.mxu0 0
        %1150 = vmatpush2.bf16.msra.mxu0 0
        %1151 = vmatprep.mubr.bf16.mxu0 0
        %1152 = vmatmul.mubr.bf16.gmra.mxu0 %v1114
        %v1153 = vpop.f32.mrf.mxu0
        %v1154 = vadd.f32 0.0, %v1153
        %v1155 = vpop.f32.mrf.mxu0
        %v1156 = vpop.f32.mrf.mxu0
        %v1157 = vpop.f32.mrf.mxu0
        %1158 = vdwg.mxu0
        %v1160 = vsel %vm833, %v1065, 0
        %v1163 = vsel %vm837, %v831, 0
        %1165 = vmatprep.subr.bf16.mxu0 0
        %1166 = vmatpush1.bf16.msra.mxu0 0
        %1167 = vmatprep.subr.bf16.mxu0 0
        %1168 = vmatpush1.bf16.msra.mxu0 0
        %1169 = vmatprep.subr.bf16.mxu0 0
        %1170 = vmatpush1.bf16.msra.mxu0 0
        %1171 = vmatprep.subr.bf16.mxu0 0
        %1172 = vmatpush1.bf16.msra.mxu0 0
        %1173 = vmatprep.subr.bf16.mxu0 0
        %1174 = vmatpush1.bf16.msra.mxu0 0
        %1175 = vmatprep.subr.bf16.mxu0 0
        %1176 = vmatpush1.bf16.msra.mxu0 0
        %1177 = vmatprep.subr.bf16.mxu0 0
        %1178 = vmatpush1.bf16.msra.mxu0 0
        %1179 = vmatprep.subr.bf16.mxu0 0
        %1180 = vmatpush1.bf16.msra.mxu0 %v1163
        %1181 = vmatprep.subr.bf16.mxu0 0
        %1182 = vmatpush2.bf16.msra.mxu0 0
        %1183 = vmatprep.subr.bf16.mxu0 0
        %1184 = vmatpush2.bf16.msra.mxu0 0
        %1185 = vmatprep.subr.bf16.mxu0 0
        %1186 = vmatpush2.bf16.msra.mxu0 0
        %1187 = vmatprep.subr.bf16.mxu0 0
        %1188 = vmatpush2.bf16.msra.mxu0 0
        %1189 = vmatprep.subr.bf16.mxu0 0
        %1190 = vmatpush2.bf16.msra.mxu0 0
        %1191 = vmatprep.subr.bf16.mxu0 0
        %1192 = vmatpush2.bf16.msra.mxu0 0
        %1193 = vmatprep.subr.bf16.mxu0 0
        %1194 = vmatpush2.bf16.msra.mxu0 0
        %1195 = vmatprep.subr.bf16.mxu0 0
        %1196 = vmatpush2.bf16.msra.mxu0 0
        %1197 = vmatprep.mubr.bf16.mxu0 0
        %1198 = vmatmul.mubr.bf16.gmra.mxu0 %v1160
        %v1199 = vpop.f32.mrf.mxu0
        %v1200 = vadd.f32 0.0, %v1199
        %v1201 = vpop.f32.mrf.mxu0
        %v1202 = vpop.f32.mrf.mxu0
        %v1203 = vpop.f32.mrf.mxu0
        %1204 = vdwg.mxu0
        %v1206 = vsel %vm833, %v1066, 0
        %v1209 = vsel %vm837, %v832, 0
        %1211 = vmatprep.subr.bf16.mxu0 0
        %1212 = vmatpush1.bf16.msra.mxu0 0
        %1213 = vmatprep.subr.bf16.mxu0 0
        %1214 = vmatpush1.bf16.msra.mxu0 0
        %1215 = vmatprep.subr.bf16.mxu0 0
        %1216 = vmatpush1.bf16.msra.mxu0 0
        %1217 = vmatprep.subr.bf16.mxu0 0
        %1218 = vmatpush1.bf16.msra.mxu0 0
        %1219 = vmatprep.subr.bf16.mxu0 0
        %1220 = vmatpush1.bf16.msra.mxu0 0
        %1221 = vmatprep.subr.bf16.mxu0 0
        %1222 = vmatpush1.bf16.msra.mxu0 0
        %1223 = vmatprep.subr.bf16.mxu0 0
        %1224 = vmatpush1.bf16.msra.mxu0 0
        %1225 = vmatprep.subr.bf16.mxu0 0
        %1226 = vmatpush1.bf16.msra.mxu0 %v1209
        %1227 = vmatprep.subr.bf16.mxu0 0
        %1228 = vmatpush2.bf16.msra.mxu0 0
        %1229 = vmatprep.subr.bf16.mxu0 0
        %1230 = vmatpush2.bf16.msra.mxu0 0
        %1231 = vmatprep.subr.bf16.mxu0 0
        %1232 = vmatpush2.bf16.msra.mxu0 0
        %1233 = vmatprep.subr.bf16.mxu0 0
        %1234 = vmatpush2.bf16.msra.mxu0 0
        %1235 = vmatprep.subr.bf16.mxu0 0
        %1236 = vmatpush2.bf16.msra.mxu0 0
        %1237 = vmatprep.subr.bf16.mxu0 0
        %1238 = vmatpush2.bf16.msra.mxu0 0
        %1239 = vmatprep.subr.bf16.mxu0 0
        %1240 = vmatpush2.bf16.msra.mxu0 0
        %1241 = vmatprep.subr.bf16.mxu0 0
        %1242 = vmatpush2.bf16.msra.mxu0 0
        %1243 = vmatprep.mubr.bf16.mxu0 0
        %1244 = vmatmul.mubr.bf16.gmra.mxu0 %v1206
        %v1245 = vpop.f32.mrf.mxu0
        %v1246 = vadd.f32 0.0, %v1245
        %v1247 = vpop.f32.mrf.mxu0
        %v1248 = vpop.f32.mrf.mxu0
        %v1249 = vpop.f32.mrf.mxu0
        %1250 = vdwg.mxu0
        %v1251 = vpack.c.bf16 %v1108, %v1108
        %1252 = vst.msk [vmem:[#allocation5] sm:$0xf] %vm801, %v1251
        %v1253 = vpack.c.bf16 %v1154, %v1154
        %v1255 = vunpack.c.l.b16 %v1253
        %v1256 = vpack.c.b16 %v1255, %v1255
        %1257 = vrot.lane.b32.xlu0 %v1256, 8
        %v1258 = vpop.permute.xlu0 %1257
        %vm1260 = vcmask 126016
        %1261 = vst.msk [vmem:[#allocation5] sm:$0xf] %vm1260, %v1258
        %v1262 = vpack.c.bf16 %v1200, %v1200
        %v1264 = vunpack.c.l.b16 %v1262
        %v1265 = vpack.c.b16 %v1264, %v1264
        %1266 = vrot.lane.b32.xlu0 %v1265, 16
        %v1267 = vpop.permute.xlu0 %1266
        %vm1269 = vcmask 191616
        %1270 = vst.msk [vmem:[#allocation5] sm:$0xf] %vm1269, %v1267
        %v1271 = vpack.c.bf16 %v1246, %v1246
        %v1273 = vunpack.c.l.b16 %v1271
        %v1274 = vpack.c.b16 %v1273, %v1273
        %1275 = vrot.lane.b32.xlu0 %v1274, 24
        %v1276 = vpop.permute.xlu0 %1275
        %vm1278 = vcmask 257216
        %1279 = vst.msk [vmem:[#allocation5] sm:$0xf] %vm1278, %v1276
        %v1280 = vld [vmem:[#allocation5] sm:$0xf]
        %v1281 = vld [vmem:[#allocation14] sm:$0xf]
        %v1282 = vld [vmem:[#allocation14 + $0x4] sm:$0xf]
        %v1283 = vld [vmem:[#allocation14 + $0x8] sm:$0xf]
        %v1284 = vld [vmem:[#allocation14 + $0xc] sm:$0xf]
        %v1285 = vld [vmem:[%s8] sm:$0x1]
        %v1287 = vlaneseq
        %v1288 = vshrl.u32 %v1287, 7
        %v1289 = vsub.s32 0, %v1288
        %v1290 = vrot.slane %v1285, %v1289
        %v1296 = vunpack.c.l.b16 %v1281
        %v1297 = vunpack.c.l.b16 %v1282
        %v1298 = vunpack.c.l.b16 %v1283
        %v1299 = vunpack.c.l.b16 %v1284
        %v1300 = vpack.c.b16 %v1297, %v1296
        %v1301 = vpack.c.b16 %v1299, %v1298
        %v1305 = vsel %vm755, %v1280, 0
        %1307 = vmatprep.subr.bf16.mxu0 0
        %1308 = vmatpush1.bf16.msra.mxu0 0
        %1309 = vmatprep.subr.bf16.mxu0 0
        %1310 = vmatpush1.bf16.msra.mxu0 0
        %1311 = vmatprep.subr.bf16.mxu0 0
        %1312 = vmatpush1.bf16.msra.mxu0 0
        %1313 = vmatprep.subr.bf16.mxu0 0
        %1314 = vmatpush1.bf16.msra.mxu0 0
        %1315 = vmatprep.subr.bf16.mxu0 0
        %1316 = vmatpush1.bf16.msra.mxu0 0
        %1317 = vmatprep.subr.bf16.mxu0 0
        %1318 = vmatpush1.bf16.msra.mxu0 0
        %1319 = vmatprep.subr.bf16.mxu0 0
        %1320 = vmatpush1.bf16.msra.mxu0 %v1301
        %1321 = vmatprep.subr.bf16.mxu0 0
        %1322 = vmatpush1.bf16.msra.mxu0 %v1300
        %1323 = vmatprep.subr.bf16.mxu0 0
        %1324 = vmatpush2.bf16.msra.mxu0 0
        %1325 = vmatprep.subr.bf16.mxu0 0
        %1326 = vmatpush2.bf16.msra.mxu0 0
        %1327 = vmatprep.subr.bf16.mxu0 0
        %1328 = vmatpush2.bf16.msra.mxu0 0
        %1329 = vmatprep.subr.bf16.mxu0 0
        %1330 = vmatpush2.bf16.msra.mxu0 0
        %1331 = vmatprep.subr.bf16.mxu0 0
        %1332 = vmatpush2.bf16.msra.mxu0 0
        %1333 = vmatprep.subr.bf16.mxu0 0
        %1334 = vmatpush2.bf16.msra.mxu0 0
        %1335 = vmatprep.subr.bf16.mxu0 0
        %1336 = vmatpush2.bf16.msra.mxu0 0
        %1337 = vmatprep.subr.bf16.mxu0 0
        %1338 = vmatpush2.bf16.msra.mxu0 0
        %1339 = vmatprep.mubr.bf16.mxu0 0
        %1340 = vmatmul.mubr.bf16.gmra.mxu0 %v1305
        %v1341 = vpop.f32.mrf.mxu0
        %v1342 = vadd.f32 %v1290, %v1341
        %v1343 = vpop.f32.mrf.mxu0
        %v1344 = vpop.f32.mrf.mxu0
        %v1345 = vpop.f32.mrf.mxu0
        %1346 = vdwg.mxu0
        %1347 = vst.msk [vmem:[%s419] sm:$0xff] %vm755, %v1342
        %s1348 = sand.u32 %s244, 1
        %s1349 = scalar_lea.sflag [#allocation8], %s1348
        %s1350 = sand.u32 %s244, 1
        %s1351 = smul.addr %s1350, 8
        %s1352 = scalar_lea.vmem [#allocation15], %s1351
        // Predicated region
        $region81: #{tpu_custom_call.1} parent=55 // pred_check
          %p1353 = pneg %p254
        $region82: #{tpu_custom_call.1} parent=55 // pred_check_branch
          %1355 = sbr.rel (%p1353) target = $region84
        $region83: #{tpu_custom_call.1} parent=55 // pred_region
          %s1357 = ssub.s32 128, 128
          %1358 = vsyncadd %s1349, %s1357
          %s1359 = sadd.s32 %s33, %s32
          %s1360 = smul.addr %s1359, 128
          %s1361 = scalar_lea.hbm %s9, %s1360
          %s1363 = sshll.u32 %s1352, 4
          %s1364 = int_to_ptr.vmem [resolvable:$true] %s1363
          %1366 = dma.vmem_to_hbm [thread:$0]  %s1364, 128, %s1361, %s1349
        $region84: #{tpu_custom_call.1} parent=55 // pred_fallthru
          _
      $region56: #{tpu_custom_call.1} parent=5 // pred_fallthru
        _
      %p1367 = scmp.le.s32.totalorder 2, %s23
      // Predicated region
      $region85: #{tpu_custom_call.1} parent=5 // pred_check
        %p1368 = pneg %p1367
      $region86: #{tpu_custom_call.1} parent=5 // pred_check_branch
        %1370 = sbr.rel (%p1368) target = $region88
      $region87: #{tpu_custom_call.1} parent=5 // pred_region
        %s1371 = ssub.s32 %s23, 2
        // Predicated region
        $region89: #{tpu_custom_call.1} parent=87 // pred_check
          %p1372 = pneg %p260
        $region90: #{tpu_custom_call.1} parent=87 // pred_check_branch
          %1374 = sbr.rel (%p1372) target = $region92
        $region91: #{tpu_custom_call.1} parent=87 // pred_region
          %s1375 = sand.u32 %s245, 1
          %s1376 = scalar_lea.sflag [#allocation8], %s1375
          %s1377 = sand.u32 %s245, 1
          %s1378 = smul.addr %s1377, 8
          %s1379 = scalar_lea.vmem [#allocation15], %s1378
          %1380 = dma.done %s1376, 128
        $region92: #{tpu_custom_call.1} parent=87 // pred_fallthru
          _
      $region88: #{tpu_custom_call.1} parent=5 // pred_fallthru
        _
    $region6: #{tpu_custom_call.1} parent=1 // loop_footer
      %s27 = sadd.s32 1, %s23
    $region7: #{tpu_custom_call.1} parent=1 // loop_footer_branch
      %22 = sbr.rel target = $region3
    $region8: #{tpu_custom_call.1} parent=1 // loop_exit
      _
    %1381 = vsyncpa [#allocation7], 1
    %s1382 = scalar_lea.sflag [#allocation7], 1
    %1383 = vsyncpa %s1382, 1
    %1384 = vsyncpa [#allocation10], 1
    %1385 = vsyncpa [#allocation13], 1
    %1386 = vsyncpa [#allocation8], 1
    %s1387 = scalar_lea.sflag [#allocation8], 1
    %1388 = vsyncpa %s1387, 1

// kernel: tpu_custom_call.1
$region0: #{tpu_custom_call.1}
  #allocation0 [shape = 'u32[]', space=smem, size = 0x4, offset = 0x4, fixed_abs, tag = 'smem constant byte address 0x4 - core index']
  #allocation1 [shape = 'u32[144,128]{1,0:T(1,128)}', space=vmem, size = 0x12000, scoped, tag = 'internal scratch']
  #allocation2 [shape = 'bf16[4,8,8]{2,1,0:T(8,128)(2,1)}', space=vmem, size = 0x2000, scoped, tag = 'scratch operand']
  #allocation3 [shape = 'bf16[4,8,8]{2,1,0:T(8,128)(2,1)}', space=vmem, size = 0x2000, scoped, tag = 'scratch operand']
  #allocation4 [shape = 'bf16[4,8,8]{2,1,0:T(8,128)(2,1)}', space=vmem, size = 0x2000, scoped, tag = 'scratch operand']
  #allocation5 [shape = 'bf16[8,32]{1,0:T(8,128)(2,1)}', space=vmem, size = 0x800, scoped, tag = 'scratch operand']
  %s0 = inlined_call_operand.hbm [shape: bf16[2,8,32], index: 0, kind: input, shape index: {}]
  %s1 = inlined_call_operand.hbm [shape: bf16[32,32], index: 1, kind: input, shape index: {}]
  %s2 = inlined_call_operand.vmem [shape: f32[1,32], index: 2, kind: input, shape index: {}]
  %s3 = inlined_call_operand.hbm [shape: bf16[32,32], index: 3, kind: input, shape index: {}]
  %s4 = inlined_call_operand.vmem [shape: f32[1,32], index: 4, kind: input, shape index: {}]
  %s5 = inlined_call_operand.hbm [shape: bf16[32,32], index: 5, kind: input, shape index: {}]
  %s6 = inlined_call_operand.vmem [shape: f32[1,32], index: 6, kind: input, shape index: {}]
  %s7 = inlined_call_operand.hbm [shape: bf16[32,32], index: 7, kind: input, shape index: {}]
  %s8 = inlined_call_operand.vmem [shape: f32[1,32], index: 8, kind: input, shape index: {}]
  %s9 = inlined_call_operand.hbm [shape: f32[2,8,32], index: 9, kind: output, shape index: {}]
  %s10 = sld [smem:[#allocation0]]
  $region93: #{tpu_custom_call.1} parent=0
    _
  %s12 = ssub.s32 1, %s10
  %s13 = scalar_select 0, %s12, %s10
  $region1: #{tpu_custom_call.1} parent=0
    #allocation6 [shape = 'u8[4096]{0}', space=vmem, size = 0x1000, scoped, tag = 'input window, operand 0']
    #allocation7 [shape = 's32[2]{0}', space=sflag, size = 0x8, scoped, tag = 'scoped memory for tpu_custom_call.1']
    #allocation8 [shape = 's32[2]{0}', space=sflag, size = 0x8, scoped, tag = 'scoped memory for tpu_custom_call.1']
    #allocation9 [shape = 'u8[8192]{0}', space=vmem, size = 0x2000, scoped, tag = 'input window, operand 1, single buffered']
    #allocation10 [shape = 's32[1]{0}', space=sflag, size = 0x4, scoped, tag = 'scoped memory for tpu_custom_call.1']
    #allocation11 [shape = 'u8[8192]{0}', space=vmem, size = 0x2000, scoped, tag = 'input window, operand 3, single buffered']
    #allocation12 [shape = 'u8[8192]{0}', space=vmem, size = 0x2000, scoped, tag = 'input window, operand 5, single buffered']
    #allocation13 [shape = 's32[1]{0}', space=sflag, size = 0x4, scoped, tag = 'scoped memory for tpu_custom_call.1']
    #allocation14 [shape = 'u8[8192]{0}', space=vmem, size = 0x2000, scoped, tag = 'input window, operand 7, single buffered']
    #allocation15 [shape = 'u8[8192]{0}', space=vmem, size = 0x2000, scoped, tag = 'output window, operand 0']
    %14 = vsyncpa [#allocation7], 0
    %s15 = scalar_lea.sflag [#allocation7], 1
    %16 = vsyncpa %s15, 0
    %17 = vsyncpa [#allocation10], 0
    %18 = vsyncpa [#allocation13], 0
    %19 = vsyncpa [#allocation8], 0
    %s20 = scalar_lea.sflag [#allocation8], 1
    %21 = vsyncpa %s20, 0
    loop: start=0, step=1, limit=4
    $region2: #{tpu_custom_call.1} parent=1 // loop_pre_header
      _
    $region3: #{tpu_custom_call.1} parent=1 // loop_header
      %s23 = sphi 0, %s27
      %p24 = scmp.ge.s32.totalorder %s23, 4
      %s30 = sphi 0, %s42
      %s31 = sphi 0, %s38
      %s32 = sphi 0, %s30
      %s33 = sphi 0, %s31
      %s34 = sphi 0, %s32
      %s35 = sphi 0, %s33
      %s45 = sphi 0, %s47
      %s48 = sphi 0, %s45
      %s49 = sphi 0, %s48
      %s65 = sphi 0, %s49
      %s69 = sphi 0, %s69
      %s71 = sphi 0, %s69
      %s72 = sphi 0, %s71
      %s86 = sphi 0, %s72
      %s90 = sphi 0, %s90
      %s92 = sphi 0, %s90
      %s93 = sphi 0, %s92
      %s107 = sphi 0, %s93
      %s111 = sphi 0, %s111
      %s113 = sphi 0, %s111
      %s114 = sphi 0, %s113
      %s128 = sphi 0, %s114
      %s132 = sphi 0, %s132
      %s134 = sphi 0, %s132
      %s135 = sphi 0, %s134
      %s149 = sphi 0, %s135
      %s153 = sphi 0, %s153
      %s155 = sphi 0, %s153
      %s156 = sphi 0, %s155
      %s170 = sphi 0, %s156
      %s174 = sphi 0, %s174
      %s176 = sphi 0, %s174
      %s177 = sphi 0, %s176
      %s191 = sphi 0, %s177
      %s195 = sphi 0, %s195
      %s197 = sphi 0, %s195
      %s198 = sphi 0, %s197
      %s212 = sphi 0, %s198
      %s216 = sphi 0, %s216
      %s218 = sphi 0, %s216
      %s219 = sphi 0, %s218
      %s233 = sphi 0, %s219
      %s241 = sphi 0, %s243
      %s244 = sphi 0, %s241
      %s245 = sphi 0, %s244
      %s261 = sphi 0, %s245
    $region4: #{tpu_custom_call.1} parent=1 // loop_header_branch
      %26 = sbr.rel (%p24) target = $region8
    $region5: #{tpu_custom_call.1} parent=1 // loop_body
      %s28 = ssub.s32 %s23, 1
      %s29 = ssub.s32 %s23, 2
      %s36 = sadd.s32 1, %s31
      %p37 = scmp.ge.s32.totalorder %s36, 1
      %s38 = scalar_select %p37, 0, %s36
      %s39 = sadd.s32 1, %s30
      %s40 = scalar_select %p37, %s39, %s30
      %p41 = scmp.ge.s32.totalorder %s40, 2
      %s42 = scalar_select %p41, 0, %s40
      %s43 = ssub.s32 %s30, %s42
      %p44 = scmp.eq.s32.totalorder %s43, 0
      %s46 = sadd.s32 %s45, 1
      %s47 = scalar_select %p44, %s45, %s46
      %p50 = pneg %p44
      %p51 = scmp.eq.s32.totalorder %s23, 1
      %p52 = por %p50, %p51
      %p53 = scmp.ne.s32.totalorder %s45, %s48
      %p54 = scmp.eq.s32.totalorder %s23, 0
      %p55 = por %p53, %p54
      %p56 = scmp.ne.s32.totalorder %s45, %s48
      %p57 = scmp.eq.s32.totalorder %s28, 1
      %p58 = por %p56, %p57
      %p59 = scmp.ne.s32.totalorder %s48, %s49
      %p60 = scmp.eq.s32.totalorder %s28, 0
      %p61 = por %p59, %p60
      %p62 = scmp.ne.s32.totalorder %s48, %s49
      %p63 = scmp.eq.s32.totalorder %s29, 1
      %p64 = por %p62, %p63
      %p66 = scmp.ne.s32.totalorder %s49, %s65
      %p67 = scmp.eq.s32.totalorder %s29, 0
      %p68 = por %p66, %p67
      %s70 = sadd.s32 %s69, 1
      %p73 = scmp.eq.s32.totalorder %s23, 1
      %p74 = scmp.ne.s32.totalorder %s69, %s71
      %p75 = scmp.eq.s32.totalorder %s23, 0
      %p76 = por %p74, %p75
      %p77 = scmp.ne.s32.totalorder %s69, %s71
      %p78 = scmp.eq.s32.totalorder %s28, 1
      %p79 = por %p77, %p78
      %p80 = scmp.ne.s32.totalorder %s71, %s72
      %p81 = scmp.eq.s32.totalorder %s28, 0
      %p82 = por %p80, %p81
      %p83 = scmp.ne.s32.totalorder %s71, %s72
      %p84 = scmp.eq.s32.totalorder %s29, 1
      %p85 = por %p83, %p84
      %p87 = scmp.ne.s32.totalorder %s72, %s86
      %p88 = scmp.eq.s32.totalorder %s29, 0
      %p89 = por %p87, %p88
      %s91 = sadd.s32 %s90, 1
      %p94 = scmp.eq.s32.totalorder %s23, 1
      %p95 = scmp.ne.s32.totalorder %s90, %s92
      %p96 = scmp.eq.s32.totalorder %s23, 0
      %p97 = por %p95, %p96
      %p98 = scmp.ne.s32.totalorder %s90, %s92
      %p99 = scmp.eq.s32.totalorder %s28, 1
      %p100 = por %p98, %p99
      %p101 = scmp.ne.s32.totalorder %s92, %s93
      %p102 = scmp.eq.s32.totalorder %s28, 0
      %p103 = por %p101, %p102
      %p104 = scmp.ne.s32.totalorder %s92, %s93
      %p105 = scmp.eq.s32.totalorder %s29, 1
      %p106 = por %p104, %p105
      %p108 = scmp.ne.s32.totalorder %s93, %s107
      %p109 = scmp.eq.s32.totalorder %s29, 0
      %p110 = por %p108, %p109
      %s112 = sadd.s32 %s111, 1
      %p115 = scmp.eq.s32.totalorder %s23, 1
      %p116 = scmp.ne.s32.totalorder %s111, %s113
      %p117 = scmp.eq.s32.totalorder %s23, 0
      %p118 = por %p116, %p117
      %p119 = scmp.ne.s32.totalorder %s111, %s113
      %p120 = scmp.eq.s32.totalorder %s28, 1
      %p121 = por %p119, %p120
      %p122 = scmp.ne.s32.totalorder %s113, %s114
      %p123 = scmp.eq.s32.totalorder %s28, 0
      %p124 = por %p122, %p123
      %p125 = scmp.ne.s32.totalorder %s113, %s114
      %p126 = scmp.eq.s32.totalorder %s29, 1
      %p127 = por %p125, %p126
      %p129 = scmp.ne.s32.totalorder %s114, %s128
      %p130 = scmp.eq.s32.totalorder %s29, 0
      %p131 = por %p129, %p130
      %s133 = sadd.s32 %s132, 1
      %p136 = scmp.eq.s32.totalorder %s23, 1
      %p137 = scmp.ne.s32.totalorder %s132, %s134
      %p138 = scmp.eq.s32.totalorder %s23, 0
      %p139 = por %p137, %p138
      %p140 = scmp.ne.s32.totalorder %s132, %s134
      %p141 = scmp.eq.s32.totalorder %s28, 1
      %p142 = por %p140, %p141
      %p143 = scmp.ne.s32.totalorder %s134, %s135
      %p144 = scmp.eq.s32.totalorder %s28, 0
      %p145 = por %p143, %p144
      %p146 = scmp.ne.s32.totalorder %s134, %s135
      %p147 = scmp.eq.s32.totalorder %s29, 1
      %p148 = por %p146, %p147
      %p150 = scmp.ne.s32.totalorder %s135, %s149
      %p151 = scmp.eq.s32.totalorder %s29, 0
      %p152 = por %p150, %p151
      %s154 = sadd.s32 %s153, 1
      %p157 = scmp.eq.s32.totalorder %s23, 1
      %p158 = scmp.ne.s32.totalorder %s153, %s155
      %p159 = scmp.eq.s32.totalorder %s23, 0
      %p160 = por %p158, %p159
      %p161 = scmp.ne.s32.totalorder %s153, %s155
      %p162 = scmp.eq.s32.totalorder %s28, 1
      %p163 = por %p161, %p162
      %p164 = scmp.ne.s32.totalorder %s155, %s156
      %p165 = scmp.eq.s32.totalorder %s28, 0
      %p166 = por %p164, %p165
      %p167 = scmp.ne.s32.totalorder %s155, %s156
      %p168 = scmp.eq.s32.totalorder %s29, 1
      %p169 = por %p167, %p168
      %p171 = scmp.ne.s32.totalorder %s156, %s170
      %p172 = scmp.eq.s32.totalorder %s29, 0
      %p173 = por %p171, %p172
      %s175 = sadd.s32 %s174, 1
      %p178 = scmp.eq.s32.totalorder %s23, 1
      %p179 = scmp.ne.s32.totalorder %s174, %s176
      %p180 = scmp.eq.s32.totalorder %s23, 0
      %p181 = por %p179, %p180
      %p182 = scmp.ne.s32.totalorder %s174, %s176
      %p183 = scmp.eq.s32.totalorder %s28, 1
      %p184 = por %p182, %p183
      %p185 = scmp.ne.s32.totalorder %s176, %s177
      %p186 = scmp.eq.s32.totalorder %s28, 0
      %p187 = por %p185, %p186
      %p188 = scmp.ne.s32.totalorder %s176, %s177
      %p189 = scmp.eq.s32.totalorder %s29, 1
      %p190 = por %p188, %p189
      %p192 = scmp.ne.s32.totalorder %s177, %s191
      %p193 = scmp.eq.s32.totalorder %s29, 0
      %p194 = por %p192, %p193
      %s196 = sadd.s32 %s195, 1
      %p199 = scmp.eq.s32.totalorder %s23, 1
      %p200 = scmp.ne.s32.totalorder %s195, %s197
      %p201 = scmp.eq.s32.totalorder %s23, 0
      %p202 = por %p200, %p201
      %p203 = scmp.ne.s32.totalorder %s195, %s197
      %p204 = scmp.eq.s32.totalorder %s28, 1
      %p205 = por %p203, %p204
      %p206 = scmp.ne.s32.totalorder %s197, %s198
      %p207 = scmp.eq.s32.totalorder %s28, 0
      %p208 = por %p206, %p207
      %p209 = scmp.ne.s32.totalorder %s197, %s198
      %p210 = scmp.eq.s32.totalorder %s29, 1
      %p211 = por %p209, %p210
      %p213 = scmp.ne.s32.totalorder %s198, %s212
      %p214 = scmp.eq.s32.totalorder %s29, 0
      %p215 = por %p213, %p214
      %s217 = sadd.s32 %s216, 1
      %p220 = scmp.eq.s32.totalorder %s23, 1
      %p221 = scmp.ne.s32.totalorder %s216, %s218
      %p222 = scmp.eq.s32.totalorder %s23, 0
      %p223 = por %p221, %p222
      %p224 = scmp.ne.s32.totalorder %s216, %s218
      %p225 = scmp.eq.s32.totalorder %s28, 1
      %p226 = por %p224, %p225
      %p227 = scmp.ne.s32.totalorder %s218, %s219
      %p228 = scmp.eq.s32.totalorder %s28, 0
      %p229 = por %p227, %p228
      %p230 = scmp.ne.s32.totalorder %s218, %s219
      %p231 = scmp.eq.s32.totalorder %s29, 1
      %p232 = por %p230, %p231
      %p234 = scmp.ne.s32.totalorder %s219, %s233
      %p235 = scmp.eq.s32.totalorder %s29, 0
      %p236 = por %p234, %p235
      %s237 = ssub.s32 %s30, %s42
      %s238 = ssub.s32 %s31, %s38
      %s239 = sor.u32 %s237, %s238
      %p240 = scmp.eq.s32.totalorder %s239, 0
      %s242 = sadd.s32 %s241, 1
      %s243 = scalar_select %p240, %s241, %s242
      %p246 = pneg %p240
      %p247 = scmp.eq.s32.totalorder %s23, 1
      %p248 = por %p246, %p247
      %p249 = scmp.ne.s32.totalorder %s241, %s244
      %p250 = scmp.eq.s32.totalorder %s23, 0
      %p251 = por %p249, %p250
      %p252 = scmp.ne.s32.totalorder %s241, %s244
      %p253 = scmp.eq.s32.totalorder %s28, 1
      %p254 = por %p252, %p253
      %p255 = scmp.ne.s32.totalorder %s244, %s245
      %p256 = scmp.eq.s32.totalorder %s28, 0
      %p257 = por %p255, %p256
      %p258 = scmp.ne.s32.totalorder %s244, %s245
      %p259 = scmp.eq.s32.totalorder %s29, 1
      %p260 = por %p258, %p259
      %p262 = scmp.ne.s32.totalorder %s245, %s261
      %p263 = scmp.eq.s32.totalorder %s29, 0
      %p264 = por %p262, %p263
      %p265 = scmp.le.s32.totalorder 1, %s23
      %p266 = scmp.lt.s32.totalorder %s23, 3
      %p267 = pnand %p265, %p266
      %p268 = pneg %p267
      // Predicated region
      $region9: #{tpu_custom_call.1} parent=5 // pred_check
        _
      $region10: #{tpu_custom_call.1} parent=5 // pred_check_branch
        %270 = sbr.rel (%p267) target = $region12
      $region11: #{tpu_custom_call.1} parent=5 // pred_region
        %s271 = ssub.s32 %s23, 1
        // Predicated region
        $region13: #{tpu_custom_call.1} parent=11 // pred_check
          %p272 = pneg %p82
        $region14: #{tpu_custom_call.1} parent=11 // pred_check_branch
          %274 = sbr.rel (%p272) target = $region16
        $region15: #{tpu_custom_call.1} parent=11 // pred_region
          %s276 = ssub.s32 256, 256
          %277 = vsyncadd [#allocation10], %s276
          %s278 = sshll.u32 [#allocation9], 4
          %s279 = int_to_ptr.vmem [resolvable:$true] %s278
          %284 = dma.hbm_to_vmem [thread:$0]  %s1, 256, %s279, [#allocation10], 64, 64, 4
        $region16: #{tpu_custom_call.1} parent=11 // pred_fallthru
          _
        // Predicated region
        $region17: #{tpu_custom_call.1} parent=11 // pred_check
          %p285 = pneg %p103
        $region18: #{tpu_custom_call.1} parent=11 // pred_check_branch
          %287 = sbr.rel (%p285) target = $region20
        $region19: #{tpu_custom_call.1} parent=11 // pred_region
          _
        $region20: #{tpu_custom_call.1} parent=11 // pred_fallthru
          _
        // Predicated region
        $region21: #{tpu_custom_call.1} parent=11 // pred_check
          %p288 = pneg %p124
        $region22: #{tpu_custom_call.1} parent=11 // pred_check_branch
          %290 = sbr.rel (%p288) target = $region24
        $region23: #{tpu_custom_call.1} parent=11 // pred_region
          %s292 = ssub.s32 256, 256
          %293 = vsyncadd [#allocation10], %s292
          %s294 = sshll.u32 [#allocation11], 4
          %s295 = int_to_ptr.vmem [resolvable:$true] %s294
          %300 = dma.hbm_to_vmem [thread:$0]  %s3, 256, %s295, [#allocation10], 64, 64, 4
        $region24: #{tpu_custom_call.1} parent=11 // pred_fallthru
          _
        // Predicated region
        $region25: #{tpu_custom_call.1} parent=11 // pred_check
          %p301 = pneg %p145
        $region26: #{tpu_custom_call.1} parent=11 // pred_check_branch
          %303 = sbr.rel (%p301) target = $region28
        $region27: #{tpu_custom_call.1} parent=11 // pred_region
          _
        $region28: #{tpu_custom_call.1} parent=11 // pred_fallthru
          _
        // Predicated region
        $region29: #{tpu_custom_call.1} parent=11 // pred_check
          %p304 = pneg %p166
        $region30: #{tpu_custom_call.1} parent=11 // pred_check_branch
          %306 = sbr.rel (%p304) target = $region32
        $region31: #{tpu_custom_call.1} parent=11 // pred_region
          %s308 = ssub.s32 256, 256
          %309 = vsyncadd [#allocation13], %s308
          %s310 = sshll.u32 [#allocation12], 4
          %s311 = int_to_ptr.vmem [resolvable:$true] %s310
          %316 = dma.hbm_to_vmem [thread:$0]  %s5, 256, %s311, [#allocation13], 64, 64, 4
        $region32: #{tpu_custom_call.1} parent=11 // pred_fallthru
          _
        // Predicated region
        $region33: #{tpu_custom_call.1} parent=11 // pred_check
          %p317 = pneg %p187
        $region34: #{tpu_custom_call.1} parent=11 // pred_check_branch
          %319 = sbr.rel (%p317) target = $region36
        $region35: #{tpu_custom_call.1} parent=11 // pred_region
          _
        $region36: #{tpu_custom_call.1} parent=11 // pred_fallthru
          _
        // Predicated region
        $region37: #{tpu_custom_call.1} parent=11 // pred_check
          %p320 = pneg %p208
        $region38: #{tpu_custom_call.1} parent=11 // pred_check_branch
          %322 = sbr.rel (%p320) target = $region40
        $region39: #{tpu_custom_call.1} parent=11 // pred_region
          %s324 = ssub.s32 256, 256
          %325 = vsyncadd [#allocation13], %s324
          %s326 = sshll.u32 [#allocation14], 4
          %s327 = int_to_ptr.vmem [resolvable:$true] %s326
          %332 = dma.hbm_to_vmem [thread:$0]  %s7, 256, %s327, [#allocation13], 64, 64, 4
        $region40: #{tpu_custom_call.1} parent=11 // pred_fallthru
          _
        // Predicated region
        $region41: #{tpu_custom_call.1} parent=11 // pred_check
          %p333 = pneg %p229
        $region42: #{tpu_custom_call.1} parent=11 // pred_check_branch
          %335 = sbr.rel (%p333) target = $region44
        $region43: #{tpu_custom_call.1} parent=11 // pred_region
          _
        $region44: #{tpu_custom_call.1} parent=11 // pred_fallthru
          _
      $region12: #{tpu_custom_call.1} parent=5 // pred_fallthru
        _
      %p336 = scmp.lt.s32.totalorder %s23, 2
      // Predicated region
      $region45: #{tpu_custom_call.1} parent=5 // pred_check
        %p337 = pneg %p336
      $region46: #{tpu_custom_call.1} parent=5 // pred_check_branch
        %339 = sbr.rel (%p337) target = $region48
      $region47: #{tpu_custom_call.1} parent=5 // pred_region
        // Predicated region
        $region49: #{tpu_custom_call.1} parent=47 // pred_check
          %p340 = pneg %p55
        $region50: #{tpu_custom_call.1} parent=47 // pred_check_branch
          %342 = sbr.rel (%p340) target = $region52
        $region51: #{tpu_custom_call.1} parent=47 // pred_region
          %s343 = sand.u32 %s45, 1
          %s344 = scalar_lea.sflag [#allocation7], %s343
          %s345 = sand.u32 %s45, 1
          %s346 = smul.addr %s345, 4
          %s347 = scalar_lea.vmem [#allocation6], %s346
          %s349 = ssub.s32 64, 64
          %350 = vsyncadd %s344, %s349
          %s351 = smul.addr %s30, 64
          %s352 = scalar_lea.hbm %s0, %s351
          %s354 = sshll.u32 %s347, 4
          %s355 = int_to_ptr.vmem [resolvable:$true] %s354
          %357 = dma.hbm_to_vmem [thread:$0]  %s352, 64, %s355, %s344
        $region52: #{tpu_custom_call.1} parent=47 // pred_fallthru
          _
      $region48: #{tpu_custom_call.1} parent=5 // pred_fallthru
        _
      %p358 = scmp.le.s32.totalorder 1, %s23
      %p359 = scmp.lt.s32.totalorder %s23, 3
      %p360 = pnand %p358, %p359
      %p361 = pneg %p360
      // Predicated region
      $region53: #{tpu_custom_call.1} parent=5 // pred_check
        _
      $region54: #{tpu_custom_call.1} parent=5 // pred_check_branch
        %363 = sbr.rel (%p360) target = $region56
      $region55: #{tpu_custom_call.1} parent=5 // pred_region
        %s364 = ssub.s32 %s23, 1
        %s365 = sand.u32 %s48, 1
        %s366 = scalar_lea.sflag [#allocation7], %s365
        %s367 = sand.u32 %s48, 1
        %s368 = smul.addr %s367, 4
        %s369 = scalar_lea.vmem [#allocation6], %s368
        // Predicated region
        $region57: #{tpu_custom_call.1} parent=55 // pred_check
          %p370 = pneg %p61
        $region58: #{tpu_custom_call.1} parent=55 // pred_check_branch
          %372 = sbr.rel (%p370) target = $region60
        $region59: #{tpu_custom_call.1} parent=55 // pred_region
          %373 = dma.done %s366, 64
        $region60: #{tpu_custom_call.1} parent=55 // pred_fallthru
          _
        // Predicated region
        $region61: #{tpu_custom_call.1} parent=55 // pred_check
          %p374 = pneg %p82
        $region62: #{tpu_custom_call.1} parent=55 // pred_check_branch
          %376 = sbr.rel (%p374) target = $region64
        $region63: #{tpu_custom_call.1} parent=55 // pred_region
          %377 = dma.done [#allocation10], 256
        $region64: #{tpu_custom_call.1} parent=55 // pred_fallthru
          _
        // Predicated region
        $region65: #{tpu_custom_call.1} parent=55 // pred_check
          %p378 = pneg %p124
        $region66: #{tpu_custom_call.1} parent=55 // pred_check_branch
          %380 = sbr.rel (%p378) target = $region68
        $region67: #{tpu_custom_call.1} parent=55 // pred_region
          %381 = dma.done [#allocation10], 256
        $region68: #{tpu_custom_call.1} parent=55 // pred_fallthru
          _
        // Predicated region
        $region69: #{tpu_custom_call.1} parent=55 // pred_check
          %p382 = pneg %p166
        $region70: #{tpu_custom_call.1} parent=55 // pred_check_branch
          %384 = sbr.rel (%p382) target = $region72
        $region71: #{tpu_custom_call.1} parent=55 // pred_region
          %385 = dma.done [#allocation13], 256
        $region72: #{tpu_custom_call.1} parent=55 // pred_fallthru
          _
        // Predicated region
        $region73: #{tpu_custom_call.1} parent=55 // pred_check
          %p386 = pneg %p208
        $region74: #{tpu_custom_call.1} parent=55 // pred_check_branch
          %388 = sbr.rel (%p386) target = $region76
        $region75: #{tpu_custom_call.1} parent=55 // pred_region
          %389 = dma.done [#allocation13], 256
        $region76: #{tpu_custom_call.1} parent=55 // pred_fallthru
          _
        %s390 = sand.u32 %s48, 1
        %s391 = scalar_lea.sflag [#allocation7], %s390
        %s392 = sand.u32 %s48, 1
        %s393 = smul.addr %s392, 4
        %s394 = scalar_lea.vmem [#allocation6], %s393
        %p395 = pneg %p61
        %p396 = pneg %p58
        %p397 = pneg %p82
        %p398 = pneg %p79
        %p399 = pneg %p103
        %p400 = pneg %p100
        %p401 = pneg %p124
        %p402 = pneg %p121
        %p403 = pneg %p145
        %p404 = pneg %p142
        %p405 = pneg %p166
        %p406 = pneg %p163
        %p407 = pneg %p187
        %p408 = pneg %p184
        %p409 = pneg %p208
        %p410 = pneg %p205
        %p411 = pneg %p229
        %p412 = pneg %p226
        %p413 = pneg %p257
        %p414 = pneg %p254
        %s415 = sand.u32 %s244, 1
        %s416 = scalar_lea.sflag [#allocation8], %s415
        %s417 = sand.u32 %s244, 1
        %s418 = smul.addr %s417, 8
        %s419 = scalar_lea.vmem [#allocation15], %s418
        %p421 = scmp.eq.s32.totalorder %s33, 0
        // Predicated region
        $region77: #{tpu_custom_call.1} parent=55 // pred_check
          %p422 = pneg %p421
        $region78: #{tpu_custom_call.1} parent=55 // pred_check_branch
          %424 = sbr.rel (%p422) target = $region80
        $region79: #{tpu_custom_call.1} parent=55 // pred_region
          %v425 = vld [vmem:[%s369] sm:$0xf]
          %v426 = vld [vmem:[#allocation11] sm:$0xf]
          %v427 = vld [vmem:[#allocation11 + $0x4] sm:$0xf]
          %v428 = vld [vmem:[#allocation11 + $0x8] sm:$0xf]
          %v429 = vld [vmem:[#allocation11 + $0xc] sm:$0xf]
          %v430 = vld [vmem:[%s4] sm:$0x1]
          %v432 = vlaneseq
          %v433 = vshrl.u32 %v432, 7
          %v434 = vsub.s32 0, %v433
          %v435 = vrot.slane %v430, %v434
          %v441 = vunpack.c.l.b16 %v426
          %v442 = vunpack.c.l.b16 %v427
          %v443 = vunpack.c.l.b16 %v428
          %v444 = vunpack.c.l.b16 %v429
          %v445 = vpack.c.b16 %v442, %v441
          %v446 = vpack.c.b16 %v444, %v443
          %vm449 = vcmask 261120
          %v451 = vsel %vm449, %v425, 0
          %453 = vmatprep.subr.bf16.mxu0 0
          %454 = vmatpush1.bf16.msra.mxu0 0
          %455 = vmatprep.subr.bf16.mxu0 0
          %456 = vmatpush1.bf16.msra.mxu0 0
          %457 = vmatprep.subr.bf16.mxu0 0
          %458 = vmatpush1.bf16.msra.mxu0 0
          %459 = vmatprep.subr.bf16.mxu0 0
          %460 = vmatpush1.bf16.msra.mxu0 0
          %461 = vmatprep.subr.bf16.mxu0 0
          %462 = vmatpush1.bf16.msra.mxu0 0
          %463 = vmatprep.subr.bf16.mxu0 0
          %464 = vmatpush1.bf16.msra.mxu0 0
          %465 = vmatprep.subr.bf16.mxu0 0
          %466 = vmatpush1.bf16.msra.mxu0 %v446
          %467 = vmatprep.subr.bf16.mxu0 0
          %468 = vmatpush1.bf16.msra.mxu0 %v445
          %469 = vmatprep.subr.bf16.mxu0 0
          %470 = vmatpush2.bf16.msra.mxu0 0
          %471 = vmatprep.subr.bf16.mxu0 0
          %472 = vmatpush2.bf16.msra.mxu0 0
          %473 = vmatprep.subr.bf16.mxu0 0
          %474 = vmatpush2.bf16.msra.mxu0 0
          %475 = vmatprep.subr.bf16.mxu0 0
          %476 = vmatpush2.bf16.msra.mxu0 0
          %477 = vmatprep.subr.bf16.mxu0 0
          %478 = vmatpush2.bf16.msra.mxu0 0
          %479 = vmatprep.subr.bf16.mxu0 0
          %480 = vmatpush2.bf16.msra.mxu0 0
          %481 = vmatprep.subr.bf16.mxu0 0
          %482 = vmatpush2.bf16.msra.mxu0 0
          %483 = vmatprep.subr.bf16.mxu0 0
          %484 = vmatpush2.bf16.msra.mxu0 0
          %485 = vmatprep.mubr.bf16.mxu0 0
          %486 = vmatmul.mubr.bf16.gmra.mxu0 %v451
          %v487 = vpop.f32.mrf.mxu0
          %v488 = vadd.f32 %v435, %v487
          %v489 = vpop.f32.mrf.mxu0
          %v490 = vpop.f32.mrf.mxu0
          %v491 = vpop.f32.mrf.mxu0
          %492 = vdwg.mxu0
          %v493 = vld [vmem:[#allocation12] sm:$0xf]
          %v494 = vld [vmem:[#allocation12 + $0x4] sm:$0xf]
          %v495 = vld [vmem:[#allocation12 + $0x8] sm:$0xf]
          %v496 = vld [vmem:[#allocation12 + $0xc] sm:$0xf]
          %v497 = vld [vmem:[%s6] sm:$0x1]
          %v499 = vlaneseq
          %v500 = vshrl.u32 %v499, 7
          %v501 = vsub.s32 0, %v500
          %v502 = vrot.slane %v497, %v501
          %v508 = vunpack.c.l.b16 %v493
          %v509 = vunpack.c.l.b16 %v494
          %v510 = vunpack.c.l.b16 %v495
          %v511 = vunpack.c.l.b16 %v496
          %v512 = vpack.c.b16 %v509, %v508
          %v513 = vpack.c.b16 %v511, %v510
          %516 = vmatprep.subr.bf16.mxu0 0
          %517 = vmatpush1.bf16.msra.mxu0 0
          %518 = vmatprep.subr.bf16.mxu0 0
          %519 = vmatpush1.bf16.msra.mxu0 0
          %520 = vmatprep.subr.bf16.mxu0 0
          %521 = vmatpush1.bf16.msra.mxu0 0
          %522 = vmatprep.subr.bf16.mxu0 0
          %523 = vmatpush1.bf16.msra.mxu0 0
          %524 = vmatprep.subr.bf16.mxu0 0
          %525 = vmatpush1.bf16.msra.mxu0 0
          %526 = vmatprep.subr.bf16.mxu0 0
          %527 = vmatpush1.bf16.msra.mxu0 0
          %528 = vmatprep.subr.bf16.mxu0 0
          %529 = vmatpush1.bf16.msra.mxu0 %v513
          %530 = vmatprep.subr.bf16.mxu0 0
          %531 = vmatpush1.bf16.msra.mxu0 %v512
          %532 = vmatprep.subr.bf16.mxu0 0
          %533 = vmatpush2.bf16.msra.mxu0 0
          %534 = vmatprep.subr.bf16.mxu0 0
          %535 = vmatpush2.bf16.msra.mxu0 0
          %536 = vmatprep.subr.bf16.mxu0 0
          %537 = vmatpush2.bf16.msra.mxu0 0
          %538 = vmatprep.subr.bf16.mxu0 0
          %539 = vmatpush2.bf16.msra.mxu0 0
          %540 = vmatprep.subr.bf16.mxu0 0
          %541 = vmatpush2.bf16.msra.mxu0 0
          %542 = vmatprep.subr.bf16.mxu0 0
          %543 = vmatpush2.bf16.msra.mxu0 0
          %544 = vmatprep.subr.bf16.mxu0 0
          %545 = vmatpush2.bf16.msra.mxu0 0
          %546 = vmatprep.subr.bf16.mxu0 0
          %547 = vmatpush2.bf16.msra.mxu0 0
          %548 = vmatprep.mubr.bf16.mxu0 0
          %549 = vmatmul.mubr.bf16.gmra.mxu0 %v451
          %v550 = vpop.f32.mrf.mxu0
          %v551 = vadd.f32 %v502, %v550
          %v552 = vpop.f32.mrf.mxu0
          %v553 = vpop.f32.mrf.mxu0
          %v554 = vpop.f32.mrf.mxu0
          %555 = vdwg.mxu0
          %556 = vxpose.xlu0.b32.start [1/16] %v488, 128
          %557 = vxpose.xlu0.b32.cont [2/16] 0.0, 128
          %558 = vxpose.xlu0.b32.cont [3/16] 0.0, 128
          %559 = vxpose.xlu0.b32.cont [4/16] 0.0, 128
          %560 = vxpose.xlu0.b32.cont [5/16] 0.0, 128
          %561 = vxpose.xlu0.b32.cont [6/16] 0.0, 128
          %562 = vxpose.xlu0.b32.cont [7/16] 0.0, 128
          %563 = vxpose.xlu0.b32.cont [8/16] 0.0, 128
          %564 = vxpose.xlu0.b32.cont [9/16] 0.0, 128
          %565 = vxpose.xlu0.b32.cont [10/16] 0.0, 128
          %566 = vxpose.xlu0.b32.cont [11/16] 0.0, 128
          %567 = vxpose.xlu0.b32.cont [12/16] 0.0, 128
          %568 = vxpose.xlu0.b32.cont [13/16] 0.0, 128
          %569 = vxpose.xlu0.b32.cont [14/16] 0.0, 128
          %570 = vxpose.xlu0.b32.cont [15/16] 0.0, 128
          %571 = vxpose.xlu0.b32.end [16/16] 0.0, 128
          %v572 = vpop.trf.xlu0
          %v573 = vpop.trf.xlu0
          %v574 = vpop.trf.xlu0
          %v575 = vpop.trf.xlu0
          %v576 = vpop.trf.xlu0
          %v577 = vpop.trf.xlu0
          %v578 = vpop.trf.xlu0
          %v579 = vpop.trf.xlu0
          %v580 = vpop.trf.xlu0
          %v581 = vpop.trf.xlu0
          %v582 = vpop.trf.xlu0
          %v583 = vpop.trf.xlu0
          %v584 = vpop.trf.xlu0
          %v585 = vpop.trf.xlu0
          %v586 = vpop.trf.xlu0
          %v587 = vpop.trf.xlu0
          %v588 = vpack.c.bf16 %v572, %v572
          %vm589 = vcmask 60416
          %590 = vst.msk [vmem:[#allocation3] sm:$0xf] %vm589, %v588
          %v591 = vpack.c.bf16 %v551, %v551
          %592 = vst.msk [vmem:[#allocation4] sm:$0xf] %vm589, %v591
          %594 = vrot.lane.b32.xlu0 %v488, 120
          %v595 = vpop.permute.xlu0 %594
          %597 = vxpose.xlu0.b32.start [1/16] %v595, 128
          %598 = vxpose.xlu0.b32.cont [2/16] 0.0, 128
          %599 = vxpose.xlu0.b32.cont [3/16] 0.0, 128
          %600 = vxpose.xlu0.b32.cont [4/16] 0.0, 128
          %601 = vxpose.xlu0.b32.cont [5/16] 0.0, 128
          %602 = vxpose.xlu0.b32.cont [6/16] 0.0, 128
          %603 = vxpose.xlu0.b32.cont [7/16] 0.0, 128
          %604 = vxpose.xlu0.b32.cont [8/16] 0.0, 128
          %605 = vxpose.xlu0.b32.cont [9/16] 0.0, 128
          %606 = vxpose.xlu0.b32.cont [10/16] 0.0, 128
          %607 = vxpose.xlu0.b32.cont [11/16] 0.0, 128
          %608 = vxpose.xlu0.b32.cont [12/16] 0.0, 128
          %609 = vxpose.xlu0.b32.cont [13/16] 0.0, 128
          %610 = vxpose.xlu0.b32.cont [14/16] 0.0, 128
          %611 = vxpose.xlu0.b32.cont [15/16] 0.0, 128
          %612 = vxpose.xlu0.b32.end [16/16] 0.0, 128
          %v613 = vpop.trf.xlu0
          %v614 = vpop.trf.xlu0
          %v615 = vpop.trf.xlu0
          %v616 = vpop.trf.xlu0
          %v617 = vpop.trf.xlu0
          %v618 = vpop.trf.xlu0
          %v619 = vpop.trf.xlu0
          %v620 = vpop.trf.xlu0
          %v621 = vpop.trf.xlu0
          %v622 = vpop.trf.xlu0
          %v623 = vpop.trf.xlu0
          %v624 = vpop.trf.xlu0
          %v625 = vpop.trf.xlu0
          %v626 = vpop.trf.xlu0
          %v627 = vpop.trf.xlu0
          %v628 = vpop.trf.xlu0
          %v629 = vpack.c.bf16 %v613, %v613
          %s630 = scalar_lea.vmem [#allocation3], 4
          %631 = vst.msk [vmem:[%s630] sm:$0xf] %vm589, %v629
          %v633 = vunpack.c.l.b16 %v591
          %v634 = vpack.c.b16 %v633, %v633
          %635 = vrot.lane.b32.xlu0 %v634, 120
          %v636 = vpop.permute.xlu0 %635
          %s638 = scalar_lea.vmem [#allocation4], 4
          %639 = vst.msk [vmem:[%s638] sm:$0xf] %vm589, %v636
          %640 = vrot.lane.b32.xlu0 %v488, 112
          %v641 = vpop.permute.xlu0 %640
          %643 = vxpose.xlu0.b32.start [1/16] %v641, 128
          %644 = vxpose.xlu0.b32.cont [2/16] 0.0, 128
          %645 = vxpose.xlu0.b32.cont [3/16] 0.0, 128
          %646 = vxpose.xlu0.b32.cont [4/16] 0.0, 128
          %647 = vxpose.xlu0.b32.cont [5/16] 0.0, 128
          %648 = vxpose.xlu0.b32.cont [6/16] 0.0, 128
          %649 = vxpose.xlu0.b32.cont [7/16] 0.0, 128
          %650 = vxpose.xlu0.b32.cont [8/16] 0.0, 128
          %651 = vxpose.xlu0.b32.cont [9/16] 0.0, 128
          %652 = vxpose.xlu0.b32.cont [10/16] 0.0, 128
          %653 = vxpose.xlu0.b32.cont [11/16] 0.0, 128
          %654 = vxpose.xlu0.b32.cont [12/16] 0.0, 128
          %655 = vxpose.xlu0.b32.cont [13/16] 0.0, 128
          %656 = vxpose.xlu0.b32.cont [14/16] 0.0, 128
          %657 = vxpose.xlu0.b32.cont [15/16] 0.0, 128
          %658 = vxpose.xlu0.b32.end [16/16] 0.0, 128
          %v659 = vpop.trf.xlu0
          %v660 = vpop.trf.xlu0
          %v661 = vpop.trf.xlu0
          %v662 = vpop.trf.xlu0
          %v663 = vpop.trf.xlu0
          %v664 = vpop.trf.xlu0
          %v665 = vpop.trf.xlu0
          %v666 = vpop.trf.xlu0
          %v667 = vpop.trf.xlu0
          %v668 = vpop.trf.xlu0
          %v669 = vpop.trf.xlu0
          %v670 = vpop.trf.xlu0
          %v671 = vpop.trf.xlu0
          %v672 = vpop.trf.xlu0
          %v673 = vpop.trf.xlu0
          %v674 = vpop.trf.xlu0
          %v675 = vpack.c.bf16 %v659, %v659
          %s676 = scalar_lea.vmem [#allocation3], 8
          %677 = vst.msk [vmem:[%s676] sm:$0xf] %vm589, %v675
          %678 = vrot.lane.b32.xlu0 %v634, 112
          %v679 = vpop.permute.xlu0 %678
          %s681 = scalar_lea.vmem [#allocation4], 8
          %682 = vst.msk [vmem:[%s681] sm:$0xf] %vm589, %v679
          %683 = vrot.lane.b32.xlu0 %v488, 104
          %v684 = vpop.permute.xlu0 %683
          %686 = vxpose.xlu0.b32.start [1/16] %v684, 128
          %687 = vxpose.xlu0.b32.cont [2/16] 0.0, 128
          %688 = vxpose.xlu0.b32.cont [3/16] 0.0, 128
          %689 = vxpose.xlu0.b32.cont [4/16] 0.0, 128
          %690 = vxpose.xlu0.b32.cont [5/16] 0.0, 128
          %691 = vxpose.xlu0.b32.cont [6/16] 0.0, 128
          %692 = vxpose.xlu0.b32.cont [7/16] 0.0, 128
          %693 = vxpose.xlu0.b32.cont [8/16] 0.0, 128
          %694 = vxpose.xlu0.b32.cont [9/16] 0.0, 128
          %695 = vxpose.xlu0.b32.cont [10/16] 0.0, 128
          %696 = vxpose.xlu0.b32.cont [11/16] 0.0, 128
          %697 = vxpose.xlu0.b32.cont [12/16] 0.0, 128
          %698 = vxpose.xlu0.b32.cont [13/16] 0.0, 128
          %699 = vxpose.xlu0.b32.cont [14/16] 0.0, 128
          %700 = vxpose.xlu0.b32.cont [15/16] 0.0, 128
          %701 = vxpose.xlu0.b32.end [16/16] 0.0, 128
          %v702 = vpop.trf.xlu0
          %v703 = vpop.trf.xlu0
          %v704 = vpop.trf.xlu0
          %v705 = vpop.trf.xlu0
          %v706 = vpop.trf.xlu0
          %v707 = vpop.trf.xlu0
          %v708 = vpop.trf.xlu0
          %v709 = vpop.trf.xlu0
          %v710 = vpop.trf.xlu0
          %v711 = vpop.trf.xlu0
          %v712 = vpop.trf.xlu0
          %v713 = vpop.trf.xlu0
          %v714 = vpop.trf.xlu0
          %v715 = vpop.trf.xlu0
          %v716 = vpop.trf.xlu0
          %v717 = vpop.trf.xlu0
          %v718 = vpack.c.bf16 %v702, %v702
          %s719 = scalar_lea.vmem [#allocation3], 12
          %720 = vst.msk [vmem:[%s719] sm:$0xf] %vm589, %v718
          %721 = vrot.lane.b32.xlu0 %v634, 104
          %v722 = vpop.permute.xlu0 %721
          %s724 = scalar_lea.vmem [#allocation4], 12
          %725 = vst.msk [vmem:[%s724] sm:$0xf] %vm589, %v722
        $region80: #{tpu_custom_call.1} parent=55 // pred_fallthru
          _
        %s726 = smul.u32 %s33, 8
        %s727 = sshra.s32 %s726, 3
        %s728 = sand.u32 %s726, 7
        %s729 = smul.addr %s727, 4
        %s730 = scalar_lea.vmem %s369, %s729 [#allocation6]
        %v731 = vld [vmem:[%s730] sm:$0xf]
        %v732 = vld [vmem:[#allocation9] sm:$0xf]
        %v733 = vld [vmem:[#allocation9 + $0x4] sm:$0xf]
        %v734 = vld [vmem:[#allocation9 + $0x8] sm:$0xf]
        %v735 = vld [vmem:[#allocation9 + $0xc] sm:$0xf]
        %v736 = vld [vmem:[%s2] sm:$0x1]
        %v738 = vlaneseq
        %v739 = vshrl.u32 %v738, 7
        %v740 = vsub.s32 0, %v739
        %v741 = vrot.slane %v736, %v740
        %v747 = vunpack.c.l.b16 %v732
        %v748 = vunpack.c.l.b16 %v733
        %v749 = vunpack.c.l.b16 %v734
        %v750 = vunpack.c.l.b16 %v735
        %v751 = vpack.c.b16 %v748, %v747
        %v752 = vpack.c.b16 %v750, %v749
        %vm755 = vcmask 261120
        %v757 = vsel %vm755, %v731, 0
        %759 = vmatprep.subr.bf16.mxu0 0
        %760 = vmatpush1.bf16.msra.mxu0 0
        %761 = vmatprep.subr.bf16.mxu0 0
        %762 = vmatpush1.bf16.msra.mxu0 0
        %763 = vmatprep.subr.bf16.mxu0 0
        %764 = vmatpush1.bf16.msra.mxu0 0
        %765 = vmatprep.subr.bf16.mxu0 0
        %766 = vmatpush1.bf16.msra.mxu0 0
        %767 = vmatprep.subr.bf16.mxu0 0
        %768 = vmatpush1.bf16.msra.mxu0 0
        %769 = vmatprep.subr.bf16.mxu0 0
        %770 = vmatpush1.bf16.msra.mxu0 0
        %771 = vmatprep.subr.bf16.mxu0 0
        %772 = vmatpush1.bf16.msra.mxu0 %v752
        %773 = vmatprep.subr.bf16.mxu0 0
        %774 = vmatpush1.bf16.msra.mxu0 %v751
        %775 = vmatprep.subr.bf16.mxu0 0
        %776 = vmatpush2.bf16.msra.mxu0 0
        %777 = vmatprep.subr.bf16.mxu0 0
        %778 = vmatpush2.bf16.msra.mxu0 0
        %779 = vmatprep.subr.bf16.mxu0 0
        %780 = vmatpush2.bf16.msra.mxu0 0
        %781 = vmatprep.subr.bf16.mxu0 0
        %782 = vmatpush2.bf16.msra.mxu0 0
        %783 = vmatprep.subr.bf16.mxu0 0
        %784 = vmatpush2.bf16.msra.mxu0 0
        %785 = vmatprep.subr.bf16.mxu0 0
        %786 = vmatpush2.bf16.msra.mxu0 0
        %787 = vmatprep.subr.bf16.mxu0 0
        %788 = vmatpush2.bf16.msra.mxu0 0
        %789 = vmatprep.subr.bf16.mxu0 0
        %790 = vmatpush2.bf16.msra.mxu0 0
        %791 = vmatprep.mubr.bf16.mxu0 0
        %792 = vmatmul.mubr.bf16.gmra.mxu0 %v757
        %v793 = vpop.f32.mrf.mxu0
        %v794 = vadd.f32 %v741, %v793
        %v795 = vpop.f32.mrf.mxu0
        %v796 = vpop.f32.mrf.mxu0
        %v797 = vpop.f32.mrf.mxu0
        %798 = vdwg.mxu0
        %v799 = vmul.f32 %v794, 0.35355338
        %v800 = vpack.c.bf16 %v799, %v799
        %vm801 = vcmask 60416
        %802 = vst.msk [vmem:[#allocation2] sm:$0xf] %vm801, %v800
        %v804 = vunpack.c.l.b16 %v800
        %v805 = vpack.c.b16 %v804, %v804
        %806 = vrot.lane.b32.xlu0 %v805, 120
        %v807 = vpop.permute.xlu0 %806
        %s809 = scalar_lea.vmem [#allocation2], 4
        %810 = vst.msk [vmem:[%s809] sm:$0xf] %vm801, %v807
        %811 = vrot.lane.b32.xlu0 %v805, 112
        %v812 = vpop.permute.xlu0 %811
        %s814 = scalar_lea.vmem [#allocation2], 8
        %815 = vst.msk [vmem:[%s814] sm:$0xf] %vm801, %v812
        %816 = vrot.lane.b32.xlu0 %v805, 104
        %v817 = vpop.permute.xlu0 %816
        %s819 = scalar_lea.vmem [#allocation2], 12
        %820 = vst.msk [vmem:[%s819] sm:$0xf] %vm801, %v817
        %v821 = vld [vmem:[#allocation2] sm:$0xf]
        %v822 = vld [vmem:[#allocation2 + $0x4] sm:$0xf]
        %v823 = vld [vmem:[#allocation2 + $0x8] sm:$0xf]
        %v824 = vld [vmem:[#allocation2 + $0xc] sm:$0xf]
        %v825 = vld [vmem:[#allocation3] sm:$0xf]
        %v826 = vld [vmem:[#allocation3 + $0x4] sm:$0xf]
        %v827 = vld [vmem:[#allocation3 + $0x8] sm:$0xf]
        %v828 = vld [vmem:[#allocation3 + $0xc] sm:$0xf]
        %v829 = vld [vmem:[#allocation4] sm:$0xf]
        %v830 = vld [vmem:[#allocation4 + $0x4] sm:$0xf]
        %v831 = vld [vmem:[#allocation4 + $0x8] sm:$0xf]
        %v832 = vld [vmem:[#allocation4 + $0xc] sm:$0xf]
        %vm833 = vcmask 64512
        %v835 = vsel %vm833, %v821, 0
        %vm837 = vcmask 1043456
        %v839 = vsel %vm837, %v825, 0
        %841 = vmatprep.subr.bf16.mxu0 0
        %842 = vmatpush1.bf16.msra.mxu0 0
        %843 = vmatprep.subr.bf16.mxu0 0
        %844 = vmatpush1.bf16.msra.mxu0 0
        %845 = vmatprep.subr.bf16.mxu0 0
        %846 = vmatpush1.bf16.msra.mxu0 0
        %847 = vmatprep.subr.bf16.mxu0 0
        %848 = vmatpush1.bf16.msra.mxu0 0
        %849 = vmatprep.subr.bf16.mxu0 0
        %850 = vmatpush1.bf16.msra.mxu0 0
        %851 = vmatprep.subr.bf16.mxu0 0
        %852 = vmatpush1.bf16.msra.mxu0 0
        %853 = vmatprep.subr.bf16.mxu0 0
        %854 = vmatpush1.bf16.msra.mxu0 0
        %855 = vmatprep.subr.bf16.mxu0 0
        %856 = vmatpush1.bf16.msra.mxu0 %v839
        %857 = vmatprep.subr.bf16.mxu0 0
        %858 = vmatpush2.bf16.msra.mxu0 0
        %859 = vmatprep.subr.bf16.mxu0 0
        %860 = vmatpush2.bf16.msra.mxu0 0
        %861 = vmatprep.subr.bf16.mxu0 0
        %862 = vmatpush2.bf16.msra.mxu0 0
        %863 = vmatprep.subr.bf16.mxu0 0
        %864 = vmatpush2.bf16.msra.mxu0 0
        %865 = vmatprep.subr.bf16.mxu0 0
        %866 = vmatpush2.bf16.msra.mxu0 0
        %867 = vmatprep.subr.bf16.mxu0 0
        %868 = vmatpush2.bf16.msra.mxu0 0
        %869 = vmatprep.subr.bf16.mxu0 0
        %870 = vmatpush2.bf16.msra.mxu0 0
        %871 = vmatprep.subr.bf16.mxu0 0
        %872 = vmatpush2.bf16.msra.mxu0 0
        %873 = vmatprep.mubr.bf16.mxu0 0
        %874 = vmatmul.mubr.bf16.gmra.mxu0 %v835
        %v875 = vpop.f32.mrf.mxu0
        %v876 = vadd.f32 0.0, %v875
        %v877 = vpop.f32.mrf.mxu0
        %v878 = vpop.f32.mrf.mxu0
        %v879 = vpop.f32.mrf.mxu0
        %880 = vdwg.mxu0
        %v882 = vsel %vm833, %v822, 0
        %v885 = vsel %vm837, %v826, 0
        %887 = vmatprep.subr.bf16.mxu0 0
        %888 = vmatpush1.bf16.msra.mxu0 0
        %889 = vmatprep.subr.bf16.mxu0 0
        %890 = vmatpush1.bf16.msra.mxu0 0
        %891 = vmatprep.subr.bf16.mxu0 0
        %892 = vmatpush1.bf16.msra.mxu0 0
        %893 = vmatprep.subr.bf16.mxu0 0
        %894 = vmatpush1.bf16.msra.mxu0 0
        %895 = vmatprep.subr.bf16.mxu0 0
        %896 = vmatpush1.bf16.msra.mxu0 0
        %897 = vmatprep.subr.bf16.mxu0 0
        %898 = vmatpush1.bf16.msra.mxu0 0
        %899 = vmatprep.subr.bf16.mxu0 0
        %900 = vmatpush1.bf16.msra.mxu0 0
        %901 = vmatprep.subr.bf16.mxu0 0
        %902 = vmatpush1.bf16.msra.mxu0 %v885
        %903 = vmatprep.subr.bf16.mxu0 0
        %904 = vmatpush2.bf16.msra.mxu0 0
        %905 = vmatprep.subr.bf16.mxu0 0
        %906 = vmatpush2.bf16.msra.mxu0 0
        %907 = vmatprep.subr.bf16.mxu0 0
        %908 = vmatpush2.bf16.msra.mxu0 0
        %909 = vmatprep.subr.bf16.mxu0 0
        %910 = vmatpush2.bf16.msra.mxu0 0
        %911 = vmatprep.subr.bf16.mxu0 0
        %912 = vmatpush2.bf16.msra.mxu0 0
        %913 = vmatprep.subr.bf16.mxu0 0
        %914 = vmatpush2.bf16.msra.mxu0 0
        %915 = vmatprep.subr.bf16.mxu0 0
        %916 = vmatpush2.bf16.msra.mxu0 0
        %917 = vmatprep.subr.bf16.mxu0 0
        %918 = vmatpush2.bf16.msra.mxu0 0
        %919 = vmatprep.mubr.bf16.mxu0 0
        %920 = vmatmul.mubr.bf16.gmra.mxu0 %v882
        %v921 = vpop.f32.mrf.mxu0
        %v922 = vadd.f32 0.0, %v921
        %v923 = vpop.f32.mrf.mxu0
        %v924 = vpop.f32.mrf.mxu0
        %v925 = vpop.f32.mrf.mxu0
        %926 = vdwg.mxu0
        %v928 = vsel %vm833, %v823, 0
        %v931 = vsel %vm837, %v827, 0
        %933 = vmatprep.subr.bf16.mxu0 0
        %934 = vmatpush1.bf16.msra.mxu0 0
        %935 = vmatprep.subr.bf16.mxu0 0
        %936 = vmatpush1.bf16.msra.mxu0 0
        %937 = vmatprep.subr.bf16.mxu0 0
        %938 = vmatpush1.bf16.msra.mxu0 0
        %939 = vmatprep.subr.bf16.mxu0 0
        %940 = vmatpush1.bf16.msra.mxu0 0
        %941 = vmatprep.subr.bf16.mxu0 0
        %942 = vmatpush1.bf16.msra.mxu0 0
        %943 = vmatprep.subr.bf16.mxu0 0
        %944 = vmatpush1.bf16.msra.mxu0 0
        %945 = vmatprep.subr.bf16.mxu0 0
        %946 = vmatpush1.bf16.msra.mxu0 0
        %947 = vmatprep.subr.bf16.mxu0 0
        %948 = vmatpush1.bf16.msra.mxu0 %v931
        %949 = vmatprep.subr.bf16.mxu0 0
        %950 = vmatpush2.bf16.msra.mxu0 0
        %951 = vmatprep.subr.bf16.mxu0 0
        %952 = vmatpush2.bf16.msra.mxu0 0
        %953 = vmatprep.subr.bf16.mxu0 0
        %954 = vmatpush2.bf16.msra.mxu0 0
        %955 = vmatprep.subr.bf16.mxu0 0
        %956 = vmatpush2.bf16.msra.mxu0 0
        %957 = vmatprep.subr.bf16.mxu0 0
        %958 = vmatpush2.bf16.msra.mxu0 0
        %959 = vmatprep.subr.bf16.mxu0 0
        %960 = vmatpush2.bf16.msra.mxu0 0
        %961 = vmatprep.subr.bf16.mxu0 0
        %962 = vmatpush2.bf16.msra.mxu0 0
        %963 = vmatprep.subr.bf16.mxu0 0
        %964 = vmatpush2.bf16.msra.mxu0 0
        %965 = vmatprep.mubr.bf16.mxu0 0
        %966 = vmatmul.mubr.bf16.gmra.mxu0 %v928
        %v967 = vpop.f32.mrf.mxu0
        %v968 = vadd.f32 0.0, %v967
        %v969 = vpop.f32.mrf.mxu0
        %v970 = vpop.f32.mrf.mxu0
        %v971 = vpop.f32.mrf.mxu0
        %972 = vdwg.mxu0
        %v974 = vsel %vm833, %v824, 0
        %v977 = vsel %vm837, %v828, 0
        %979 = vmatprep.subr.bf16.mxu0 0
        %980 = vmatpush1.bf16.msra.mxu0 0
        %981 = vmatprep.subr.bf16.mxu0 0
        %982 = vmatpush1.bf16.msra.mxu0 0
        %983 = vmatprep.subr.bf16.mxu0 0
        %984 = vmatpush1.bf16.msra.mxu0 0
        %985 = vmatprep.subr.bf16.mxu0 0
        %986 = vmatpush1.bf16.msra.mxu0 0
        %987 = vmatprep.subr.bf16.mxu0 0
        %988 = vmatpush1.bf16.msra.mxu0 0
        %989 = vmatprep.subr.bf16.mxu0 0
        %990 = vmatpush1.bf16.msra.mxu0 0
        %991 = vmatprep.subr.bf16.mxu0 0
        %992 = vmatpush1.bf16.msra.mxu0 0
        %993 = vmatprep.subr.bf16.mxu0 0
        %994 = vmatpush1.bf16.msra.mxu0 %v977
        %995 = vmatprep.subr.bf16.mxu0 0
        %996 = vmatpush2.bf16.msra.mxu0 0
        %997 = vmatprep.subr.bf16.mxu0 0
        %998 = vmatpush2.bf16.msra.mxu0 0
        %999 = vmatprep.subr.bf16.mxu0 0
        %1000 = vmatpush2.bf16.msra.mxu0 0
        %1001 = vmatprep.subr.bf16.mxu0 0
        %1002 = vmatpush2.bf16.msra.mxu0 0
        %1003 = vmatprep.subr.bf16.mxu0 0
        %1004 = vmatpush2.bf16.msra.mxu0 0
        %1005 = vmatprep.subr.bf16.mxu0 0
        %1006 = vmatpush2.bf16.msra.mxu0 0
        %1007 = vmatprep.subr.bf16.mxu0 0
        %1008 = vmatpush2.bf16.msra.mxu0 0
        %1009 = vmatprep.subr.bf16.mxu0 0
        %1010 = vmatpush2.bf16.msra.mxu0 0
        %1011 = vmatprep.mubr.bf16.mxu0 0
        %1012 = vmatmul.mubr.bf16.gmra.mxu0 %v974
        %v1013 = vpop.f32.mrf.mxu0
        %v1014 = vadd.f32 0.0, %v1013
        %v1015 = vpop.f32.mrf.mxu0
        %v1016 = vpop.f32.mrf.mxu0
        %v1017 = vpop.f32.mrf.mxu0
        %1018 = vdwg.mxu0
        %v1019 = vsel %vm833, %v876, -inf
        %1020 = vmax.xlane.f32.xlu0 %v1019
        %v1021 = vpop.xlane.xlu0 %1020
        %v1022 = vsel %vm833, %v922, -inf
        %1023 = vmax.xlane.f32.xlu0 %v1022
        %v1024 = vpop.xlane.xlu0 %1023
        %v1025 = vsel %vm833, %v968, -inf
        %1026 = vmax.xlane.f32.xlu0 %v1025
        %v1027 = vpop.xlane.xlu0 %1026
        %v1028 = vsel %vm833, %v1014, -inf
        %1029 = vmax.xlane.f32.xlu0 %v1028
        %v1030 = vpop.xlane.xlu0 %1029
        %v1031 = vsub.f32 %v876, %v1021
        %v1032 = vsub.f32 %v922, %v1024
        %v1033 = vsub.f32 %v968, %v1027
        %v1034 = vsub.f32 %v1014, %v1030
        %v1035 = vmul.f32 %v1031, 1.442695
        %v1036 = vpow.pop %v1035
        %v1037 = vmul.f32 %v1032, 1.442695
        %v1038 = vpow.pop %v1037
        %v1039 = vmul.f32 %v1033, 1.442695
        %v1040 = vpow.pop %v1039
        %v1041 = vmul.f32 %v1034, 1.442695
        %v1042 = vpow.pop %v1041
        %v1043 = vsel %vm833, %v1036, 0.0
        %1044 = vadd.xlane.f32.xlu0 %v1043
        %v1045 = vpop.xlane.xlu0 %1044
        %v1046 = vsel %vm833, %v1038, 0.0
        %1047 = vadd.xlane.f32.xlu0 %v1046
        %v1048 = vpop.xlane.xlu0 %1047
        %v1049 = vsel %vm833, %v1040, 0.0
        %1050 = vadd.xlane.f32.xlu0 %v1049
        %v1051 = vpop.xlane.xlu0 %1050
        %v1052 = vsel %vm833, %v1042, 0.0
        %1053 = vadd.xlane.f32.xlu0 %v1052
        %v1054 = vpop.xlane.xlu0 %1053
        %v1055 = vrcp.pop %v1045
        %v1056 = vrcp.pop %v1048
        %v1057 = vrcp.pop %v1051
        %v1058 = vrcp.pop %v1054
        %v1059 = vmul.f32 %v1036, %v1055
        %v1060 = vmul.f32 %v1038, %v1056
        %v1061 = vmul.f32 %v1040, %v1057
        %v1062 = vmul.f32 %v1042, %v1058
        %v1063 = vpack.c.bf16 %v1059, %v1059
        %v1064 = vpack.c.bf16 %v1060, %v1060
        %v1065 = vpack.c.bf16 %v1061, %v1061
        %v1066 = vpack.c.bf16 %v1062, %v1062
        %v1068 = vsel %vm833, %v1063, 0
        %v1071 = vsel %vm837, %v829, 0
        %1073 = vmatprep.subr.bf16.mxu0 0
        %1074 = vmatpush1.bf16.msra.mxu0 0
        %1075 = vmatprep.subr.bf16.mxu0 0
        %1076 = vmatpush1.bf16.msra.mxu0 0
        %1077 = vmatprep.subr.bf16.mxu0 0
        %1078 = vmatpush1.bf16.msra.mxu0 0
        %1079 = vmatprep.subr.bf16.mxu0 0
        %1080 = vmatpush1.bf16.msra.mxu0 0
        %1081 = vmatprep.subr.bf16.mxu0 0
        %1082 = vmatpush1.bf16.msra.mxu0 0
        %1083 = vmatprep.subr.bf16.mxu0 0
        %1084 = vmatpush1.bf16.msra.mxu0 0
        %1085 = vmatprep.subr.bf16.mxu0 0
        %1086 = vmatpush1.bf16.msra.mxu0 0
        %1087 = vmatprep.subr.bf16.mxu0 0
        %1088 = vmatpush1.bf16.msra.mxu0 %v1071
        %1089 = vmatprep.subr.bf16.mxu0 0
        %1090 = vmatpush2.bf16.msra.mxu0 0
        %1091 = vmatprep.subr.bf16.mxu0 0
        %1092 = vmatpush2.bf16.msra.mxu0 0
        %1093 = vmatprep.subr.bf16.mxu0 0
        %1094 = vmatpush2.bf16.msra.mxu0 0
        %1095 = vmatprep.subr.bf16.mxu0 0
        %1096 = vmatpush2.bf16.msra.mxu0 0
        %1097 = vmatprep.subr.bf16.mxu0 0
        %1098 = vmatpush2.bf16.msra.mxu0 0
        %1099 = vmatprep.subr.bf16.mxu0 0
        %1100 = vmatpush2.bf16.msra.mxu0 0
        %1101 = vmatprep.subr.bf16.mxu0 0
        %1102 = vmatpush2.bf16.msra.mxu0 0
        %1103 = vmatprep.subr.bf16.mxu0 0
        %1104 = vmatpush2.bf16.msra.mxu0 0
        %1105 = vmatprep.mubr.bf16.mxu0 0
        %1106 = vmatmul.mubr.bf16.gmra.mxu0 %v1068
        %v1107 = vpop.f32.mrf.mxu0
        %v1108 = vadd.f32 0.0, %v1107
        %v1109 = vpop.f32.mrf.mxu0
        %v1110 = vpop.f32.mrf.mxu0
        %v1111 = vpop.f32.mrf.mxu0
        %1112 = vdwg.mxu0
        %v1114 = vsel %vm833, %v1064, 0
        %v1117 = vsel %vm837, %v830, 0
        %1119 = vmatprep.subr.bf16.mxu0 0
        %1120 = vmatpush1.bf16.msra.mxu0 0
        %1121 = vmatprep.subr.bf16.mxu0 0
        %1122 = vmatpush1.bf16.msra.mxu0 0
        %1123 = vmatprep.subr.bf16.mxu0 0
        %1124 = vmatpush1.bf16.msra.mxu0 0
        %1125 = vmatprep.subr.bf16.mxu0 0
        %1126 = vmatpush1.bf16.msra.mxu0 0
        %1127 = vmatprep.subr.bf16.mxu0 0
        %1128 = vmatpush1.bf16.msra.mxu0 0
        %1129 = vmatprep.subr.bf16.mxu0 0
        %1130 = vmatpush1.bf16.msra.mxu0 0
        %1131 = vmatprep.subr.bf16.mxu0 0
        %1132 = vmatpush1.bf16.msra.mxu0 0
        %1133 = vmatprep.subr.bf16.mxu0 0
        %1134 = vmatpush1.bf16.msra.mxu0 %v1117
        %1135 = vmatprep.subr.bf16.mxu0 0
        %1136 = vmatpush2.bf16.msra.mxu0 0
        %1137 = vmatprep.subr.bf16.mxu0 0
        %1138 = vmatpush2.bf16.msra.mxu0 0
        %1139 = vmatprep.subr.bf16.mxu0 0
        %1140 = vmatpush2.bf16.msra.mxu0 0
        %1141 = vmatprep.subr.bf16.mxu0 0
        %1142 = vmatpush2.bf16.msra.mxu0 0
        %1143 = vmatprep.subr.bf16.mxu0 0
        %1144 = vmatpush2.bf16.msra.mxu0 0
        %1145 = vmatprep.subr.bf16.mxu0 0
        %1146 = vmatpush2.bf16.msra.mxu0 0
        %1147 = vmatprep.subr.bf16.mxu0 0
        %1148 = vmatpush2.bf16.msra.mxu0 0
        %1149 = vmatprep.subr.bf16.mxu0 0
        %1150 = vmatpush2.bf16.msra.mxu0 0
        %1151 = vmatprep.mubr.bf16.mxu0 0
        %1152 = vmatmul.mubr.bf16.gmra.mxu0 %v1114
        %v1153 = vpop.f32.mrf.mxu0
        %v1154 = vadd.f32 0.0, %v1153
        %v1155 = vpop.f32.mrf.mxu0
        %v1156 = vpop.f32.mrf.mxu0
        %v1157 = vpop.f32.mrf.mxu0
        %1158 = vdwg.mxu0
        %v1160 = vsel %vm833, %v1065, 0
        %v1163 = vsel %vm837, %v831, 0
        %1165 = vmatprep.subr.bf16.mxu0 0
        %1166 = vmatpush1.bf16.msra.mxu0 0
        %1167 = vmatprep.subr.bf16.mxu0 0
        %1168 = vmatpush1.bf16.msra.mxu0 0
        %1169 = vmatprep.subr.bf16.mxu0 0
        %1170 = vmatpush1.bf16.msra.mxu0 0
        %1171 = vmatprep.subr.bf16.mxu0 0
        %1172 = vmatpush1.bf16.msra.mxu0 0
        %1173 = vmatprep.subr.bf16.mxu0 0
        %1174 = vmatpush1.bf16.msra.mxu0 0
        %1175 = vmatprep.subr.bf16.mxu0 0
        %1176 = vmatpush1.bf16.msra.mxu0 0
        %1177 = vmatprep.subr.bf16.mxu0 0
        %1178 = vmatpush1.bf16.msra.mxu0 0
        %1179 = vmatprep.subr.bf16.mxu0 0
        %1180 = vmatpush1.bf16.msra.mxu0 %v1163
        %1181 = vmatprep.subr.bf16.mxu0 0
        %1182 = vmatpush2.bf16.msra.mxu0 0
        %1183 = vmatprep.subr.bf16.mxu0 0
        %1184 = vmatpush2.bf16.msra.mxu0 0
        %1185 = vmatprep.subr.bf16.mxu0 0
        %1186 = vmatpush2.bf16.msra.mxu0 0
        %1187 = vmatprep.subr.bf16.mxu0 0
        %1188 = vmatpush2.bf16.msra.mxu0 0
        %1189 = vmatprep.subr.bf16.mxu0 0
        %1190 = vmatpush2.bf16.msra.mxu0 0
        %1191 = vmatprep.subr.bf16.mxu0 0
        %1192 = vmatpush2.bf16.msra.mxu0 0
        %1193 = vmatprep.subr.bf16.mxu0 0
        %1194 = vmatpush2.bf16.msra.mxu0 0
        %1195 = vmatprep.subr.bf16.mxu0 0
        %1196 = vmatpush2.bf16.msra.mxu0 0
        %1197 = vmatprep.mubr.bf16.mxu0 0
        %1198 = vmatmul.mubr.bf16.gmra.mxu0 %v1160
        %v1199 = vpop.f32.mrf.mxu0
        %v1200 = vadd.f32 0.0, %v1199
        %v1201 = vpop.f32.mrf.mxu0
        %v1202 = vpop.f32.mrf.mxu0
        %v1203 = vpop.f32.mrf.mxu0
        %1204 = vdwg.mxu0
        %v1206 = vsel %vm833, %v1066, 0
        %v1209 = vsel %vm837, %v832, 0
        %1211 = vmatprep.subr.bf16.mxu0 0
        %1212 = vmatpush1.bf16.msra.mxu0 0
        %1213 = vmatprep.subr.bf16.mxu0 0
        %1214 = vmatpush1.bf16.msra.mxu0 0
        %1215 = vmatprep.subr.bf16.mxu0 0
        %1216 = vmatpush1.bf16.msra.mxu0 0
        %1217 = vmatprep.subr.bf16.mxu0 0
        %1218 = vmatpush1.bf16.msra.mxu0 0
        %1219 = vmatprep.subr.bf16.mxu0 0
        %1220 = vmatpush1.bf16.msra.mxu0 0
        %1221 = vmatprep.subr.bf16.mxu0 0
        %1222 = vmatpush1.bf16.msra.mxu0 0
        %1223 = vmatprep.subr.bf16.mxu0 0
        %1224 = vmatpush1.bf16.msra.mxu0 0
        %1225 = vmatprep.subr.bf16.mxu0 0
        %1226 = vmatpush1.bf16.msra.mxu0 %v1209
        %1227 = vmatprep.subr.bf16.mxu0 0
        %1228 = vmatpush2.bf16.msra.mxu0 0
        %1229 = vmatprep.subr.bf16.mxu0 0
        %1230 = vmatpush2.bf16.msra.mxu0 0
        %1231 = vmatprep.subr.bf16.mxu0 0
        %1232 = vmatpush2.bf16.msra.mxu0 0
        %1233 = vmatprep.subr.bf16.mxu0 0
        %1234 = vmatpush2.bf16.msra.mxu0 0
        %1235 = vmatprep.subr.bf16.mxu0 0
        %1236 = vmatpush2.bf16.msra.mxu0 0
        %1237 = vmatprep.subr.bf16.mxu0 0
        %1238 = vmatpush2.bf16.msra.mxu0 0
        %1239 = vmatprep.subr.bf16.mxu0 0
        %1240 = vmatpush2.bf16.msra.mxu0 0
        %1241 = vmatprep.subr.bf16.mxu0 0
        %1242 = vmatpush2.bf16.msra.mxu0 0
        %1243 = vmatprep.mubr.bf16.mxu0 0
        %1244 = vmatmul.mubr.bf16.gmra.mxu0 %v1206
        %v1245 = vpop.f32.mrf.mxu0
        %v1246 = vadd.f32 0.0, %v1245
        %v1247 = vpop.f32.mrf.mxu0
        %v1248 = vpop.f32.mrf.mxu0
        %v1249 = vpop.f32.mrf.mxu0
        %1250 = vdwg.mxu0
        %v1251 = vpack.c.bf16 %v1108, %v1108
        %1252 = vst.msk [vmem:[#allocation5] sm:$0xf] %vm801, %v1251
        %v1253 = vpack.c.bf16 %v1154, %v1154
        %v1255 = vunpack.c.l.b16 %v1253
        %v1256 = vpack.c.b16 %v1255, %v1255
        %1257 = vrot.lane.b32.xlu0 %v1256, 8
        %v1258 = vpop.permute.xlu0 %1257
        %vm1260 = vcmask 126016
        %1261 = vst.msk [vmem:[#allocation5] sm:$0xf] %vm1260, %v1258
        %v1262 = vpack.c.bf16 %v1200, %v1200
        %v1264 = vunpack.c.l.b16 %v1262
        %v1265 = vpack.c.b16 %v1264, %v1264
        %1266 = vrot.lane.b32.xlu0 %v1265, 16
        %v1267 = vpop.permute.xlu0 %1266
        %vm1269 = vcmask 191616
        %1270 = vst.msk [vmem:[#allocation5] sm:$0xf] %vm1269, %v1267
        %v1271 = vpack.c.bf16 %v1246, %v1246
        %v1273 = vunpack.c.l.b16 %v1271
        %v1274 = vpack.c.b16 %v1273, %v1273
        %1275 = vrot.lane.b32.xlu0 %v1274, 24
        %v1276 = vpop.permute.xlu0 %1275
        %vm1278 = vcmask 257216
        %1279 = vst.msk [vmem:[#allocation5] sm:$0xf] %vm1278, %v1276
        %v1280 = vld [vmem:[#allocation5] sm:$0xf]
        %v1281 = vld [vmem:[#allocation14] sm:$0xf]
        %v1282 = vld [vmem:[#allocation14 + $0x4] sm:$0xf]
        %v1283 = vld [vmem:[#allocation14 + $0x8] sm:$0xf]
        %v1284 = vld [vmem:[#allocation14 + $0xc] sm:$0xf]
        %v1285 = vld [vmem:[%s8] sm:$0x1]
        %v1287 = vlaneseq
        %v1288 = vshrl.u32 %v1287, 7
        %v1289 = vsub.s32 0, %v1288
        %v1290 = vrot.slane %v1285, %v1289
        %v1296 = vunpack.c.l.b16 %v1281
        %v1297 = vunpack.c.l.b16 %v1282
        %v1298 = vunpack.c.l.b16 %v1283
        %v1299 = vunpack.c.l.b16 %v1284
        %v1300 = vpack.c.b16 %v1297, %v1296
        %v1301 = vpack.c.b16 %v1299, %v1298
        %v1305 = vsel %vm755, %v1280, 0
        %1307 = vmatprep.subr.bf16.mxu0 0
        %1308 = vmatpush1.bf16.msra.mxu0 0
        %1309 = vmatprep.subr.bf16.mxu0 0
        %1310 = vmatpush1.bf16.msra.mxu0 0
        %1311 = vmatprep.subr.bf16.mxu0 0
        %1312 = vmatpush1.bf16.msra.mxu0 0
        %1313 = vmatprep.subr.bf16.mxu0 0
        %1314 = vmatpush1.bf16.msra.mxu0 0
        %1315 = vmatprep.subr.bf16.mxu0 0
        %1316 = vmatpush1.bf16.msra.mxu0 0
        %1317 = vmatprep.subr.bf16.mxu0 0
        %1318 = vmatpush1.bf16.msra.mxu0 0
        %1319 = vmatprep.subr.bf16.mxu0 0
        %1320 = vmatpush1.bf16.msra.mxu0 %v1301
        %1321 = vmatprep.subr.bf16.mxu0 0
        %1322 = vmatpush1.bf16.msra.mxu0 %v1300
        %1323 = vmatprep.subr.bf16.mxu0 0
        %1324 = vmatpush2.bf16.msra.mxu0 0
        %1325 = vmatprep.subr.bf16.mxu0 0
        %1326 = vmatpush2.bf16.msra.mxu0 0
        %1327 = vmatprep.subr.bf16.mxu0 0
        %1328 = vmatpush2.bf16.msra.mxu0 0
        %1329 = vmatprep.subr.bf16.mxu0 0
        %1330 = vmatpush2.bf16.msra.mxu0 0
        %1331 = vmatprep.subr.bf16.mxu0 0
        %1332 = vmatpush2.bf16.msra.mxu0 0
        %1333 = vmatprep.subr.bf16.mxu0 0
        %1334 = vmatpush2.bf16.msra.mxu0 0
        %1335 = vmatprep.subr.bf16.mxu0 0
        %1336 = vmatpush2.bf16.msra.mxu0 0
        %1337 = vmatprep.subr.bf16.mxu0 0
        %1338 = vmatpush2.bf16.msra.mxu0 0
        %1339 = vmatprep.mubr.bf16.mxu0 0
        %1340 = vmatmul.mubr.bf16.gmra.mxu0 %v1305
        %v1341 = vpop.f32.mrf.mxu0
        %v1342 = vadd.f32 %v1290, %v1341
        %v1343 = vpop.f32.mrf.mxu0
        %v1344 = vpop.f32.mrf.mxu0
        %v1345 = vpop.f32.mrf.mxu0
        %1346 = vdwg.mxu0
        %1347 = vst.msk [vmem:[%s419] sm:$0xff] %vm755, %v1342
        %s1348 = sand.u32 %s244, 1
        %s1349 = scalar_lea.sflag [#allocation8], %s1348
        %s1350 = sand.u32 %s244, 1
        %s1351 = smul.addr %s1350, 8
        %s1352 = scalar_lea.vmem [#allocation15], %s1351
        // Predicated region
        $region81: #{tpu_custom_call.1} parent=55 // pred_check
          %p1353 = pneg %p254
        $region82: #{tpu_custom_call.1} parent=55 // pred_check_branch
          %1355 = sbr.rel (%p1353) target = $region84
        $region83: #{tpu_custom_call.1} parent=55 // pred_region
          %s1357 = ssub.s32 128, 128
          %1358 = vsyncadd %s1349, %s1357
          %s1359 = sadd.s32 %s33, %s32
          %s1360 = smul.addr %s1359, 128
          %s1361 = scalar_lea.hbm %s9, %s1360
          %s1363 = sshll.u32 %s1352, 4
          %s1364 = int_to_ptr.vmem [resolvable:$true] %s1363
          %1366 = dma.vmem_to_hbm [thread:$0]  %s1364, 128, %s1361, %s1349
        $region84: #{tpu_custom_call.1} parent=55 // pred_fallthru
          _
      $region56: #{tpu_custom_call.1} parent=5 // pred_fallthru
        _
      %p1367 = scmp.le.s32.totalorder 2, %s23
      // Predicated region
      $region85: #{tpu_custom_call.1} parent=5 // pred_check
        %p1368 = pneg %p1367
      $region86: #{tpu_custom_call.1} parent=5 // pred_check_branch
        %1370 = sbr.rel (%p1368) target = $region88
      $region87: #{tpu_custom_call.1} parent=5 // pred_region
        %s1371 = ssub.s32 %s23, 2
        // Predicated region
        $region89: #{tpu_custom_call.1} parent=87 // pred_check
          %p1372 = pneg %p260
        $region90: #{tpu_custom_call.1} parent=87 // pred_check_branch
          %1374 = sbr.rel (%p1372) target = $region92
        $region91: #{tpu_custom_call.1} parent=87 // pred_region
          %s1375 = sand.u32 %s245, 1
          %s1376 = scalar_lea.sflag [#allocation8], %s1375
          %s1377 = sand.u32 %s245, 1
          %s1378 = smul.addr %s1377, 8
          %s1379 = scalar_lea.vmem [#allocation15], %s1378
          %1380 = dma.done %s1376, 128
        $region92: #{tpu_custom_call.1} parent=87 // pred_fallthru
          _
      $region88: #{tpu_custom_call.1} parent=5 // pred_fallthru
        _
    $region6: #{tpu_custom_call.1} parent=1 // loop_footer
      %s27 = sadd.s32 1, %s23
    $region7: #{tpu_custom_call.1} parent=1 // loop_footer_branch
      %22 = sbr.rel target = $region3
    $region8: #{tpu_custom_call.1} parent=1 // loop_exit
      _
    %1381 = vsyncpa [#allocation7], 1
    %s1382 = scalar_lea.sflag [#allocation7], 1
    %1383 = vsyncpa %s1382, 1
    %1384 = vsyncpa [#allocation10], 1
    %1385 = vsyncpa [#allocation13], 1
    %1386 = vsyncpa [#allocation8], 1
    %s1387 = scalar_lea.sflag [#allocation8], 1
    %1388 = vsyncpa %s1387, 1

</llo_original>
